<compile_context>
chip_gen: v7x
topology: tpu7x:2x2x1
jax: 0.10.0
libtpu: 0.0.40
codegen_flags: <defaults>
</compile_context>

<pallas_src>
import functools
import math
import numpy as np
import jax
import jax.numpy as jnp
from jax.experimental import pallas as pl
from jax.experimental.pallas import tpu as pltpu

LN_EPS = 1e-12                      # BertLayerNorm eps
_GELU_C = 0.7978845608028654        # sqrt(2/pi)


def _layer_norm(y, g, b):
    mu = jnp.mean(y, axis=-1, keepdims=True)
    var = jnp.mean(jnp.square(y - mu), axis=-1, keepdims=True)
    return (y - mu) * jax.lax.rsqrt(var + LN_EPS) * g + b


def _bert_encoder_kernel(x_ref, mask_ref, wqkv_ref, bqkv_ref, wo_ref, bo_ref,
                         g1_ref, b1_ref, wi_ref, bi_ref, wout_ref, bout_ref,
                         g2_ref, b2_ref, out_ref, act_ref, *,
                         num_heads, kv_block, store_last_only):
    TB, S, H = act_ref.shape
    NH = num_heads
    HD = H // NH
    layer = pl.program_id(1)
    n_layers = pl.num_programs(1)

    # First layer for this batch block: pull the input activations into the
    # VMEM-resident carry; they stay on-chip for all remaining layers.
    @pl.when(layer == 0)
    def _():
        act_ref[...] = x_ref[...].astype(jnp.float32)

    x2d = act_ref[...].reshape(TB * S, H)                 # (TB*S, H) f32 carry
    x_bf = x2d.astype(jnp.bfloat16)

    # ---------------- QKV: one lane-dense matmul (N = 3H) ----------------
    # 1/sqrt(HD) is pre-folded into the Q columns of wqkv at pack time.
    qkv = jnp.dot(x_bf, wqkv_ref[0],
                  preferred_element_type=jnp.float32) + bqkv_ref[0]      # (TB*S, 3H)
    # (TB*S, 3H) -> (TB, 3NH, S, HD): lane-split + axis swap is XLU-side
    # layout plumbing; the f32 tensor is small relative to the matmuls.
    qkv4 = jnp.transpose(qkv.reshape(TB, S, 3 * NH, HD), (0, 2, 1, 3))
    q = qkv4[:, 0 * NH:1 * NH].reshape(TB * NH, S, HD).astype(jnp.bfloat16)
    k = qkv4[:, 1 * NH:2 * NH].reshape(TB * NH, S, HD).astype(jnp.bfloat16)
    v = qkv4[:, 2 * NH:3 * NH].reshape(TB * NH, S, HD).astype(jnp.bfloat16)

    # additive mask, replicated per head once (tiny tensor, hoisted)
    mask_b = jnp.broadcast_to(mask_ref[...].reshape(TB, 1, 1, S),
                              (TB, NH, 1, S)).reshape(TB * NH, 1, S)

    # ---------- flash-style attention: online softmax over key blocks ------
    m_i = jnp.full((TB * NH, S, 1), -1e30, jnp.float32)
    l_i = jnp.zeros((TB * NH, S, 1), jnp.float32)
    acc = jnp.zeros((TB * NH, S, HD), jnp.float32)
    for kb in range(S // kv_block):                       # static trip count
        sl = slice(kb * kv_block, (kb + 1) * kv_block)
        s_blk = jnp.einsum('bqd,bkd->bqk', q, k[:, sl, :],
                           preferred_element_type=jnp.float32) + mask_b[:, :, sl]
        m_new = jnp.maximum(m_i, jnp.max(s_blk, axis=-1, keepdims=True))
        alpha = jnp.exp(m_i - m_new)
        p = jnp.exp(s_blk - m_new)
        l_i = alpha * l_i + jnp.sum(p, axis=-1, keepdims=True)
        acc = alpha * acc + jnp.einsum('bqk,bkd->bqd', p.astype(jnp.bfloat16),
                                       v[:, sl, :],
                                       preferred_element_type=jnp.float32)
        m_i = m_new
    ctx = acc * pl.reciprocal(l_i, approx=True)           # (TB*NH, S, HD) f32

    # ------- output projection: head reduction folded into the MXU K dim ----
    ctx2d = jnp.transpose(ctx.reshape(TB, NH, S, HD),
                          (0, 2, 1, 3)).reshape(TB * S, H)
    attn = jnp.dot(ctx2d.astype(jnp.bfloat16), wo_ref[0],
                   preferred_element_type=jnp.float32) + bo_ref[0]       # (TB*S, H)

    x1 = _layer_norm(x2d + attn, g1_ref[0], b1_ref[0])                   # f32

    # -------- feed-forward: bf16 MXU / f32 accumulate, tanh-GELU on EUP -----
    h = jnp.dot(x1.astype(jnp.bfloat16), wi_ref[0],
                preferred_element_type=jnp.float32) + bi_ref[0]          # (TB*S, I)
    h = 0.5 * h * (1.0 + jnp.tanh(_GELU_C * (h + 0.044715 * h * h * h)))
    ffn = jnp.dot(h.astype(jnp.bfloat16), wout_ref[0],
                  preferred_element_type=jnp.float32) + bout_ref[0]      # (TB*S, H)

    y2d = _layer_norm(x1 + ffn, g2_ref[0], b2_ref[0])
    act_ref[...] = y2d.reshape(TB, S, H)                  # carry to next layer

    if store_last_only:
        # The output tile is VMEM-resident across the layer axis; only the
        # last layer's value matters, so skip the (TB,S,H) store for l < L-1.
        @pl.when(layer == n_layers - 1)
        def _():
            out_ref[...] = y2d.reshape(out_ref.shape).astype(out_ref.dtype)
    else:
        out_ref[...] = y2d.reshape(out_ref.shape).astype(out_ref.dtype)


# ----------------------------- wrapper helpers -----------------------------
def _pick_vmem_limit():
    """Generation-aware VMEM limit: physical minus headroom, <= ~110 MiB."""
    try:
        cap = int(pltpu.get_tpu_info().vmem_capacity_bytes)
    except Exception:
        cap = 64 * 1024 * 1024        # conservative (v7x physical) if undetectable
    return max(32 * 1024 * 1024, min(cap - 8 * 1024 * 1024, 110 * 1024 * 1024))


def _pick_batch_block(B):
    # 2-4 sequences per grid step amortize the per-layer weight stream.
    for tb in (4, 2, 1):
        if B % tb == 0:
            return tb
    return 1


def _pick_kv_block(S):
    # Cap attention scratch at (TB*NH, S, kv_block); single block for small S.
    for blk in (256, 128, 64):
        if S > blk and S % blk == 0:
            return blk
    return S


def bert_encoder_pallas(hidden_states, mask_add, packed, num_heads,
                        output_all_encoded_layers=False,
                        batch_block=None, kv_block=None):
    """Full BertEncoder stack as a single fused pallas_call.

    Mirrors BertEncoder.forward: returns a list of encoded layers.  The
    PyTorch (seq, batch, hidden) transposes around the layer stack are pure
    permutations, so the kernel keeps (B, S, H) end-to-end."""
    B, S, H = hidden_states.shape
    L = packed['wqkv'].shape[0]
    I = packed['wi'].shape[2]

    TB = batch_block if batch_block is not None else _pick_batch_block(B)
    assert B % TB == 0, "batch must be divisible by the batch block"
    Tk = kv_block if kv_block is not None else _pick_kv_block(S)
    assert S % Tk == 0, "sequence length must be divisible by the kv block"

    hidden_states = hidden_states.astype(jnp.float32)
    mask3 = mask_add.astype(jnp.float32).reshape(B, 1, S)

    args = (hidden_states, mask3,
            packed['wqkv'], packed['bqkv'], packed['wo'], packed['bo'],
            packed['g1'], packed['b1'], packed['wi'], packed['bi'],
            packed['wout'], packed['bout'], packed['g2'], packed['b2'])

    def per_batch_spec(arr):          # activations / mask: new block per batch block
        rest = arr.shape[1:]
        zeros = (0,) * len(rest)
        return pl.BlockSpec((TB, *rest), lambda b, l, z=zeros: (b, *z))

    def per_layer_spec(arr):          # stacked weights: new block per layer
        rest = arr.shape[1:]
        zeros = (0,) * len(rest)
        return pl.BlockSpec((1, *rest), lambda b, l, z=zeros: (l, *z))

    in_specs = [per_batch_spec(hidden_states), per_batch_spec(mask3)]
    in_specs += [per_layer_spec(a) for a in args[2:]]

    if output_all_encoded_layers:
        out_shape = jax.ShapeDtypeStruct((L, B, S, H), jnp.float32)
        out_spec = pl.BlockSpec((1, TB, S, H), lambda b, l: (l, b, 0, 0))
        out_elems = L * B * S * H
    else:
        out_shape = jax.ShapeDtypeStruct((B, S, H), jnp.float32)
        out_spec = pl.BlockSpec((TB, S, H), lambda b, l: (b, 0, 0))
        out_elems = B * S * H

    # advisory cost estimate for the XLA scheduler
    flops = 2 * L * B * S * (4 * H * H + 2 * S * H + 2 * H * I)
    transcendentals = L * B * (num_heads * S * S + S * I + num_heads * S + 2 * S)
    weight_bytes = sum(int(np.prod(a.shape)) * a.dtype.itemsize for a in args[2:])
    bytes_accessed = ((B // TB) * weight_bytes       # weights streamed once per batch block
                      + hidden_states.size * 4 + mask3.size * 4 + out_elems * 4)
    cost = pl.CostEstimate(flops=int(flops), transcendentals=int(transcendentals),
                           bytes_accessed=int(bytes_accessed))

    kernel = functools.partial(_bert_encoder_kernel, num_heads=num_heads,
                               kv_block=Tk,
                               store_last_only=not output_all_encoded_layers)

    grid_spec = pltpu.PrefetchScalarGridSpec(
        num_scalar_prefetch=0,
        grid=(B // TB, L),                           # layer axis innermost: weights of
        in_specs=in_specs,                           # layer l+1 prefetch under layer l
        out_specs=out_spec,
        scratch_shapes=[pltpu.VMEM((TB, S, H), jnp.float32)],   # activation carry
    )

    out = pl.pallas_call(
        kernel,
        out_shape=out_shape,
        grid_spec=grid_spec,
        compiler_params=pltpu.CompilerParams(
            dimension_semantics=("parallel", "arbitrary"),
            vmem_limit_bytes=_pick_vmem_limit(),
        ),
        cost_estimate=cost,
    )(*args)

    if output_all_encoded_layers:
        return [out[i] for i in range(L)]
    return [out]


# ------------------- parameter packing for the kernel layout -------------------
def pack_encoder_params(params, num_heads):
    """Stack per-layer params; keep wqkv/wo lane-dense; fold 1/sqrt(HD) into Q."""
    H = params[0]['wo'].shape[0]
    HD = H // num_heads
    scale = 1.0 / math.sqrt(HD)

    wqkv_l, bqkv_l = [], []
    for p in params:
        w, b = p['wqkv'], p['bqkv']                      # (H, 3H), (1, 3H): [q | k | v]
        wqkv_l.append(jnp.concatenate([w[:, :H] * scale, w[:, H:]], axis=1))
        bqkv_l.append(jnp.concatenate([b[:, :H] * scale, b[:, H:]], axis=1))

    stack = lambda xs: jnp.stack(xs, axis=0)
    return {
        'wqkv': stack(wqkv_l).astype(jnp.bfloat16),                      # (L, H, 3H)
        'bqkv': stack(bqkv_l),                                           # (L, 1, 3H) f32
        'wo':   stack([p['wo'] for p in params]).astype(jnp.bfloat16),   # (L, H, H)
        'bo':   stack([p['bo'] for p in params]),                        # (L, 1, H)
        'g1':   stack([p['g1'] for p in params]),
        'b1':   stack([p['b1'] for p in params]),
        'wi':   stack([p['wi'] for p in params]).astype(jnp.bfloat16),   # (L, H, I)
        'bi':   stack([p['bi'] for p in params]),
        'wout': stack([p['wout'] for p in params]).astype(jnp.bfloat16), # (L, I, H)
        'bout': stack([p['bout'] for p in params]),
        'g2':   stack([p['g2'] for p in params]),
        'b2':   stack([p['b2'] for p in params]),
    }


# ---------------- pure-JAX f32 reference (for verification only) ----------------
def _layer_norm_ref(y, g, b):
    mu = jnp.mean(y, axis=-1, keepdims=True)
    var = jnp.mean(jnp.square(y - mu), axis=-1, keepdims=True)
    return (y - mu) * jax.lax.rsqrt(var + LN_EPS) * g + b


def bert_layer_ref(x, mask_add, p, num_heads):
    B, S, H = x.shape
    HD = H // num_heads
    x2 = x.reshape(B * S, H)
    qkv = x2 @ p['wqkv'] + p['bqkv']
    q = qkv[:, 0 * H:1 * H].reshape(B, S, num_heads, HD)
    k = qkv[:, 1 * H:2 * H].reshape(B, S, num_heads, HD)
    v = qkv[:, 2 * H:3 * H].reshape(B, S, num_heads, HD)
    scores = jnp.einsum('bqnd,bknd->bnqk', q, k) / math.sqrt(HD)
    scores = scores + mask_add[:, None, None, :]
    probs = jax.nn.softmax(scores, axis=-1)
    ctx = jnp.einsum('bnqk,bknd->bqnd', probs, v).reshape(B * S, H)
    attn_out = ctx @ p['wo'] + p['bo']
    x_attn = _layer_norm_ref(x2 + attn_out, p['g1'], p['b1'])
    hmid = x_attn @ p['wi'] + p['bi']
    hmid = hmid * 0.5 * (1.0 + jax.scipy.special.erf(hmid / math.sqrt(2.0)))
    ffn = hmid @ p['wout'] + p['bout']
    y = _layer_norm_ref(x_attn + ffn, p['g2'], p['b2'])
    return y.reshape(B, S, H)


def bert_encoder_ref(x, mask_add, params, num_heads):
    for p in params:
        x = bert_layer_ref(x, mask_add, p, num_heads)
    return [x]


# ---------------- deterministic parameter initialization ----------------
def init_params(key, num_layers, hidden, intermediate):
    std = 0.02
    layers = []
    for _ in range(num_layers):
        key, *ks = jax.random.split(key, 13)
        kq, kk, kv, ko, ki, kf, kbq, kbo, kbi, kbf, kg, kb = ks
        wq = std * jax.random.normal(kq, (hidden, hidden), jnp.float32)
        wk = std * jax.random.normal(kk, (hidden, hidden), jnp.float32)
        wv = std * jax.random.normal(kv, (hidden, hidden), jnp.float32)
        layers.append({
            'wqkv': jnp.concatenate([wq, wk, wv], axis=1),                    # (H, 3H)
            'bqkv': 0.02 * jax.random.normal(kbq, (1, 3 * hidden), jnp.float32),
            'wo':   std * jax.random.normal(ko, (hidden, hidden), jnp.float32),
            'bo':   0.02 * jax.random.normal(kbo, (1, hidden), jnp.float32),
            'g1':   1.0 + 0.1 * jax.random.normal(kg, (1, hidden), jnp.float32),
            'b1':   0.05 * jax.random.normal(kb, (1, hidden), jnp.float32),
            'wi':   std * jax.random.normal(ki, (hidden, intermediate), jnp.float32),
            'bi':   0.02 * jax.random.normal(kbi, (1, intermediate), jnp.float32),
            'wout': std * jax.random.normal(kf, (intermediate, hidden), jnp.float32),
            'bout': 0.02 * jax.random.normal(kbf, (1, hidden), jnp.float32),
            'g2':   jnp.ones((1, hidden), jnp.float32),
            'b2':   jnp.zeros((1, hidden), jnp.float32),
        })
    return layers


if __name__ == "__main__":
    # small config implied by the module: num_hidden_layers=3, hidden=32,
    # num_attention_heads=4, intermediate=128, output_all_encoded_layers=False
    B, S, H, NH, I, L = 2, 8, 32, 4, 128, 3

    key = jax.random.PRNGKey(0)
    kx, kp = jax.random.split(key)
    hidden_states = jax.random.normal(kx, (B, S, H), jnp.float32)

    # attention_mask: 1 = attend, 0 = padding; converted to the additive
    # extended mask (1 - m) * -10000 that BertModel feeds BertEncoder.
    attention_mask = jnp.array([[1] * S, [1] * (S - 3) + [0] * 3], dtype=jnp.float32)
    mask_add = (1.0 - attention_mask) * -10000.0        # (B, S)

    params = init_params(kp, L, H, I)
    packed = pack_encoder_params(params, NH)

    outs = bert_encoder_pallas(hidden_states, mask_add, packed, num_heads=NH,
                               output_all_encoded_layers=False)
    final = jax.block_until_ready(outs[-1])

    ref = bert_encoder_ref(hidden_states, mask_add, params, NH)[-1]
    np.testing.assert_allclose(np.asarray(final), np.asarray(ref), rtol=2e-2, atol=2e-2)

    print("KERNEL_OK")
</pallas_src>

<mosaic_0001>
module attributes {stable_mosaic.version = 11 : i64} {
  func.func @_bert_encoder_kernel(%arg0: i32, %arg1: i32, %arg2: memref<2x8x32xf32, #tpu.memory_space<vmem>>, %arg3: memref<2x1x8xf32, #tpu.memory_space<vmem>>, %arg4: memref<1x32x96xbf16, #tpu.memory_space<vmem>>, %arg5: memref<1x1x96xf32, #tpu.memory_space<vmem>>, %arg6: memref<1x32x32xbf16, #tpu.memory_space<vmem>>, %arg7: memref<1x1x32xf32, #tpu.memory_space<vmem>>, %arg8: memref<1x1x32xf32, #tpu.memory_space<vmem>>, %arg9: memref<1x1x32xf32, #tpu.memory_space<vmem>>, %arg10: memref<1x32x128xbf16, #tpu.memory_space<vmem>>, %arg11: memref<1x1x128xf32, #tpu.memory_space<vmem>>, %arg12: memref<1x128x32xbf16, #tpu.memory_space<vmem>>, %arg13: memref<1x1x32xf32, #tpu.memory_space<vmem>>, %arg14: memref<1x1x32xf32, #tpu.memory_space<vmem>>, %arg15: memref<1x1x32xf32, #tpu.memory_space<vmem>>, %arg16: memref<2x8x32xf32, #tpu.memory_space<vmem>>, %arg17: memref<2x8x32xf32, #tpu.memory_space<vmem>>) attributes {dimension_semantics = [#tpu.dimension_semantics<parallel>, #tpu.dimension_semantics<arbitrary>], iteration_bounds = array<i64: 1, 3>, scalar_prefetch = 0 : i64, scratch_operands = 1 : i64, tpu.core_type = #tpu.core_type<tc>, window_params = [{transform_indices = @transform_0, window_bounds = array<i64: 2, 8, 32>}, {transform_indices = @transform_1, window_bounds = array<i64: 2, 1, 8>}, {transform_indices = @transform_2, window_bounds = array<i64: 1, 32, 96>}, {transform_indices = @transform_3, window_bounds = array<i64: 1, 1, 96>}, {transform_indices = @transform_4, window_bounds = array<i64: 1, 32, 32>}, {transform_indices = @transform_5, window_bounds = array<i64: 1, 1, 32>}, {transform_indices = @transform_6, window_bounds = array<i64: 1, 1, 32>}, {transform_indices = @transform_7, window_bounds = array<i64: 1, 1, 32>}, {transform_indices = @transform_8, window_bounds = array<i64: 1, 32, 128>}, {transform_indices = @transform_9, window_bounds = array<i64: 1, 1, 128>}, {transform_indices = @transform_10, window_bounds = array<i64: 1, 128, 32>}, {transform_indices = @transform_11, window_bounds = array<i64: 1, 1, 32>}, {transform_indices = @transform_12, window_bounds = array<i64: 1, 1, 32>}, {transform_indices = @transform_13, window_bounds = array<i64: 1, 1, 32>}, {transform_indices = @transform_14, window_bounds = array<i64: 2, 8, 32>}]} {
    %c0_i32 = arith.constant 0 : i32
    %0 = arith.cmpi eq, %arg1, %c0_i32 : i32
    %1 = arith.extui %0 : i1 to i32
    %c0_i32_0 = arith.constant 0 : i32
    %2 = arith.cmpi ne, %1, %c0_i32_0 : i32
    scf.if %2 {
      %c0_70 = arith.constant 0 : index
      %c0_71 = arith.constant 0 : index
      %c0_72 = arith.constant 0 : index
      %154 = vector.load %arg2[%c0_70, %c0_71, %c0_72] : memref<2x8x32xf32, #tpu.memory_space<vmem>>, vector<2x8x32xf32>
      %c0_73 = arith.constant 0 : index
      %c0_74 = arith.constant 0 : index
      %c0_75 = arith.constant 0 : index
      %155 = vector.load %arg17[%c0_73, %c0_74, %c0_75] : memref<2x8x32xf32, #tpu.memory_space<vmem>>, vector<2x8x32xf32>
      tpu.vector_store %arg17[%c0_73, %c0_74, %c0_75], %154 {strides = array<i32>} : memref<2x8x32xf32, #tpu.memory_space<vmem>>, vector<2x8x32xf32>,
    } else {
    }
    %c0 = arith.constant 0 : index
    %c0_1 = arith.constant 0 : index
    %c0_2 = arith.constant 0 : index
    %3 = vector.load %arg17[%c0, %c0_1, %c0_2] : memref<2x8x32xf32, #tpu.memory_space<vmem>>, vector<2x8x32xf32>
    %4 = vector.shape_cast %3 : vector<2x8x32xf32> to vector<16x32xf32>
    %5 = arith.truncf %4 : vector<16x32xf32> to vector<16x32xbf16>
    %c0_3 = arith.constant 0 : index
    %c0_4 = arith.constant 0 : index
    %c0_5 = arith.constant 0 : index
    %6 = vector.load %arg4[%c0_3, %c0_4, %c0_5] : memref<1x32x96xbf16, #tpu.memory_space<vmem>>, vector<1x32x96xbf16>
    %7 = vector.shape_cast %6 : vector<1x32x96xbf16> to vector<32x96xbf16>
    %cst = arith.constant dense<0.000000e+00> : vector<16x96xf32>
    %8 = tpu.matmul %5, %7, %cst {dimension_numbers = #tpu.dot_dimension_numbers<[1], [0], [0], [1], [0, 0, 1, 1], [], []>} : vector<16x32xbf16>, vector<32x96xbf16>, vector<16x96xf32> -> vector<16x96xf32>
    %c0_6 = arith.constant 0 : index
    %c0_7 = arith.constant 0 : index
    %c0_8 = arith.constant 0 : index
    %9 = vector.load %arg5[%c0_6, %c0_7, %c0_8] : memref<1x1x96xf32, #tpu.memory_space<vmem>>, vector<1x1x96xf32>
    %10 = vector.shape_cast %9 : vector<1x1x96xf32> to vector<1x96xf32>
    %11 = vector.broadcast %10 : vector<1x96xf32> to vector<16x96xf32>
    %12 = arith.addf %8, %11 : vector<16x96xf32>
    %13 = vector.shape_cast %12 : vector<16x96xf32> to vector<2x8x12x8xf32>
    %14 = tpu.transpose %13, [0, 2, 1, 3] : vector<2x8x12x8xf32> -> vector<2x12x8x8xf32>
    %15 = vector.extract_strided_slice %14 {offsets = [0, 0, 0, 0], sizes = [2, 4, 8, 8], strides = [1, 1, 1, 1]} : vector<2x12x8x8xf32> to vector<2x4x8x8xf32>
    %16 = vector.shape_cast %15 : vector<2x4x8x8xf32> to vector<8x8x8xf32>
    %17 = arith.truncf %16 : vector<8x8x8xf32> to vector<8x8x8xbf16>
    %18 = vector.extract_strided_slice %14 {offsets = [0, 4, 0, 0], sizes = [2, 4, 8, 8], strides = [1, 1, 1, 1]} : vector<2x12x8x8xf32> to vector<2x4x8x8xf32>
    %19 = vector.shape_cast %18 : vector<2x4x8x8xf32> to vector<8x8x8xf32>
    %20 = arith.truncf %19 : vector<8x8x8xf32> to vector<8x8x8xbf16>
    %21 = vector.extract_strided_slice %14 {offsets = [0, 8, 0, 0], sizes = [2, 4, 8, 8], strides = [1, 1, 1, 1]} : vector<2x12x8x8xf32> to vector<2x4x8x8xf32>
    %22 = vector.shape_cast %21 : vector<2x4x8x8xf32> to vector<8x8x8xf32>
    %23 = arith.truncf %22 : vector<8x8x8xf32> to vector<8x8x8xbf16>
    %c0_9 = arith.constant 0 : index
    %c0_10 = arith.constant 0 : index
    %c0_11 = arith.constant 0 : index
    %24 = vector.load %arg3[%c0_9, %c0_10, %c0_11] : memref<2x1x8xf32, #tpu.memory_space<vmem>>, vector<2x1x8xf32>
    %25 = vector.shape_cast %24 : vector<2x1x8xf32> to vector<2x1x1x8xf32>
    %26 = vector.shape_cast %25 : vector<2x1x1x8xf32> to vector<2x1x1x8xf32>
    %27 = vector.broadcast %26 : vector<2x1x1x8xf32> to vector<2x4x1x8xf32>
    %28 = vector.shape_cast %27 : vector<2x4x1x8xf32> to vector<8x1x8xf32>
    %cst_12 = arith.constant -1.000000e+30 : f32
    %29 = vector.broadcast %cst_12 : f32 to vector<8x8x1xf32>
    %cst_13 = arith.constant 0.000000e+00 : f32
    %30 = vector.broadcast %cst_13 : f32 to vector<8x8x1xf32>
    %cst_14 = arith.constant 0.000000e+00 : f32
    %31 = vector.broadcast %cst_14 : f32 to vector<8x8x8xf32>
    "tpu.trace_start"() <{level = 10 : i32, message = "bqd,bkd->bqk"}> : () -> ()
    %cst_15 = arith.constant dense<0.000000e+00> : vector<8x8x8xf32>
    %32 = tpu.matmul %17, %20, %cst_15 {dimension_numbers = #tpu.dot_dimension_numbers<[2], [2], [1], [1], [0, 0, 0, 1, 1, 1], [0], [0]>} : vector<8x8x8xbf16>, vector<8x8x8xbf16>, vector<8x8x8xf32> -> vector<8x8x8xf32>
    "tpu.trace_stop"() : () -> ()
    %33 = vector.broadcast %28 : vector<8x1x8xf32> to vector<8x8x8xf32>
    %34 = arith.addf %32, %33 : vector<8x8x8xf32>
    %cst_16 = arith.constant dense<0xFF800000> : vector<8x8xf32>
    %35 = vector.multi_reduction <maximumf>, %34, %cst_16 [2] : vector<8x8x8xf32> to vector<8x8xf32>
    %36 = vector.shape_cast %35 : vector<8x8xf32> to vector<8x8x1xf32>
    %37 = arith.maximumf %29, %36 : vector<8x8x1xf32>
    %38 = arith.subf %29, %37 : vector<8x8x1xf32>
    %39 = math.exp %38 : vector<8x8x1xf32>
    %40 = vector.broadcast %37 : vector<8x8x1xf32> to vector<8x8x8xf32>
    %41 = arith.subf %34, %40 : vector<8x8x8xf32>
    %42 = math.exp %41 : vector<8x8x8xf32>
    %43 = arith.mulf %39, %30 : vector<8x8x1xf32>
    %cst_17 = arith.constant dense<0.000000e+00> : vector<8x8xf32>
    %44 = vector.multi_reduction <add>, %42, %cst_17 [2] : vector<8x8x8xf32> to vector<8x8xf32>
    %45 = vector.shape_cast %44 : vector<8x8xf32> to vector<8x8x1xf32>
    %46 = arith.addf %43, %45 : vector<8x8x1xf32>
    %47 = vector.broadcast %39 : vector<8x8x1xf32> to vector<8x8x8xf32>
    %48 = arith.mulf %47, %31 : vector<8x8x8xf32>
    %49 = arith.truncf %42 : vector<8x8x8xf32> to vector<8x8x8xbf16>
    "tpu.trace_start"() <{level = 10 : i32, message = "bqk,bkd->bqd"}> : () -> ()
    %cst_18 = arith.constant dense<0.000000e+00> : vector<8x8x8xf32>
    %50 = tpu.matmul %49, %23, %cst_18 {dimension_numbers = #tpu.dot_dimension_numbers<[2], [1], [1], [2], [0, 0, 0, 1, 1, 2], [0], [0]>} : vector<8x8x8xbf16>, vector<8x8x8xbf16>, vector<8x8x8xf32> -> vector<8x8x8xf32>
    "tpu.trace_stop"() : () -> ()
    %51 = arith.addf %48, %50 : vector<8x8x8xf32>
    %52 = tpu.reciprocal %46 {approx = true} : vector<8x8x1xf32> -> vector<8x8x1xf32>
    %53 = vector.broadcast %52 : vector<8x8x1xf32> to vector<8x8x8xf32>
    %54 = arith.mulf %51, %53 : vector<8x8x8xf32>
    %55 = vector.shape_cast %54 : vector<8x8x8xf32> to vector<2x4x8x8xf32>
    %56 = tpu.transpose %55, [0, 2, 1, 3] : vector<2x4x8x8xf32> -> vector<2x8x4x8xf32>
    %57 = vector.shape_cast %56 : vector<2x8x4x8xf32> to vector<16x32xf32>
    %58 = arith.truncf %57 : vector<16x32xf32> to vector<16x32xbf16>
    %c0_19 = arith.constant 0 : index
    %c0_20 = arith.constant 0 : index
    %c0_21 = arith.constant 0 : index
    %59 = vector.load %arg6[%c0_19, %c0_20, %c0_21] : memref<1x32x32xbf16, #tpu.memory_space<vmem>>, vector<1x32x32xbf16>
    %60 = vector.shape_cast %59 : vector<1x32x32xbf16> to vector<32x32xbf16>
    %cst_22 = arith.constant dense<0.000000e+00> : vector<16x32xf32>
    %61 = tpu.matmul %58, %60, %cst_22 {dimension_numbers = #tpu.dot_dimension_numbers<[1], [0], [0], [1], [0, 0, 1, 1], [], []>} : vector<16x32xbf16>, vector<32x32xbf16>, vector<16x32xf32> -> vector<16x32xf32>
    %c0_23 = arith.constant 0 : index
    %c0_24 = arith.constant 0 : index
    %c0_25 = arith.constant 0 : index
    %62 = vector.load %arg7[%c0_23, %c0_24, %c0_25] : memref<1x1x32xf32, #tpu.memory_space<vmem>>, vector<1x1x32xf32>
    %63 = vector.shape_cast %62 : vector<1x1x32xf32> to vector<1x32xf32>
    %64 = vector.broadcast %63 : vector<1x32xf32> to vector<16x32xf32>
    %65 = arith.addf %61, %64 : vector<16x32xf32>
    %66 = arith.addf %4, %65 : vector<16x32xf32>
    %c0_26 = arith.constant 0 : index
    %c0_27 = arith.constant 0 : index
    %c0_28 = arith.constant 0 : index
    %67 = vector.load %arg8[%c0_26, %c0_27, %c0_28] : memref<1x1x32xf32, #tpu.memory_space<vmem>>, vector<1x1x32xf32>
    %68 = vector.shape_cast %67 : vector<1x1x32xf32> to vector<1x32xf32>
    %c0_29 = arith.constant 0 : index
    %c0_30 = arith.constant 0 : index
    %c0_31 = arith.constant 0 : index
    %69 = vector.load %arg9[%c0_29, %c0_30, %c0_31] : memref<1x1x32xf32, #tpu.memory_space<vmem>>, vector<1x1x32xf32>
    %70 = vector.shape_cast %69 : vector<1x1x32xf32> to vector<1x32xf32>
    %cst_32 = arith.constant dense<0.000000e+00> : vector<16xf32>
    %71 = vector.multi_reduction <add>, %66, %cst_32 [1] : vector<16x32xf32> to vector<16xf32>
    %72 = vector.shape_cast %71 : vector<16xf32> to vector<16x1xf32>
    %cst_33 = arith.constant 3.200000e+01 : f32
    %73 = vector.broadcast %cst_33 : f32 to vector<16x1xf32>
    %74 = arith.divf %72, %73 : vector<16x1xf32>
    %75 = vector.broadcast %74 : vector<16x1xf32> to vector<16x32xf32>
    %76 = arith.subf %66, %75 : vector<16x32xf32>
    %77 = arith.mulf %76, %76 : vector<16x32xf32>
    %cst_34 = arith.constant dense<0.000000e+00> : vector<16xf32>
    %78 = vector.multi_reduction <add>, %77, %cst_34 [1] : vector<16x32xf32> to vector<16xf32>
    %79 = vector.shape_cast %78 : vector<16xf32> to vector<16x1xf32>
    %cst_35 = arith.constant 3.200000e+01 : f32
    %80 = vector.broadcast %cst_35 : f32 to vector<16x1xf32>
    %81 = arith.divf %79, %80 : vector<16x1xf32>
    %82 = vector.broadcast %74 : vector<16x1xf32> to vector<16x32xf32>
    %83 = arith.subf %66, %82 : vector<16x32xf32>
    %cst_36 = arith.constant 9.99999996E-13 : f32
    %84 = vector.broadcast %cst_36 : f32 to vector<16x1xf32>
    %85 = arith.addf %81, %84 : vector<16x1xf32>
    %86 = math.rsqrt %85 : vector<16x1xf32>
    %87 = vector.broadcast %86 : vector<16x1xf32> to vector<16x32xf32>
    %88 = arith.mulf %83, %87 : vector<16x32xf32>
    %89 = vector.broadcast %68 : vector<1x32xf32> to vector<16x32xf32>
    %90 = arith.mulf %88, %89 : vector<16x32xf32>
    %91 = vector.broadcast %70 : vector<1x32xf32> to vector<16x32xf32>
    %92 = arith.addf %90, %91 : vector<16x32xf32>
    %93 = arith.truncf %92 : vector<16x32xf32> to vector<16x32xbf16>
    %c0_37 = arith.constant 0 : index
    %c0_38 = arith.constant 0 : index
    %c0_39 = arith.constant 0 : index
    %94 = vector.load %arg10[%c0_37, %c0_38, %c0_39] : memref<1x32x128xbf16, #tpu.memory_space<vmem>>, vector<1x32x128xbf16>
    %95 = vector.shape_cast %94 : vector<1x32x128xbf16> to vector<32x128xbf16>
    %cst_40 = arith.constant dense<0.000000e+00> : vector<16x128xf32>
    %96 = tpu.matmul %93, %95, %cst_40 {dimension_numbers = #tpu.dot_dimension_numbers<[1], [0], [0], [1], [0, 0, 1, 1], [], []>} : vector<16x32xbf16>, vector<32x128xbf16>, vector<16x128xf32> -> vector<16x128xf32>
    %c0_41 = arith.constant 0 : index
    %c0_42 = arith.constant 0 : index
    %c0_43 = arith.constant 0 : index
    %97 = vector.load %arg11[%c0_41, %c0_42, %c0_43] : memref<1x1x128xf32, #tpu.memory_space<vmem>>, vector<1x1x128xf32>
    %98 = vector.shape_cast %97 : vector<1x1x128xf32> to vector<1x128xf32>
    %99 = vector.broadcast %98 : vector<1x128xf32> to vector<16x128xf32>
    %100 = arith.addf %96, %99 : vector<16x128xf32>
    %cst_44 = arith.constant 5.000000e-01 : f32
    %101 = vector.broadcast %cst_44 : f32 to vector<16x128xf32>
    %102 = arith.mulf %101, %100 : vector<16x128xf32>
    %cst_45 = arith.constant 4.471500e-02 : f32
    %103 = vector.broadcast %cst_45 : f32 to vector<16x128xf32>
    %104 = arith.mulf %103, %100 : vector<16x128xf32>
    %105 = arith.mulf %104, %100 : vector<16x128xf32>
    %106 = arith.mulf %105, %100 : vector<16x128xf32>
    %107 = arith.addf %100, %106 : vector<16x128xf32>
    %cst_46 = arith.constant 0.797884583 : f32
    %108 = vector.broadcast %cst_46 : f32 to vector<16x128xf32>
    %109 = arith.mulf %108, %107 : vector<16x128xf32>
    %110 = math.tanh %109 : vector<16x128xf32>
    %cst_47 = arith.constant 1.000000e+00 : f32
    %111 = vector.broadcast %cst_47 : f32 to vector<16x128xf32>
    %112 = arith.addf %111, %110 : vector<16x128xf32>
    %113 = arith.mulf %102, %112 : vector<16x128xf32>
    %114 = arith.truncf %113 : vector<16x128xf32> to vector<16x128xbf16>
    %c0_48 = arith.constant 0 : index
    %c0_49 = arith.constant 0 : index
    %c0_50 = arith.constant 0 : index
    %115 = vector.load %arg12[%c0_48, %c0_49, %c0_50] : memref<1x128x32xbf16, #tpu.memory_space<vmem>>, vector<1x128x32xbf16>
    %116 = vector.shape_cast %115 : vector<1x128x32xbf16> to vector<128x32xbf16>
    %cst_51 = arith.constant dense<0.000000e+00> : vector<16x32xf32>
    %117 = tpu.matmul %114, %116, %cst_51 {dimension_numbers = #tpu.dot_dimension_numbers<[1], [0], [0], [1], [0, 0, 1, 1], [], []>} : vector<16x128xbf16>, vector<128x32xbf16>, vector<16x32xf32> -> vector<16x32xf32>
    %c0_52 = arith.constant 0 : index
    %c0_53 = arith.constant 0 : index
    %c0_54 = arith.constant 0 : index
    %118 = vector.load %arg13[%c0_52, %c0_53, %c0_54] : memref<1x1x32xf32, #tpu.memory_space<vmem>>, vector<1x1x32xf32>
    %119 = vector.shape_cast %118 : vector<1x1x32xf32> to vector<1x32xf32>
    %120 = vector.broadcast %119 : vector<1x32xf32> to vector<16x32xf32>
    %121 = arith.addf %117, %120 : vector<16x32xf32>
    %122 = arith.addf %92, %121 : vector<16x32xf32>
    %c0_55 = arith.constant 0 : index
    %c0_56 = arith.constant 0 : index
    %c0_57 = arith.constant 0 : index
    %123 = vector.load %arg14[%c0_55, %c0_56, %c0_57] : memref<1x1x32xf32, #tpu.memory_space<vmem>>, vector<1x1x32xf32>
    %124 = vector.shape_cast %123 : vector<1x1x32xf32> to vector<1x32xf32>
    %c0_58 = arith.constant 0 : index
    %c0_59 = arith.constant 0 : index
    %c0_60 = arith.constant 0 : index
    %125 = vector.load %arg15[%c0_58, %c0_59, %c0_60] : memref<1x1x32xf32, #tpu.memory_space<vmem>>, vector<1x1x32xf32>
    %126 = vector.shape_cast %125 : vector<1x1x32xf32> to vector<1x32xf32>
    %cst_61 = arith.constant dense<0.000000e+00> : vector<16xf32>
    %127 = vector.multi_reduction <add>, %122, %cst_61 [1] : vector<16x32xf32> to vector<16xf32>
    %128 = vector.shape_cast %127 : vector<16xf32> to vector<16x1xf32>
    %cst_62 = arith.constant 3.200000e+01 : f32
    %129 = vector.broadcast %cst_62 : f32 to vector<16x1xf32>
    %130 = arith.divf %128, %129 : vector<16x1xf32>
    %131 = vector.broadcast %130 : vector<16x1xf32> to vector<16x32xf32>
    %132 = arith.subf %122, %131 : vector<16x32xf32>
    %133 = arith.mulf %132, %132 : vector<16x32xf32>
    %cst_63 = arith.constant dense<0.000000e+00> : vector<16xf32>
    %134 = vector.multi_reduction <add>, %133, %cst_63 [1] : vector<16x32xf32> to vector<16xf32>
    %135 = vector.shape_cast %134 : vector<16xf32> to vector<16x1xf32>
    %cst_64 = arith.constant 3.200000e+01 : f32
    %136 = vector.broadcast %cst_64 : f32 to vector<16x1xf32>
    %137 = arith.divf %135, %136 : vector<16x1xf32>
    %138 = vector.broadcast %130 : vector<16x1xf32> to vector<16x32xf32>
    %139 = arith.subf %122, %138 : vector<16x32xf32>
    %cst_65 = arith.constant 9.99999996E-13 : f32
    %140 = vector.broadcast %cst_65 : f32 to vector<16x1xf32>
    %141 = arith.addf %137, %140 : vector<16x1xf32>
    %142 = math.rsqrt %141 : vector<16x1xf32>
    %143 = vector.broadcast %142 : vector<16x1xf32> to vector<16x32xf32>
    %144 = arith.mulf %139, %143 : vector<16x32xf32>
    %145 = vector.broadcast %124 : vector<1x32xf32> to vector<16x32xf32>
    %146 = arith.mulf %144, %145 : vector<16x32xf32>
    %147 = vector.broadcast %126 : vector<1x32xf32> to vector<16x32xf32>
    %148 = arith.addf %146, %147 : vector<16x32xf32>
    %149 = vector.shape_cast %148 : vector<16x32xf32> to vector<2x8x32xf32>
    %c0_66 = arith.constant 0 : index
    %c0_67 = arith.constant 0 : index
    %c0_68 = arith.constant 0 : index
    %150 = vector.load %arg17[%c0_66, %c0_67, %c0_68] : memref<2x8x32xf32, #tpu.memory_space<vmem>>, vector<2x8x32xf32>
    tpu.vector_store %arg17[%c0_66, %c0_67, %c0_68], %149 {strides = array<i32>} : memref<2x8x32xf32, #tpu.memory_space<vmem>>, vector<2x8x32xf32>,
    %c2_i32 = arith.constant 2 : i32
    %151 = arith.cmpi eq, %arg1, %c2_i32 : i32
    %152 = arith.extui %151 : i1 to i32
    %c0_i32_69 = arith.constant 0 : i32
    %153 = arith.cmpi ne, %152, %c0_i32_69 : i32
    scf.if %153 {
      %154 = vector.shape_cast %148 : vector<16x32xf32> to vector<2x8x32xf32>
      %c0_70 = arith.constant 0 : index
      %c0_71 = arith.constant 0 : index
      %c0_72 = arith.constant 0 : index
      %155 = vector.load %arg16[%c0_70, %c0_71, %c0_72] : memref<2x8x32xf32, #tpu.memory_space<vmem>>, vector<2x8x32xf32>
      tpu.vector_store %arg16[%c0_70, %c0_71, %c0_72], %154 {strides = array<i32>} : memref<2x8x32xf32, #tpu.memory_space<vmem>>, vector<2x8x32xf32>,
    } else {
    }
    return
  }
  func.func @transform_0(%arg0: i32, %arg1: i32) -> (i32, i32, i32) {
    %c0_i32 = arith.constant 0 : i32
    %c0_i32_0 = arith.constant 0 : i32
    %c0_i32_1 = arith.constant 0 : i32
    return %arg0, %c0_i32, %c0_i32_0 : i32, i32, i32
  }
  func.func @transform_1(%arg0: i32, %arg1: i32) -> (i32, i32, i32) {
    %c0_i32 = arith.constant 0 : i32
    %c0_i32_0 = arith.constant 0 : i32
    %c0_i32_1 = arith.constant 0 : i32
    return %arg0, %c0_i32, %c0_i32_0 : i32, i32, i32
  }
  func.func @transform_2(%arg0: i32, %arg1: i32) -> (i32, i32, i32) {
    %c0_i32 = arith.constant 0 : i32
    %c0_i32_0 = arith.constant 0 : i32
    %c0_i32_1 = arith.constant 0 : i32
    return %arg1, %c0_i32, %c0_i32_0 : i32, i32, i32
  }
  func.func @transform_3(%arg0: i32, %arg1: i32) -> (i32, i32, i32) {
    %c0_i32 = arith.constant 0 : i32
    %c0_i32_0 = arith.constant 0 : i32
    %c0_i32_1 = arith.constant 0 : i32
    return %arg1, %c0_i32, %c0_i32_0 : i32, i32, i32
  }
  func.func @transform_4(%arg0: i32, %arg1: i32) -> (i32, i32, i32) {
    %c0_i32 = arith.constant 0 : i32
    %c0_i32_0 = arith.constant 0 : i32
    %c0_i32_1 = arith.constant 0 : i32
    return %arg1, %c0_i32, %c0_i32_0 : i32, i32, i32
  }
  func.func @transform_5(%arg0: i32, %arg1: i32) -> (i32, i32, i32) {
    %c0_i32 = arith.constant 0 : i32
    %c0_i32_0 = arith.constant 0 : i32
    %c0_i32_1 = arith.constant 0 : i32
    return %arg1, %c0_i32, %c0_i32_0 : i32, i32, i32
  }
  func.func @transform_6(%arg0: i32, %arg1: i32) -> (i32, i32, i32) {
    %c0_i32 = arith.constant 0 : i32
    %c0_i32_0 = arith.constant 0 : i32
    %c0_i32_1 = arith.constant 0 : i32
    return %arg1, %c0_i32, %c0_i32_0 : i32, i32, i32
  }
  func.func @transform_7(%arg0: i32, %arg1: i32) -> (i32, i32, i32) {
    %c0_i32 = arith.constant 0 : i32
    %c0_i32_0 = arith.constant 0 : i32
    %c0_i32_1 = arith.constant 0 : i32
    return %arg1, %c0_i32, %c0_i32_0 : i32, i32, i32
  }
  func.func @transform_8(%arg0: i32, %arg1: i32) -> (i32, i32, i32) {
    %c0_i32 = arith.constant 0 : i32
    %c0_i32_0 = arith.constant 0 : i32
    %c0_i32_1 = arith.constant 0 : i32
    return %arg1, %c0_i32, %c0_i32_0 : i32, i32, i32
  }
  func.func @transform_9(%arg0: i32, %arg1: i32) -> (i32, i32, i32) {
    %c0_i32 = arith.constant 0 : i32
    %c0_i32_0 = arith.constant 0 : i32
    %c0_i32_1 = arith.constant 0 : i32
    return %arg1, %c0_i32, %c0_i32_0 : i32, i32, i32
  }
  func.func @transform_10(%arg0: i32, %arg1: i32) -> (i32, i32, i32) {
    %c0_i32 = arith.constant 0 : i32
    %c0_i32_0 = arith.constant 0 : i32
    %c0_i32_1 = arith.constant 0 : i32
    return %arg1, %c0_i32, %c0_i32_0 : i32, i32, i32
  }
  func.func @transform_11(%arg0: i32, %arg1: i32) -> (i32, i32, i32) {
    %c0_i32 = arith.constant 0 : i32
    %c0_i32_0 = arith.constant 0 : i32
    %c0_i32_1 = arith.constant 0 : i32
    return %arg1, %c0_i32, %c0_i32_0 : i32, i32, i32
  }
  func.func @transform_12(%arg0: i32, %arg1: i32) -> (i32, i32, i32) {
    %c0_i32 = arith.constant 0 : i32
    %c0_i32_0 = arith.constant 0 : i32
    %c0_i32_1 = arith.constant 0 : i32
    return %arg1, %c0_i32, %c0_i32_0 : i32, i32, i32
  }
  func.func @transform_13(%arg0: i32, %arg1: i32) -> (i32, i32, i32) {
    %c0_i32 = arith.constant 0 : i32
    %c0_i32_0 = arith.constant 0 : i32
    %c0_i32_1 = arith.constant 0 : i32
    return %arg1, %c0_i32, %c0_i32_0 : i32, i32, i32
  }
  func.func @transform_14(%arg0: i32, %arg1: i32) -> (i32, i32, i32) {
    %c0_i32 = arith.constant 0 : i32
    %c0_i32_0 = arith.constant 0 : i32
    %c0_i32_1 = arith.constant 0 : i32
    return %arg0, %c0_i32, %c0_i32_0 : i32, i32, i32
  }
}

</mosaic_0001>

<llo_original>
// kernel: tpu_custom_call.1
$region0: #{tpu_custom_call.1}
  #allocation0 [shape = 'u32[]', space=smem, size = 0x4, offset = 0x4, fixed_abs, tag = 'smem constant byte address 0x4 - core index']
  #allocation1 [shape = 'u32[144,128]{1,0:T(1,128)}', space=vmem, size = 0x12000, scoped, tag = 'internal scratch']
  #allocation2 [shape = 'f32[2,8,32]{2,1,0:T(8,128)}', space=vmem, size = 0x2000, scoped, tag = 'scratch operand']
  %s0 = inlined_call_operand.vmem [shape: f32[2,8,32], index: 0, kind: input, shape index: {}]
  %s1 = inlined_call_operand.vmem [shape: f32[2,1,8], index: 1, kind: input, shape index: {}]
  %s2 = inlined_call_operand.vmem [shape: bf16[3,32,96], index: 2, kind: input, shape index: {}]
  %s3 = inlined_call_operand.vmem [shape: f32[3,1,96], index: 3, kind: input, shape index: {}]
  %s4 = inlined_call_operand.vmem [shape: bf16[3,32,32], index: 4, kind: input, shape index: {}]
  %s5 = inlined_call_operand.vmem [shape: f32[3,1,32], index: 5, kind: input, shape index: {}]
  %s6 = inlined_call_operand.vmem [shape: f32[3,1,32], index: 6, kind: input, shape index: {}]
  %s7 = inlined_call_operand.vmem [shape: f32[3,1,32], index: 7, kind: input, shape index: {}]
  %s8 = inlined_call_operand.vmem [shape: bf16[3,32,128], index: 8, kind: input, shape index: {}]
  %s9 = inlined_call_operand.vmem [shape: f32[3,1,128], index: 9, kind: input, shape index: {}]
  %s10 = inlined_call_operand.vmem [shape: bf16[3,128,32], index: 10, kind: input, shape index: {}]
  %s11 = inlined_call_operand.vmem [shape: f32[3,1,32], index: 11, kind: input, shape index: {}]
  %s12 = inlined_call_operand.vmem [shape: f32[3,1,32], index: 12, kind: input, shape index: {}]
  %s13 = inlined_call_operand.vmem [shape: f32[3,1,32], index: 13, kind: input, shape index: {}]
  %s14 = inlined_call_operand.hbm [shape: f32[2,8,32], index: 14, kind: output, shape index: {}]
  %s15 = sld [smem:[#allocation0]]
  $region97: #{tpu_custom_call.1} parent=0
    _
  %s17 = ssub.s32 1, %s15
  %s18 = scalar_select 0, %s17, %s15
  $region1: #{tpu_custom_call.1} parent=0
    #allocation3 [shape = 'u8[8192]{0}', space=vmem, size = 0x2000, scoped, tag = 'output window, operand 0, single buffered']
    #allocation4 [shape = 's32[2]{0}', space=sflag, size = 0x8, scoped, tag = 'scoped memory for tpu_custom_call.1']
    %19 = vsyncpa [#allocation4], 0
    loop: start=0, step=1, limit=5
    $region2: #{tpu_custom_call.1} parent=1 // loop_pre_header
      _
    $region3: #{tpu_custom_call.1} parent=1 // loop_header
      %s21 = sphi 0, %s25
      %p22 = scmp.ge.s32.totalorder %s21, 5
      %s28 = sphi 0, %s40
      %s29 = sphi 0, %s36
      %s30 = sphi 0, %s28
      %s31 = sphi 0, %s29
      %s32 = sphi 0, %s30
      %s33 = sphi 0, %s31
      %s43 = sphi 0, %s45
      %s46 = sphi 0, %s43
      %s47 = sphi 0, %s46
      %s63 = sphi 0, %s47
      %s69 = sphi 0, %s71
      %s72 = sphi 0, %s69
      %s73 = sphi 0, %s72
      %s89 = sphi 0, %s73
      %s95 = sphi 0, %s97
      %s98 = sphi 0, %s95
      %s99 = sphi 0, %s98
      %s115 = sphi 0, %s99
      %s121 = sphi 0, %s123
      %s124 = sphi 0, %s121
      %s125 = sphi 0, %s124
      %s141 = sphi 0, %s125
      %s147 = sphi 0, %s149
      %s150 = sphi 0, %s147
      %s151 = sphi 0, %s150
      %s167 = sphi 0, %s151
      %s173 = sphi 0, %s175
      %s176 = sphi 0, %s173
      %s177 = sphi 0, %s176
      %s193 = sphi 0, %s177
      %s199 = sphi 0, %s201
      %s202 = sphi 0, %s199
      %s203 = sphi 0, %s202
      %s219 = sphi 0, %s203
      %s225 = sphi 0, %s227
      %s228 = sphi 0, %s225
      %s229 = sphi 0, %s228
      %s245 = sphi 0, %s229
      %s251 = sphi 0, %s253
      %s254 = sphi 0, %s251
      %s255 = sphi 0, %s254
      %s271 = sphi 0, %s255
      %s277 = sphi 0, %s279
      %s280 = sphi 0, %s277
      %s281 = sphi 0, %s280
      %s297 = sphi 0, %s281
      %s303 = sphi 0, %s305
      %s306 = sphi 0, %s303
      %s307 = sphi 0, %s306
      %s323 = sphi 0, %s307
      %s329 = sphi 0, %s331
      %s332 = sphi 0, %s329
      %s333 = sphi 0, %s332
      %s349 = sphi 0, %s333
      %s355 = sphi 0, %s357
      %s358 = sphi 0, %s355
      %s359 = sphi 0, %s358
      %s375 = sphi 0, %s359
      %s381 = sphi 0, %s383
      %s384 = sphi 0, %s381
      %s385 = sphi 0, %s384
      %s401 = sphi 0, %s385
      %s407 = sphi 0, %s409
      %s410 = sphi 0, %s407
      %s411 = sphi 0, %s410
      %s427 = sphi 0, %s411
    $region4: #{tpu_custom_call.1} parent=1 // loop_header_branch
      %24 = sbr.rel (%p22) target = $region8
    $region5: #{tpu_custom_call.1} parent=1 // loop_body
      %s26 = ssub.s32 %s21, 1
      %s27 = ssub.s32 %s21, 2
      %s34 = sadd.s32 1, %s29
      %p35 = scmp.ge.s32.totalorder %s34, 3
      %s36 = scalar_select %p35, 0, %s34
      %s37 = sadd.s32 1, %s28
      %s38 = scalar_select %p35, %s37, %s28
      %p39 = scmp.ge.s32.totalorder %s38, 1
      %s40 = scalar_select %p39, 0, %s38
      %s41 = ssub.s32 %s28, %s40
      %p42 = scmp.eq.s32.totalorder %s41, 0
      %s44 = sadd.s32 %s43, 1
      %s45 = scalar_select %p42, %s43, %s44
      %p48 = pneg %p42
      %p49 = scmp.eq.s32.totalorder %s21, 2
      %p50 = por %p48, %p49
      %p51 = scmp.ne.s32.totalorder %s43, %s46
      %p52 = scmp.eq.s32.totalorder %s21, 0
      %p53 = por %p51, %p52
      %p54 = scmp.ne.s32.totalorder %s43, %s46
      %p55 = scmp.eq.s32.totalorder %s26, 2
      %p56 = por %p54, %p55
      %p57 = scmp.ne.s32.totalorder %s46, %s47
      %p58 = scmp.eq.s32.totalorder %s26, 0
      %p59 = por %p57, %p58
      %p60 = scmp.ne.s32.totalorder %s46, %s47
      %p61 = scmp.eq.s32.totalorder %s27, 2
      %p62 = por %p60, %p61
      %p64 = scmp.ne.s32.totalorder %s47, %s63
      %p65 = scmp.eq.s32.totalorder %s27, 0
      %p66 = por %p64, %p65
      %s67 = ssub.s32 %s28, %s40
      %p68 = scmp.eq.s32.totalorder %s67, 0
      %s70 = sadd.s32 %s69, 1
      %s71 = scalar_select %p68, %s69, %s70
      %p74 = pneg %p68
      %p75 = scmp.eq.s32.totalorder %s21, 2
      %p76 = por %p74, %p75
      %p77 = scmp.ne.s32.totalorder %s69, %s72
      %p78 = scmp.eq.s32.totalorder %s21, 0
      %p79 = por %p77, %p78
      %p80 = scmp.ne.s32.totalorder %s69, %s72
      %p81 = scmp.eq.s32.totalorder %s26, 2
      %p82 = por %p80, %p81
      %p83 = scmp.ne.s32.totalorder %s72, %s73
      %p84 = scmp.eq.s32.totalorder %s26, 0
      %p85 = por %p83, %p84
      %p86 = scmp.ne.s32.totalorder %s72, %s73
      %p87 = scmp.eq.s32.totalorder %s27, 2
      %p88 = por %p86, %p87
      %p90 = scmp.ne.s32.totalorder %s73, %s89
      %p91 = scmp.eq.s32.totalorder %s27, 0
      %p92 = por %p90, %p91
      %s93 = ssub.s32 %s29, %s36
      %p94 = scmp.eq.s32.totalorder %s93, 0
      %s96 = sadd.s32 %s95, 1
      %s97 = scalar_select %p94, %s95, %s96
      %p100 = pneg %p94
      %p101 = scmp.eq.s32.totalorder %s21, 2
      %p102 = por %p100, %p101
      %p103 = scmp.ne.s32.totalorder %s95, %s98
      %p104 = scmp.eq.s32.totalorder %s21, 0
      %p105 = por %p103, %p104
      %p106 = scmp.ne.s32.totalorder %s95, %s98
      %p107 = scmp.eq.s32.totalorder %s26, 2
      %p108 = por %p106, %p107
      %p109 = scmp.ne.s32.totalorder %s98, %s99
      %p110 = scmp.eq.s32.totalorder %s26, 0
      %p111 = por %p109, %p110
      %p112 = scmp.ne.s32.totalorder %s98, %s99
      %p113 = scmp.eq.s32.totalorder %s27, 2
      %p114 = por %p112, %p113
      %p116 = scmp.ne.s32.totalorder %s99, %s115
      %p117 = scmp.eq.s32.totalorder %s27, 0
      %p118 = por %p116, %p117
      %s119 = ssub.s32 %s29, %s36
      %p120 = scmp.eq.s32.totalorder %s119, 0
      %s122 = sadd.s32 %s121, 1
      %s123 = scalar_select %p120, %s121, %s122
      %p126 = pneg %p120
      %p127 = scmp.eq.s32.totalorder %s21, 2
      %p128 = por %p126, %p127
      %p129 = scmp.ne.s32.totalorder %s121, %s124
      %p130 = scmp.eq.s32.totalorder %s21, 0
      %p131 = por %p129, %p130
      %p132 = scmp.ne.s32.totalorder %s121, %s124
      %p133 = scmp.eq.s32.totalorder %s26, 2
      %p134 = por %p132, %p133
      %p135 = scmp.ne.s32.totalorder %s124, %s125
      %p136 = scmp.eq.s32.totalorder %s26, 0
      %p137 = por %p135, %p136
      %p138 = scmp.ne.s32.totalorder %s124, %s125
      %p139 = scmp.eq.s32.totalorder %s27, 2
      %p140 = por %p138, %p139
      %p142 = scmp.ne.s32.totalorder %s125, %s141
      %p143 = scmp.eq.s32.totalorder %s27, 0
      %p144 = por %p142, %p143
      %s145 = ssub.s32 %s29, %s36
      %p146 = scmp.eq.s32.totalorder %s145, 0
      %s148 = sadd.s32 %s147, 1
      %s149 = scalar_select %p146, %s147, %s148
      %p152 = pneg %p146
      %p153 = scmp.eq.s32.totalorder %s21, 2
      %p154 = por %p152, %p153
      %p155 = scmp.ne.s32.totalorder %s147, %s150
      %p156 = scmp.eq.s32.totalorder %s21, 0
      %p157 = por %p155, %p156
      %p158 = scmp.ne.s32.totalorder %s147, %s150
      %p159 = scmp.eq.s32.totalorder %s26, 2
      %p160 = por %p158, %p159
      %p161 = scmp.ne.s32.totalorder %s150, %s151
      %p162 = scmp.eq.s32.totalorder %s26, 0
      %p163 = por %p161, %p162
      %p164 = scmp.ne.s32.totalorder %s150, %s151
      %p165 = scmp.eq.s32.totalorder %s27, 2
      %p166 = por %p164, %p165
      %p168 = scmp.ne.s32.totalorder %s151, %s167
      %p169 = scmp.eq.s32.totalorder %s27, 0
      %p170 = por %p168, %p169
      %s171 = ssub.s32 %s29, %s36
      %p172 = scmp.eq.s32.totalorder %s171, 0
      %s174 = sadd.s32 %s173, 1
      %s175 = scalar_select %p172, %s173, %s174
      %p178 = pneg %p172
      %p179 = scmp.eq.s32.totalorder %s21, 2
      %p180 = por %p178, %p179
      %p181 = scmp.ne.s32.totalorder %s173, %s176
      %p182 = scmp.eq.s32.totalorder %s21, 0
      %p183 = por %p181, %p182
      %p184 = scmp.ne.s32.totalorder %s173, %s176
      %p185 = scmp.eq.s32.totalorder %s26, 2
      %p186 = por %p184, %p185
      %p187 = scmp.ne.s32.totalorder %s176, %s177
      %p188 = scmp.eq.s32.totalorder %s26, 0
      %p189 = por %p187, %p188
      %p190 = scmp.ne.s32.totalorder %s176, %s177
      %p191 = scmp.eq.s32.totalorder %s27, 2
      %p192 = por %p190, %p191
      %p194 = scmp.ne.s32.totalorder %s177, %s193
      %p195 = scmp.eq.s32.totalorder %s27, 0
      %p196 = por %p194, %p195
      %s197 = ssub.s32 %s29, %s36
      %p198 = scmp.eq.s32.totalorder %s197, 0
      %s200 = sadd.s32 %s199, 1
      %s201 = scalar_select %p198, %s199, %s200
      %p204 = pneg %p198
      %p205 = scmp.eq.s32.totalorder %s21, 2
      %p206 = por %p204, %p205
      %p207 = scmp.ne.s32.totalorder %s199, %s202
      %p208 = scmp.eq.s32.totalorder %s21, 0
      %p209 = por %p207, %p208
      %p210 = scmp.ne.s32.totalorder %s199, %s202
      %p211 = scmp.eq.s32.totalorder %s26, 2
      %p212 = por %p210, %p211
      %p213 = scmp.ne.s32.totalorder %s202, %s203
      %p214 = scmp.eq.s32.totalorder %s26, 0
      %p215 = por %p213, %p214
      %p216 = scmp.ne.s32.totalorder %s202, %s203
      %p217 = scmp.eq.s32.totalorder %s27, 2
      %p218 = por %p216, %p217
      %p220 = scmp.ne.s32.totalorder %s203, %s219
      %p221 = scmp.eq.s32.totalorder %s27, 0
      %p222 = por %p220, %p221
      %s223 = ssub.s32 %s29, %s36
      %p224 = scmp.eq.s32.totalorder %s223, 0
      %s226 = sadd.s32 %s225, 1
      %s227 = scalar_select %p224, %s225, %s226
      %p230 = pneg %p224
      %p231 = scmp.eq.s32.totalorder %s21, 2
      %p232 = por %p230, %p231
      %p233 = scmp.ne.s32.totalorder %s225, %s228
      %p234 = scmp.eq.s32.totalorder %s21, 0
      %p235 = por %p233, %p234
      %p236 = scmp.ne.s32.totalorder %s225, %s228
      %p237 = scmp.eq.s32.totalorder %s26, 2
      %p238 = por %p236, %p237
      %p239 = scmp.ne.s32.totalorder %s228, %s229
      %p240 = scmp.eq.s32.totalorder %s26, 0
      %p241 = por %p239, %p240
      %p242 = scmp.ne.s32.totalorder %s228, %s229
      %p243 = scmp.eq.s32.totalorder %s27, 2
      %p244 = por %p242, %p243
      %p246 = scmp.ne.s32.totalorder %s229, %s245
      %p247 = scmp.eq.s32.totalorder %s27, 0
      %p248 = por %p246, %p247
      %s249 = ssub.s32 %s29, %s36
      %p250 = scmp.eq.s32.totalorder %s249, 0
      %s252 = sadd.s32 %s251, 1
      %s253 = scalar_select %p250, %s251, %s252
      %p256 = pneg %p250
      %p257 = scmp.eq.s32.totalorder %s21, 2
      %p258 = por %p256, %p257
      %p259 = scmp.ne.s32.totalorder %s251, %s254
      %p260 = scmp.eq.s32.totalorder %s21, 0
      %p261 = por %p259, %p260
      %p262 = scmp.ne.s32.totalorder %s251, %s254
      %p263 = scmp.eq.s32.totalorder %s26, 2
      %p264 = por %p262, %p263
      %p265 = scmp.ne.s32.totalorder %s254, %s255
      %p266 = scmp.eq.s32.totalorder %s26, 0
      %p267 = por %p265, %p266
      %p268 = scmp.ne.s32.totalorder %s254, %s255
      %p269 = scmp.eq.s32.totalorder %s27, 2
      %p270 = por %p268, %p269
      %p272 = scmp.ne.s32.totalorder %s255, %s271
      %p273 = scmp.eq.s32.totalorder %s27, 0
      %p274 = por %p272, %p273
      %s275 = ssub.s32 %s29, %s36
      %p276 = scmp.eq.s32.totalorder %s275, 0
      %s278 = sadd.s32 %s277, 1
      %s279 = scalar_select %p276, %s277, %s278
      %p282 = pneg %p276
      %p283 = scmp.eq.s32.totalorder %s21, 2
      %p284 = por %p282, %p283
      %p285 = scmp.ne.s32.totalorder %s277, %s280
      %p286 = scmp.eq.s32.totalorder %s21, 0
      %p287 = por %p285, %p286
      %p288 = scmp.ne.s32.totalorder %s277, %s280
      %p289 = scmp.eq.s32.totalorder %s26, 2
      %p290 = por %p288, %p289
      %p291 = scmp.ne.s32.totalorder %s280, %s281
      %p292 = scmp.eq.s32.totalorder %s26, 0
      %p293 = por %p291, %p292
      %p294 = scmp.ne.s32.totalorder %s280, %s281
      %p295 = scmp.eq.s32.totalorder %s27, 2
      %p296 = por %p294, %p295
      %p298 = scmp.ne.s32.totalorder %s281, %s297
      %p299 = scmp.eq.s32.totalorder %s27, 0
      %p300 = por %p298, %p299
      %s301 = ssub.s32 %s29, %s36
      %p302 = scmp.eq.s32.totalorder %s301, 0
      %s304 = sadd.s32 %s303, 1
      %s305 = scalar_select %p302, %s303, %s304
      %p308 = pneg %p302
      %p309 = scmp.eq.s32.totalorder %s21, 2
      %p310 = por %p308, %p309
      %p311 = scmp.ne.s32.totalorder %s303, %s306
      %p312 = scmp.eq.s32.totalorder %s21, 0
      %p313 = por %p311, %p312
      %p314 = scmp.ne.s32.totalorder %s303, %s306
      %p315 = scmp.eq.s32.totalorder %s26, 2
      %p316 = por %p314, %p315
      %p317 = scmp.ne.s32.totalorder %s306, %s307
      %p318 = scmp.eq.s32.totalorder %s26, 0
      %p319 = por %p317, %p318
      %p320 = scmp.ne.s32.totalorder %s306, %s307
      %p321 = scmp.eq.s32.totalorder %s27, 2
      %p322 = por %p320, %p321
      %p324 = scmp.ne.s32.totalorder %s307, %s323
      %p325 = scmp.eq.s32.totalorder %s27, 0
      %p326 = por %p324, %p325
      %s327 = ssub.s32 %s29, %s36
      %p328 = scmp.eq.s32.totalorder %s327, 0
      %s330 = sadd.s32 %s329, 1
      %s331 = scalar_select %p328, %s329, %s330
      %p334 = pneg %p328
      %p335 = scmp.eq.s32.totalorder %s21, 2
      %p336 = por %p334, %p335
      %p337 = scmp.ne.s32.totalorder %s329, %s332
      %p338 = scmp.eq.s32.totalorder %s21, 0
      %p339 = por %p337, %p338
      %p340 = scmp.ne.s32.totalorder %s329, %s332
      %p341 = scmp.eq.s32.totalorder %s26, 2
      %p342 = por %p340, %p341
      %p343 = scmp.ne.s32.totalorder %s332, %s333
      %p344 = scmp.eq.s32.totalorder %s26, 0
      %p345 = por %p343, %p344
      %p346 = scmp.ne.s32.totalorder %s332, %s333
      %p347 = scmp.eq.s32.totalorder %s27, 2
      %p348 = por %p346, %p347
      %p350 = scmp.ne.s32.totalorder %s333, %s349
      %p351 = scmp.eq.s32.totalorder %s27, 0
      %p352 = por %p350, %p351
      %s353 = ssub.s32 %s29, %s36
      %p354 = scmp.eq.s32.totalorder %s353, 0
      %s356 = sadd.s32 %s355, 1
      %s357 = scalar_select %p354, %s355, %s356
      %p360 = pneg %p354
      %p361 = scmp.eq.s32.totalorder %s21, 2
      %p362 = por %p360, %p361
      %p363 = scmp.ne.s32.totalorder %s355, %s358
      %p364 = scmp.eq.s32.totalorder %s21, 0
      %p365 = por %p363, %p364
      %p366 = scmp.ne.s32.totalorder %s355, %s358
      %p367 = scmp.eq.s32.totalorder %s26, 2
      %p368 = por %p366, %p367
      %p369 = scmp.ne.s32.totalorder %s358, %s359
      %p370 = scmp.eq.s32.totalorder %s26, 0
      %p371 = por %p369, %p370
      %p372 = scmp.ne.s32.totalorder %s358, %s359
      %p373 = scmp.eq.s32.totalorder %s27, 2
      %p374 = por %p372, %p373
      %p376 = scmp.ne.s32.totalorder %s359, %s375
      %p377 = scmp.eq.s32.totalorder %s27, 0
      %p378 = por %p376, %p377
      %s379 = ssub.s32 %s29, %s36
      %p380 = scmp.eq.s32.totalorder %s379, 0
      %s382 = sadd.s32 %s381, 1
      %s383 = scalar_select %p380, %s381, %s382
      %p386 = pneg %p380
      %p387 = scmp.eq.s32.totalorder %s21, 2
      %p388 = por %p386, %p387
      %p389 = scmp.ne.s32.totalorder %s381, %s384
      %p390 = scmp.eq.s32.totalorder %s21, 0
      %p391 = por %p389, %p390
      %p392 = scmp.ne.s32.totalorder %s381, %s384
      %p393 = scmp.eq.s32.totalorder %s26, 2
      %p394 = por %p392, %p393
      %p395 = scmp.ne.s32.totalorder %s384, %s385
      %p396 = scmp.eq.s32.totalorder %s26, 0
      %p397 = por %p395, %p396
      %p398 = scmp.ne.s32.totalorder %s384, %s385
      %p399 = scmp.eq.s32.totalorder %s27, 2
      %p400 = por %p398, %p399
      %p402 = scmp.ne.s32.totalorder %s385, %s401
      %p403 = scmp.eq.s32.totalorder %s27, 0
      %p404 = por %p402, %p403
      %s405 = ssub.s32 %s28, %s40
      %p406 = scmp.eq.s32.totalorder %s405, 0
      %s408 = sadd.s32 %s407, 1
      %s409 = scalar_select %p406, %s407, %s408
      %p412 = pneg %p406
      %p413 = scmp.eq.s32.totalorder %s21, 2
      %p414 = por %p412, %p413
      %p415 = scmp.ne.s32.totalorder %s407, %s410
      %p416 = scmp.eq.s32.totalorder %s21, 0
      %p417 = por %p415, %p416
      %p418 = scmp.ne.s32.totalorder %s407, %s410
      %p419 = scmp.eq.s32.totalorder %s26, 2
      %p420 = por %p418, %p419
      %p421 = scmp.ne.s32.totalorder %s410, %s411
      %p422 = scmp.eq.s32.totalorder %s26, 0
      %p423 = por %p421, %p422
      %p424 = scmp.ne.s32.totalorder %s410, %s411
      %p425 = scmp.eq.s32.totalorder %s27, 2
      %p426 = por %p424, %p425
      %p428 = scmp.ne.s32.totalorder %s411, %s427
      %p429 = scmp.eq.s32.totalorder %s27, 0
      %p430 = por %p428, %p429
      %p431 = scmp.le.s32.totalorder 1, %s21
      %p432 = scmp.lt.s32.totalorder %s21, 4
      %p433 = pnand %p431, %p432
      %p434 = pneg %p433
      // Predicated region
      $region9: #{tpu_custom_call.1} parent=5 // pred_check
        _
      $region10: #{tpu_custom_call.1} parent=5 // pred_check_branch
        %436 = sbr.rel (%p433) target = $region12
      $region11: #{tpu_custom_call.1} parent=5 // pred_region
        %s437 = ssub.s32 %s21, 1
        // Predicated region
        $region13: #{tpu_custom_call.1} parent=11 // pred_check
          %p438 = pneg %p59
        $region14: #{tpu_custom_call.1} parent=11 // pred_check_branch
          %440 = sbr.rel (%p438) target = $region16
        $region15: #{tpu_custom_call.1} parent=11 // pred_region
          %s441 = smul.u32 2, %s30
          %p442 = scmp.lt.s32.totalorder %s441, 1
          %s443 = scalar_select %p442, %s441, 1
          %s444 = smul.addr %s443, 8
          %s445 = scalar_lea.vmem %s0, %s444
          %s446 = smul.u32 2, %s30
        $region16: #{tpu_custom_call.1} parent=11 // pred_fallthru
          _
        // Predicated region
        $region17: #{tpu_custom_call.1} parent=11 // pred_check
          %p447 = pneg %p85
        $region18: #{tpu_custom_call.1} parent=11 // pred_check_branch
          %449 = sbr.rel (%p447) target = $region20
        $region19: #{tpu_custom_call.1} parent=11 // pred_region
          %s450 = smul.u32 2, %s30
          %p451 = scmp.lt.s32.totalorder %s450, 1
          %s452 = scalar_select %p451, %s450, 1
          %s453 = scalar_lea.vmem %s1, %s452
          %s454 = smul.u32 2, %s30
        $region20: #{tpu_custom_call.1} parent=11 // pred_fallthru
          _
      $region12: #{tpu_custom_call.1} parent=5 // pred_fallthru
        _
      %p455 = scmp.lt.s32.totalorder %s21, 3
      // Predicated region
      $region21: #{tpu_custom_call.1} parent=5 // pred_check
        %p456 = pneg %p455
      $region22: #{tpu_custom_call.1} parent=5 // pred_check_branch
        %458 = sbr.rel (%p456) target = $region24
      $region23: #{tpu_custom_call.1} parent=5 // pred_region
        // Predicated region
        $region25: #{tpu_custom_call.1} parent=23 // pred_check
          %p459 = pneg %p105
        $region26: #{tpu_custom_call.1} parent=23 // pred_check_branch
          %461 = sbr.rel (%p459) target = $region28
        $region27: #{tpu_custom_call.1} parent=23 // pred_region
          %p462 = scmp.lt.s32.totalorder %s29, 2
          %s463 = scalar_select %p462, %s29, 2
          %s464 = smul.addr %s463, 4
          %s465 = smul.addr %s464, 4
          %s466 = scalar_lea.vmem %s2, %s465
        $region28: #{tpu_custom_call.1} parent=23 // pred_fallthru
          _
        // Predicated region
        $region29: #{tpu_custom_call.1} parent=23 // pred_check
          %p467 = pneg %p131
        $region30: #{tpu_custom_call.1} parent=23 // pred_check_branch
          %469 = sbr.rel (%p467) target = $region32
        $region31: #{tpu_custom_call.1} parent=23 // pred_region
          %p470 = scmp.lt.s32.totalorder %s29, 2
          %s471 = scalar_select %p470, %s29, 2
          %s472 = scalar_lea.vmem %s3, %s471
        $region32: #{tpu_custom_call.1} parent=23 // pred_fallthru
          _
        // Predicated region
        $region33: #{tpu_custom_call.1} parent=23 // pred_check
          %p473 = pneg %p157
        $region34: #{tpu_custom_call.1} parent=23 // pred_check_branch
          %475 = sbr.rel (%p473) target = $region36
        $region35: #{tpu_custom_call.1} parent=23 // pred_region
          %p476 = scmp.lt.s32.totalorder %s29, 2
          %s477 = scalar_select %p476, %s29, 2
          %s478 = smul.addr %s477, 4
          %s479 = smul.addr %s478, 4
          %s480 = scalar_lea.vmem %s4, %s479
        $region36: #{tpu_custom_call.1} parent=23 // pred_fallthru
          _
        // Predicated region
        $region37: #{tpu_custom_call.1} parent=23 // pred_check
          %p481 = pneg %p183
        $region38: #{tpu_custom_call.1} parent=23 // pred_check_branch
          %483 = sbr.rel (%p481) target = $region40
        $region39: #{tpu_custom_call.1} parent=23 // pred_region
          %p484 = scmp.lt.s32.totalorder %s29, 2
          %s485 = scalar_select %p484, %s29, 2
          %s486 = scalar_lea.vmem %s5, %s485
        $region40: #{tpu_custom_call.1} parent=23 // pred_fallthru
          _
        // Predicated region
        $region41: #{tpu_custom_call.1} parent=23 // pred_check
          %p487 = pneg %p209
        $region42: #{tpu_custom_call.1} parent=23 // pred_check_branch
          %489 = sbr.rel (%p487) target = $region44
        $region43: #{tpu_custom_call.1} parent=23 // pred_region
          %p490 = scmp.lt.s32.totalorder %s29, 2
          %s491 = scalar_select %p490, %s29, 2
          %s492 = scalar_lea.vmem %s6, %s491
        $region44: #{tpu_custom_call.1} parent=23 // pred_fallthru
          _
        // Predicated region
        $region45: #{tpu_custom_call.1} parent=23 // pred_check
          %p493 = pneg %p235
        $region46: #{tpu_custom_call.1} parent=23 // pred_check_branch
          %495 = sbr.rel (%p493) target = $region48
        $region47: #{tpu_custom_call.1} parent=23 // pred_region
          %p496 = scmp.lt.s32.totalorder %s29, 2
          %s497 = scalar_select %p496, %s29, 2
          %s498 = scalar_lea.vmem %s7, %s497
        $region48: #{tpu_custom_call.1} parent=23 // pred_fallthru
          _
        // Predicated region
        $region49: #{tpu_custom_call.1} parent=23 // pred_check
          %p499 = pneg %p261
        $region50: #{tpu_custom_call.1} parent=23 // pred_check_branch
          %501 = sbr.rel (%p499) target = $region52
        $region51: #{tpu_custom_call.1} parent=23 // pred_region
          %p502 = scmp.lt.s32.totalorder %s29, 2
          %s503 = scalar_select %p502, %s29, 2
          %s504 = smul.addr %s503, 4
          %s505 = smul.addr %s504, 4
          %s506 = scalar_lea.vmem %s8, %s505
        $region52: #{tpu_custom_call.1} parent=23 // pred_fallthru
          _
        // Predicated region
        $region53: #{tpu_custom_call.1} parent=23 // pred_check
          %p507 = pneg %p287
        $region54: #{tpu_custom_call.1} parent=23 // pred_check_branch
          %509 = sbr.rel (%p507) target = $region56
        $region55: #{tpu_custom_call.1} parent=23 // pred_region
          %p510 = scmp.lt.s32.totalorder %s29, 2
          %s511 = scalar_select %p510, %s29, 2
          %s512 = scalar_lea.vmem %s9, %s511
        $region56: #{tpu_custom_call.1} parent=23 // pred_fallthru
          _
        // Predicated region
        $region57: #{tpu_custom_call.1} parent=23 // pred_check
          %p513 = pneg %p313
        $region58: #{tpu_custom_call.1} parent=23 // pred_check_branch
          %515 = sbr.rel (%p513) target = $region60
        $region59: #{tpu_custom_call.1} parent=23 // pred_region
          %p516 = scmp.lt.s32.totalorder %s29, 2
          %s517 = scalar_select %p516, %s29, 2
          %s518 = smul.addr %s517, 16
          %s519 = smul.addr %s518, 4
          %s520 = scalar_lea.vmem %s10, %s519
        $region60: #{tpu_custom_call.1} parent=23 // pred_fallthru
          _
        // Predicated region
        $region61: #{tpu_custom_call.1} parent=23 // pred_check
          %p521 = pneg %p339
        $region62: #{tpu_custom_call.1} parent=23 // pred_check_branch
          %523 = sbr.rel (%p521) target = $region64
        $region63: #{tpu_custom_call.1} parent=23 // pred_region
          %p524 = scmp.lt.s32.totalorder %s29, 2
          %s525 = scalar_select %p524, %s29, 2
          %s526 = scalar_lea.vmem %s11, %s525
        $region64: #{tpu_custom_call.1} parent=23 // pred_fallthru
          _
        // Predicated region
        $region65: #{tpu_custom_call.1} parent=23 // pred_check
          %p527 = pneg %p365
        $region66: #{tpu_custom_call.1} parent=23 // pred_check_branch
          %529 = sbr.rel (%p527) target = $region68
        $region67: #{tpu_custom_call.1} parent=23 // pred_region
          %p530 = scmp.lt.s32.totalorder %s29, 2
          %s531 = scalar_select %p530, %s29, 2
          %s532 = scalar_lea.vmem %s12, %s531
        $region68: #{tpu_custom_call.1} parent=23 // pred_fallthru
          _
        // Predicated region
        $region69: #{tpu_custom_call.1} parent=23 // pred_check
          %p533 = pneg %p391
        $region70: #{tpu_custom_call.1} parent=23 // pred_check_branch
          %535 = sbr.rel (%p533) target = $region72
        $region71: #{tpu_custom_call.1} parent=23 // pred_region
          %p536 = scmp.lt.s32.totalorder %s29, 2
          %s537 = scalar_select %p536, %s29, 2
          %s538 = scalar_lea.vmem %s13, %s537
        $region72: #{tpu_custom_call.1} parent=23 // pred_fallthru
          _
      $region24: #{tpu_custom_call.1} parent=5 // pred_fallthru
        _
      %p539 = scmp.le.s32.totalorder 1, %s21
      %p540 = scmp.lt.s32.totalorder %s21, 4
      %p541 = pnand %p539, %p540
      %p542 = pneg %p541
      // Predicated region
      $region73: #{tpu_custom_call.1} parent=5 // pred_check
        _
      $region74: #{tpu_custom_call.1} parent=5 // pred_check_branch
        %544 = sbr.rel (%p541) target = $region76
      $region75: #{tpu_custom_call.1} parent=5 // pred_region
        %s545 = ssub.s32 %s21, 1
        %s546 = smul.u32 2, %s30
        %p547 = scmp.lt.s32.totalorder %s546, 1
        %s548 = scalar_select %p547, %s546, 1
        %s549 = smul.addr %s548, 8
        %s550 = scalar_lea.vmem %s0, %s549
        %p551 = pneg %p59
        %p552 = pneg %p56
        %s553 = smul.u32 2, %s30
        %p554 = scmp.lt.s32.totalorder %s553, 1
        %s555 = scalar_select %p554, %s553, 1
        %s556 = scalar_lea.vmem %s1, %s555
        %p557 = pneg %p85
        %p558 = pneg %p82
        %p559 = scmp.lt.s32.totalorder %s31, 2
        %s560 = scalar_select %p559, %s31, 2
        %s561 = smul.addr %s560, 4
        %s562 = smul.addr %s561, 4
        %s563 = scalar_lea.vmem %s2, %s562
        %p564 = pneg %p111
        %p565 = pneg %p108
        %p566 = scmp.lt.s32.totalorder %s31, 2
        %s567 = scalar_select %p566, %s31, 2
        %s568 = scalar_lea.vmem %s3, %s567
        %p569 = pneg %p137
        %p570 = pneg %p134
        %p571 = scmp.lt.s32.totalorder %s31, 2
        %s572 = scalar_select %p571, %s31, 2
        %s573 = smul.addr %s572, 4
        %s574 = smul.addr %s573, 4
        %s575 = scalar_lea.vmem %s4, %s574
        %p576 = pneg %p163
        %p577 = pneg %p160
        %p578 = scmp.lt.s32.totalorder %s31, 2
        %s579 = scalar_select %p578, %s31, 2
        %s580 = scalar_lea.vmem %s5, %s579
        %p581 = pneg %p189
        %p582 = pneg %p186
        %p583 = scmp.lt.s32.totalorder %s31, 2
        %s584 = scalar_select %p583, %s31, 2
        %s585 = scalar_lea.vmem %s6, %s584
        %p586 = pneg %p215
        %p587 = pneg %p212
        %p588 = scmp.lt.s32.totalorder %s31, 2
        %s589 = scalar_select %p588, %s31, 2
        %s590 = scalar_lea.vmem %s7, %s589
        %p591 = pneg %p241
        %p592 = pneg %p238
        %p593 = scmp.lt.s32.totalorder %s31, 2
        %s594 = scalar_select %p593, %s31, 2
        %s595 = smul.addr %s594, 4
        %s596 = smul.addr %s595, 4
        %s597 = scalar_lea.vmem %s8, %s596
        %p598 = pneg %p267
        %p599 = pneg %p264
        %p600 = scmp.lt.s32.totalorder %s31, 2
        %s601 = scalar_select %p600, %s31, 2
        %s602 = scalar_lea.vmem %s9, %s601
        %p603 = pneg %p293
        %p604 = pneg %p290
        %p605 = scmp.lt.s32.totalorder %s31, 2
        %s606 = scalar_select %p605, %s31, 2
        %s607 = smul.addr %s606, 16
        %s608 = smul.addr %s607, 4
        %s609 = scalar_lea.vmem %s10, %s608
        %p610 = pneg %p319
        %p611 = pneg %p316
        %p612 = scmp.lt.s32.totalorder %s31, 2
        %s613 = scalar_select %p612, %s31, 2
        %s614 = scalar_lea.vmem %s11, %s613
        %p615 = pneg %p345
        %p616 = pneg %p342
        %p617 = scmp.lt.s32.totalorder %s31, 2
        %s618 = scalar_select %p617, %s31, 2
        %s619 = scalar_lea.vmem %s12, %s618
        %p620 = pneg %p371
        %p621 = pneg %p368
        %p622 = scmp.lt.s32.totalorder %s31, 2
        %s623 = scalar_select %p622, %s31, 2
        %s624 = scalar_lea.vmem %s13, %s623
        %p625 = pneg %p397
        %p626 = pneg %p394
        %p627 = pneg %p423
        %p628 = pneg %p420
        %s629 = smul.u32 2, %s30
        %p630 = scmp.lt.s32.totalorder %s629, 1
        %s631 = scalar_select %p630, %s629, 1
        %s632 = smul.addr %s631, 8
        %s633 = scalar_lea.vmem %s0, %s632
        %s634 = smul.u32 2, %s30
        %s635 = smul.u32 2, %s30
        %p636 = scmp.lt.s32.totalorder %s635, 1
        %s637 = scalar_select %p636, %s635, 1
        %s638 = scalar_lea.vmem %s1, %s637
        %s639 = smul.u32 2, %s30
        %p640 = scmp.lt.s32.totalorder %s31, 2
        %s641 = scalar_select %p640, %s31, 2
        %s642 = smul.addr %s641, 4
        %s643 = smul.addr %s642, 4
        %s644 = scalar_lea.vmem %s2, %s643
        %p645 = scmp.lt.s32.totalorder %s31, 2
        %s646 = scalar_select %p645, %s31, 2
        %s647 = scalar_lea.vmem %s3, %s646
        %p648 = scmp.lt.s32.totalorder %s31, 2
        %s649 = scalar_select %p648, %s31, 2
        %s650 = smul.addr %s649, 4
        %s651 = smul.addr %s650, 4
        %s652 = scalar_lea.vmem %s4, %s651
        %p653 = scmp.lt.s32.totalorder %s31, 2
        %s654 = scalar_select %p653, %s31, 2
        %s655 = scalar_lea.vmem %s5, %s654
        %p656 = scmp.lt.s32.totalorder %s31, 2
        %s657 = scalar_select %p656, %s31, 2
        %s658 = scalar_lea.vmem %s6, %s657
        %p659 = scmp.lt.s32.totalorder %s31, 2
        %s660 = scalar_select %p659, %s31, 2
        %s661 = scalar_lea.vmem %s7, %s660
        %p662 = scmp.lt.s32.totalorder %s31, 2
        %s663 = scalar_select %p662, %s31, 2
        %s664 = smul.addr %s663, 4
        %s665 = smul.addr %s664, 4
        %s666 = scalar_lea.vmem %s8, %s665
        %p667 = scmp.lt.s32.totalorder %s31, 2
        %s668 = scalar_select %p667, %s31, 2
        %s669 = scalar_lea.vmem %s9, %s668
        %p670 = scmp.lt.s32.totalorder %s31, 2
        %s671 = scalar_select %p670, %s31, 2
        %s672 = smul.addr %s671, 16
        %s673 = smul.addr %s672, 4
        %s674 = scalar_lea.vmem %s10, %s673
        %p675 = scmp.lt.s32.totalorder %s31, 2
        %s676 = scalar_select %p675, %s31, 2
        %s677 = scalar_lea.vmem %s11, %s676
        %p678 = scmp.lt.s32.totalorder %s31, 2
        %s679 = scalar_select %p678, %s31, 2
        %s680 = scalar_lea.vmem %s12, %s679
        %p681 = scmp.lt.s32.totalorder %s31, 2
        %s682 = scalar_select %p681, %s31, 2
        %s683 = scalar_lea.vmem %s13, %s682
        %s684 = smul.u32 2, %s30
        %p686 = scmp.eq.s32.totalorder %s31, 0
        // Predicated region
        $region77: #{tpu_custom_call.1} parent=75 // pred_check
          %p687 = pneg %p686
        $region78: #{tpu_custom_call.1} parent=75 // pred_check_branch
          %689 = sbr.rel (%p687) target = $region80
        $region79: #{tpu_custom_call.1} parent=75 // pred_region
          %v690 = vld [vmem:[%s633] sm:$0xff]
          %v691 = vld [vmem:[%s633 + $0x8] sm:$0xff]
          %vm692 = vcmask 261120
          %693 = vst.msk [vmem:[#allocation2] sm:$0xff] %vm692, %v690
          %694 = vst.msk [vmem:[#allocation2 + $0x8] sm:$0xff] %vm692, %v691
        $region80: #{tpu_custom_call.1} parent=75 // pred_fallthru
          _
        %v695 = vld [vmem:[#allocation2] sm:$0xff]
        %v696 = vld [vmem:[#allocation2 + $0x8] sm:$0xff]
        %v697 = vpack.c.bf16 %v696, %v695
        %v698 = vld [vmem:[%s644] sm:$0xf]
        %v699 = vld [vmem:[%s644 + $0x4] sm:$0xf]
        %v700 = vld [vmem:[%s644 + $0x8] sm:$0xf]
        %v701 = vld [vmem:[%s644 + $0xc] sm:$0xf]
        %v702 = vld [vmem:[%s647] sm:$0x1]
        %v704 = vlaneseq
        %v705 = vshrl.u32 %v704, 7
        %v706 = vsub.s32 0, %v705
        %v707 = vrot.slane %v702, %v706
        %v713 = vunpack.c.l.b16 %v698
        %v714 = vunpack.c.l.b16 %v699
        %v715 = vunpack.c.l.b16 %v700
        %v716 = vunpack.c.l.b16 %v701
        %v717 = vpack.c.b16 %v714, %v713
        %v718 = vpack.c.b16 %v716, %v715
        %vm721 = vcmask 261120
        %v723 = vsel %vm721, %v697, 0
        %725 = vmatprep.subr.bf16.mxu0 0
        %726 = vmatpush1.bf16.msra.mxu0 %v717
        %727 = vmatprep.subr.bf16.mxu0 0
        %728 = vmatpush1.bf16.msra.mxu0 %v718
        %729 = vmatprep.subr.bf16.mxu0 0
        %730 = vmatpush1.bf16.msra.mxu0 0
        %731 = vmatprep.subr.bf16.mxu0 0
        %732 = vmatpush1.bf16.msra.mxu0 0
        %733 = vmatprep.subr.bf16.mxu0 0
        %734 = vmatpush1.bf16.msra.mxu0 0
        %735 = vmatprep.subr.bf16.mxu0 0
        %736 = vmatpush1.bf16.msra.mxu0 0
        %737 = vmatprep.subr.bf16.mxu0 0
        %738 = vmatpush1.bf16.msra.mxu0 0
        %739 = vmatprep.subr.bf16.mxu0 0
        %740 = vmatpush1.bf16.msra.mxu0 0
        %741 = vmatprep.subr.bf16.mxu0 0
        %742 = vmatpush1.bf16.msra.mxu0 0
        %743 = vmatprep.subr.bf16.mxu0 0
        %744 = vmatpush1.bf16.msra.mxu0 0
        %745 = vmatprep.subr.bf16.mxu0 0
        %746 = vmatpush1.bf16.msra.mxu0 0
        %747 = vmatprep.subr.bf16.mxu0 0
        %748 = vmatpush1.bf16.msra.mxu0 0
        %749 = vmatprep.subr.bf16.mxu0 0
        %750 = vmatpush1.bf16.msra.mxu0 0
        %751 = vmatprep.subr.bf16.mxu0 0
        %752 = vmatpush1.bf16.msra.mxu0 0
        %753 = vmatprep.subr.bf16.mxu0 0
        %754 = vmatpush1.bf16.msra.mxu0 0
        %755 = vmatprep.subr.bf16.mxu0 0
        %756 = vmatpush1.bf16.msra.mxu0 0
        %757 = vmatprep.mubr.bf16.mxu0 0
        %758 = vmatmul.mubr.bf16.gmra.mrb[0].mxu0 %v723
        %v759 = vpop.f32.mrb[0].mxu0
        %v760 = vadd.f32 %v707, %v759
        %v761 = vpop.f32.mrb[0].mxu0
        %v762 = vpop.f32.mrb[0].mxu0
        %v763 = vadd.f32 %v707, %v762
        %v764 = vpop.f32.mrb[0].mxu0
        %765 = vdwg.mxu0
        %768 = vrot.lane.b32.xlu0 %v760, 120
        %v769 = vpop.permute.xlu0 %768
        %770 = vrot.lane.b32.xlu0 %v763, 120
        %v771 = vpop.permute.xlu0 %770
        %774 = vrot.lane.b32.xlu0 %v760, 112
        %v775 = vpop.permute.xlu0 %774
        %776 = vrot.lane.b32.xlu0 %v763, 112
        %v777 = vpop.permute.xlu0 %776
        %780 = vrot.lane.b32.xlu0 %v760, 104
        %v781 = vpop.permute.xlu0 %780
        %782 = vrot.lane.b32.xlu0 %v763, 104
        %v783 = vpop.permute.xlu0 %782
        %786 = vrot.lane.b32.xlu0 %v760, 96
        %v787 = vpop.permute.xlu0 %786
        %788 = vrot.lane.b32.xlu0 %v763, 96
        %v789 = vpop.permute.xlu0 %788
        %792 = vrot.lane.b32.xlu0 %v760, 88
        %v793 = vpop.permute.xlu0 %792
        %794 = vrot.lane.b32.xlu0 %v763, 88
        %v795 = vpop.permute.xlu0 %794
        %798 = vrot.lane.b32.xlu0 %v760, 80
        %v799 = vpop.permute.xlu0 %798
        %800 = vrot.lane.b32.xlu0 %v763, 80
        %v801 = vpop.permute.xlu0 %800
        %804 = vrot.lane.b32.xlu0 %v760, 72
        %v805 = vpop.permute.xlu0 %804
        %806 = vrot.lane.b32.xlu0 %v763, 72
        %v807 = vpop.permute.xlu0 %806
        %810 = vrot.lane.b32.xlu0 %v760, 64
        %v811 = vpop.permute.xlu0 %810
        %812 = vrot.lane.b32.xlu0 %v763, 64
        %v813 = vpop.permute.xlu0 %812
        %816 = vrot.lane.b32.xlu0 %v760, 56
        %v817 = vpop.permute.xlu0 %816
        %818 = vrot.lane.b32.xlu0 %v763, 56
        %v819 = vpop.permute.xlu0 %818
        %822 = vrot.lane.b32.xlu0 %v760, 48
        %v823 = vpop.permute.xlu0 %822
        %824 = vrot.lane.b32.xlu0 %v763, 48
        %v825 = vpop.permute.xlu0 %824
        %828 = vrot.lane.b32.xlu0 %v760, 40
        %v829 = vpop.permute.xlu0 %828
        %830 = vrot.lane.b32.xlu0 %v763, 40
        %v831 = vpop.permute.xlu0 %830
        %v834 = vcombine.low %v760, %v775
        %v835 = vcombine.high %v760, %v775
        %v837 = vunpack.c.l.s4 1983009808
        %v838 = vunpack.c.0.s8 %v837
        %v839 = vlaneseq
        %v840 = vshrl.u32 %v839, 7
        %v841 = vsub.s32 %v838, %v840
        %v842 = vrot.slane %v834, %v841
        %v844 = vunpack.c.l.s4 1983009808
        %v845 = vunpack.c.0.s8 %v844
        %v846 = vlaneseq
        %v847 = vshrl.u32 %v846, 7
        %v848 = vsub.s32 %v845, %v847
        %v849 = vrot.slane %v835, %v848
        %v850 = vcombine.low %v769, %v781
        %v851 = vcombine.high %v769, %v781
        %v853 = vunpack.c.l.s4 1983009808
        %v854 = vunpack.c.0.s8 %v853
        %v855 = vlaneseq
        %v856 = vshrl.u32 %v855, 7
        %v857 = vsub.s32 %v854, %v856
        %v858 = vrot.slane %v850, %v857
        %v860 = vunpack.c.l.s4 1983009808
        %v861 = vunpack.c.0.s8 %v860
        %v862 = vlaneseq
        %v863 = vshrl.u32 %v862, 7
        %v864 = vsub.s32 %v861, %v863
        %v865 = vrot.slane %v851, %v864
        %v866 = vcombine.low %v787, %v799
        %v867 = vcombine.high %v787, %v799
        %v869 = vunpack.c.l.s4 1983009808
        %v870 = vunpack.c.0.s8 %v869
        %v871 = vlaneseq
        %v872 = vshrl.u32 %v871, 7
        %v873 = vsub.s32 %v870, %v872
        %v874 = vrot.slane %v866, %v873
        %v876 = vunpack.c.l.s4 1983009808
        %v877 = vunpack.c.0.s8 %v876
        %v878 = vlaneseq
        %v879 = vshrl.u32 %v878, 7
        %v880 = vsub.s32 %v877, %v879
        %v881 = vrot.slane %v867, %v880
        %v882 = vcombine.low %v793, %v805
        %v883 = vcombine.high %v793, %v805
        %v885 = vunpack.c.l.s4 1983009808
        %v886 = vunpack.c.0.s8 %v885
        %v887 = vlaneseq
        %v888 = vshrl.u32 %v887, 7
        %v889 = vsub.s32 %v886, %v888
        %v890 = vrot.slane %v882, %v889
        %v892 = vunpack.c.l.s4 1983009808
        %v893 = vunpack.c.0.s8 %v892
        %v894 = vlaneseq
        %v895 = vshrl.u32 %v894, 7
        %v896 = vsub.s32 %v893, %v895
        %v897 = vrot.slane %v883, %v896
        %v898 = vcombine.low %v842, %v858
        %v899 = vcombine.high %v842, %v858
        %v901 = vunpack.c.l.s4 1934713408
        %v902 = vunpack.c.0.s8 %v901
        %v903 = vlaneseq
        %v904 = vshrl.u32 %v903, 7
        %v905 = vsub.s32 %v902, %v904
        %v906 = vrot.slane %v898, %v905
        %v908 = vunpack.c.l.s4 1934713408
        %v909 = vunpack.c.0.s8 %v908
        %v910 = vlaneseq
        %v911 = vshrl.u32 %v910, 7
        %v912 = vsub.s32 %v909, %v911
        %v913 = vrot.slane %v899, %v912
        %v914 = vcombine.low %v849, %v865
        %v915 = vcombine.high %v849, %v865
        %v917 = vunpack.c.l.s4 1934713408
        %v918 = vunpack.c.0.s8 %v917
        %v919 = vlaneseq
        %v920 = vshrl.u32 %v919, 7
        %v921 = vsub.s32 %v918, %v920
        %v922 = vrot.slane %v914, %v921
        %v924 = vunpack.c.l.s4 1934713408
        %v925 = vunpack.c.0.s8 %v924
        %v926 = vlaneseq
        %v927 = vshrl.u32 %v926, 7
        %v928 = vsub.s32 %v925, %v927
        %v929 = vrot.slane %v915, %v928
        %v930 = vcombine.low %v874, %v890
        %v931 = vcombine.high %v874, %v890
        %v933 = vunpack.c.l.s4 1934713408
        %v934 = vunpack.c.0.s8 %v933
        %v935 = vlaneseq
        %v936 = vshrl.u32 %v935, 7
        %v937 = vsub.s32 %v934, %v936
        %v938 = vrot.slane %v930, %v937
        %v940 = vunpack.c.l.s4 1934713408
        %v941 = vunpack.c.0.s8 %v940
        %v942 = vlaneseq
        %v943 = vshrl.u32 %v942, 7
        %v944 = vsub.s32 %v941, %v943
        %v945 = vrot.slane %v931, %v944
        %v946 = vcombine.low %v881, %v897
        %v947 = vcombine.high %v881, %v897
        %v949 = vunpack.c.l.s4 1934713408
        %v950 = vunpack.c.0.s8 %v949
        %v951 = vlaneseq
        %v952 = vshrl.u32 %v951, 7
        %v953 = vsub.s32 %v950, %v952
        %v954 = vrot.slane %v946, %v953
        %v956 = vunpack.c.l.s4 1934713408
        %v957 = vunpack.c.0.s8 %v956
        %v958 = vlaneseq
        %v959 = vshrl.u32 %v958, 7
        %v960 = vsub.s32 %v957, %v959
        %v961 = vrot.slane %v947, %v960
        %v962 = vcombine.low %v906, %v938
        %v963 = vcombine.high %v906, %v938
        %v964 = vcombine.low %v913, %v945
        %v965 = vcombine.high %v913, %v945
        %v966 = vcombine.low %v922, %v954
        %v967 = vcombine.high %v922, %v954
        %v968 = vcombine.low %v929, %v961
        %v969 = vcombine.high %v929, %v961
        %v970 = vcombine.low %v811, %v823
        %v971 = vcombine.high %v811, %v823
        %v973 = vunpack.c.l.s4 1983009808
        %v974 = vunpack.c.0.s8 %v973
        %v975 = vlaneseq
        %v976 = vshrl.u32 %v975, 7
        %v977 = vsub.s32 %v974, %v976
        %v978 = vrot.slane %v970, %v977
        %v980 = vunpack.c.l.s4 1983009808
        %v981 = vunpack.c.0.s8 %v980
        %v982 = vlaneseq
        %v983 = vshrl.u32 %v982, 7
        %v984 = vsub.s32 %v981, %v983
        %v985 = vrot.slane %v971, %v984
        %v986 = vcombine.low %v817, %v829
        %v987 = vcombine.high %v817, %v829
        %v989 = vunpack.c.l.s4 1983009808
        %v990 = vunpack.c.0.s8 %v989
        %v991 = vlaneseq
        %v992 = vshrl.u32 %v991, 7
        %v993 = vsub.s32 %v990, %v992
        %v994 = vrot.slane %v986, %v993
        %v996 = vunpack.c.l.s4 1983009808
        %v997 = vunpack.c.0.s8 %v996
        %v998 = vlaneseq
        %v999 = vshrl.u32 %v998, 7
        %v1000 = vsub.s32 %v997, %v999
        %v1001 = vrot.slane %v987, %v1000
        %v1002 = vcombine.low %v978, %v994
        %v1003 = vcombine.high %v978, %v994
        %v1005 = vunpack.c.l.s4 1934713408
        %v1006 = vunpack.c.0.s8 %v1005
        %v1007 = vlaneseq
        %v1008 = vshrl.u32 %v1007, 7
        %v1009 = vsub.s32 %v1006, %v1008
        %v1010 = vrot.slane %v1002, %v1009
        %v1012 = vunpack.c.l.s4 1934713408
        %v1013 = vunpack.c.0.s8 %v1012
        %v1014 = vlaneseq
        %v1015 = vshrl.u32 %v1014, 7
        %v1016 = vsub.s32 %v1013, %v1015
        %v1017 = vrot.slane %v1003, %v1016
        %v1018 = vcombine.low %v985, %v1001
        %v1019 = vcombine.high %v985, %v1001
        %v1021 = vunpack.c.l.s4 1934713408
        %v1022 = vunpack.c.0.s8 %v1021
        %v1023 = vlaneseq
        %v1024 = vshrl.u32 %v1023, 7
        %v1025 = vsub.s32 %v1022, %v1024
        %v1026 = vrot.slane %v1018, %v1025
        %v1028 = vunpack.c.l.s4 1934713408
        %v1029 = vunpack.c.0.s8 %v1028
        %v1030 = vlaneseq
        %v1031 = vshrl.u32 %v1030, 7
        %v1032 = vsub.s32 %v1029, %v1031
        %v1033 = vrot.slane %v1019, %v1032
        %v1034 = vcombine.high %v1010, 0.0
        %v1035 = vcombine.high %v1017, 0.0
        %v1036 = vcombine.high %v1026, 0.0
        %v1037 = vcombine.high %v1033, 0.0
        %v1038 = vcombine.low %v763, %v777
        %v1039 = vcombine.high %v763, %v777
        %v1041 = vunpack.c.l.s4 1983009808
        %v1042 = vunpack.c.0.s8 %v1041
        %v1043 = vlaneseq
        %v1044 = vshrl.u32 %v1043, 7
        %v1045 = vsub.s32 %v1042, %v1044
        %v1046 = vrot.slane %v1038, %v1045
        %v1048 = vunpack.c.l.s4 1983009808
        %v1049 = vunpack.c.0.s8 %v1048
        %v1050 = vlaneseq
        %v1051 = vshrl.u32 %v1050, 7
        %v1052 = vsub.s32 %v1049, %v1051
        %v1053 = vrot.slane %v1039, %v1052
        %v1054 = vcombine.low %v771, %v783
        %v1055 = vcombine.high %v771, %v783
        %v1057 = vunpack.c.l.s4 1983009808
        %v1058 = vunpack.c.0.s8 %v1057
        %v1059 = vlaneseq
        %v1060 = vshrl.u32 %v1059, 7
        %v1061 = vsub.s32 %v1058, %v1060
        %v1062 = vrot.slane %v1054, %v1061
        %v1064 = vunpack.c.l.s4 1983009808
        %v1065 = vunpack.c.0.s8 %v1064
        %v1066 = vlaneseq
        %v1067 = vshrl.u32 %v1066, 7
        %v1068 = vsub.s32 %v1065, %v1067
        %v1069 = vrot.slane %v1055, %v1068
        %v1070 = vcombine.low %v789, %v801
        %v1071 = vcombine.high %v789, %v801
        %v1073 = vunpack.c.l.s4 1983009808
        %v1074 = vunpack.c.0.s8 %v1073
        %v1075 = vlaneseq
        %v1076 = vshrl.u32 %v1075, 7
        %v1077 = vsub.s32 %v1074, %v1076
        %v1078 = vrot.slane %v1070, %v1077
        %v1080 = vunpack.c.l.s4 1983009808
        %v1081 = vunpack.c.0.s8 %v1080
        %v1082 = vlaneseq
        %v1083 = vshrl.u32 %v1082, 7
        %v1084 = vsub.s32 %v1081, %v1083
        %v1085 = vrot.slane %v1071, %v1084
        %v1086 = vcombine.low %v795, %v807
        %v1087 = vcombine.high %v795, %v807
        %v1089 = vunpack.c.l.s4 1983009808
        %v1090 = vunpack.c.0.s8 %v1089
        %v1091 = vlaneseq
        %v1092 = vshrl.u32 %v1091, 7
        %v1093 = vsub.s32 %v1090, %v1092
        %v1094 = vrot.slane %v1086, %v1093
        %v1096 = vunpack.c.l.s4 1983009808
        %v1097 = vunpack.c.0.s8 %v1096
        %v1098 = vlaneseq
        %v1099 = vshrl.u32 %v1098, 7
        %v1100 = vsub.s32 %v1097, %v1099
        %v1101 = vrot.slane %v1087, %v1100
        %v1102 = vcombine.low %v1046, %v1062
        %v1103 = vcombine.high %v1046, %v1062
        %v1105 = vunpack.c.l.s4 1934713408
        %v1106 = vunpack.c.0.s8 %v1105
        %v1107 = vlaneseq
        %v1108 = vshrl.u32 %v1107, 7
        %v1109 = vsub.s32 %v1106, %v1108
        %v1110 = vrot.slane %v1102, %v1109
        %v1112 = vunpack.c.l.s4 1934713408
        %v1113 = vunpack.c.0.s8 %v1112
        %v1114 = vlaneseq
        %v1115 = vshrl.u32 %v1114, 7
        %v1116 = vsub.s32 %v1113, %v1115
        %v1117 = vrot.slane %v1103, %v1116
        %v1118 = vcombine.low %v1053, %v1069
        %v1119 = vcombine.high %v1053, %v1069
        %v1121 = vunpack.c.l.s4 1934713408
        %v1122 = vunpack.c.0.s8 %v1121
        %v1123 = vlaneseq
        %v1124 = vshrl.u32 %v1123, 7
        %v1125 = vsub.s32 %v1122, %v1124
        %v1126 = vrot.slane %v1118, %v1125
        %v1128 = vunpack.c.l.s4 1934713408
        %v1129 = vunpack.c.0.s8 %v1128
        %v1130 = vlaneseq
        %v1131 = vshrl.u32 %v1130, 7
        %v1132 = vsub.s32 %v1129, %v1131
        %v1133 = vrot.slane %v1119, %v1132
        %v1134 = vcombine.low %v1078, %v1094
        %v1135 = vcombine.high %v1078, %v1094
        %v1137 = vunpack.c.l.s4 1934713408
        %v1138 = vunpack.c.0.s8 %v1137
        %v1139 = vlaneseq
        %v1140 = vshrl.u32 %v1139, 7
        %v1141 = vsub.s32 %v1138, %v1140
        %v1142 = vrot.slane %v1134, %v1141
        %v1144 = vunpack.c.l.s4 1934713408
        %v1145 = vunpack.c.0.s8 %v1144
        %v1146 = vlaneseq
        %v1147 = vshrl.u32 %v1146, 7
        %v1148 = vsub.s32 %v1145, %v1147
        %v1149 = vrot.slane %v1135, %v1148
        %v1150 = vcombine.low %v1085, %v1101
        %v1151 = vcombine.high %v1085, %v1101
        %v1153 = vunpack.c.l.s4 1934713408
        %v1154 = vunpack.c.0.s8 %v1153
        %v1155 = vlaneseq
        %v1156 = vshrl.u32 %v1155, 7
        %v1157 = vsub.s32 %v1154, %v1156
        %v1158 = vrot.slane %v1150, %v1157
        %v1160 = vunpack.c.l.s4 1934713408
        %v1161 = vunpack.c.0.s8 %v1160
        %v1162 = vlaneseq
        %v1163 = vshrl.u32 %v1162, 7
        %v1164 = vsub.s32 %v1161, %v1163
        %v1165 = vrot.slane %v1151, %v1164
        %v1166 = vcombine.low %v1110, %v1142
        %v1167 = vcombine.high %v1110, %v1142
        %v1168 = vcombine.low %v1117, %v1149
        %v1169 = vcombine.high %v1117, %v1149
        %v1170 = vcombine.low %v1126, %v1158
        %v1171 = vcombine.high %v1126, %v1158
        %v1172 = vcombine.low %v1133, %v1165
        %v1173 = vcombine.high %v1133, %v1165
        %v1174 = vcombine.low %v813, %v825
        %v1175 = vcombine.high %v813, %v825
        %v1177 = vunpack.c.l.s4 1983009808
        %v1178 = vunpack.c.0.s8 %v1177
        %v1179 = vlaneseq
        %v1180 = vshrl.u32 %v1179, 7
        %v1181 = vsub.s32 %v1178, %v1180
        %v1182 = vrot.slane %v1174, %v1181
        %v1184 = vunpack.c.l.s4 1983009808
        %v1185 = vunpack.c.0.s8 %v1184
        %v1186 = vlaneseq
        %v1187 = vshrl.u32 %v1186, 7
        %v1188 = vsub.s32 %v1185, %v1187
        %v1189 = vrot.slane %v1175, %v1188
        %v1190 = vcombine.low %v819, %v831
        %v1191 = vcombine.high %v819, %v831
        %v1193 = vunpack.c.l.s4 1983009808
        %v1194 = vunpack.c.0.s8 %v1193
        %v1195 = vlaneseq
        %v1196 = vshrl.u32 %v1195, 7
        %v1197 = vsub.s32 %v1194, %v1196
        %v1198 = vrot.slane %v1190, %v1197
        %v1200 = vunpack.c.l.s4 1983009808
        %v1201 = vunpack.c.0.s8 %v1200
        %v1202 = vlaneseq
        %v1203 = vshrl.u32 %v1202, 7
        %v1204 = vsub.s32 %v1201, %v1203
        %v1205 = vrot.slane %v1191, %v1204
        %v1206 = vcombine.low %v1182, %v1198
        %v1207 = vcombine.high %v1182, %v1198
        %v1209 = vunpack.c.l.s4 1934713408
        %v1210 = vunpack.c.0.s8 %v1209
        %v1211 = vlaneseq
        %v1212 = vshrl.u32 %v1211, 7
        %v1213 = vsub.s32 %v1210, %v1212
        %v1214 = vrot.slane %v1206, %v1213
        %v1216 = vunpack.c.l.s4 1934713408
        %v1217 = vunpack.c.0.s8 %v1216
        %v1218 = vlaneseq
        %v1219 = vshrl.u32 %v1218, 7
        %v1220 = vsub.s32 %v1217, %v1219
        %v1221 = vrot.slane %v1207, %v1220
        %v1222 = vcombine.low %v1189, %v1205
        %v1223 = vcombine.high %v1189, %v1205
        %v1225 = vunpack.c.l.s4 1934713408
        %v1226 = vunpack.c.0.s8 %v1225
        %v1227 = vlaneseq
        %v1228 = vshrl.u32 %v1227, 7
        %v1229 = vsub.s32 %v1226, %v1228
        %v1230 = vrot.slane %v1222, %v1229
        %v1232 = vunpack.c.l.s4 1934713408
        %v1233 = vunpack.c.0.s8 %v1232
        %v1234 = vlaneseq
        %v1235 = vshrl.u32 %v1234, 7
        %v1236 = vsub.s32 %v1233, %v1235
        %v1237 = vrot.slane %v1223, %v1236
        %v1238 = vcombine.high %v1214, 0.0
        %v1239 = vcombine.high %v1221, 0.0
        %v1240 = vcombine.high %v1230, 0.0
        %v1241 = vcombine.high %v1237, 0.0
        %v1242 = vcombine.low %v962, %v964
        %v1243 = vcombine.high %v962, %v964
        %v1245 = vunpack.c.l.s4 1983009808
        %v1246 = vunpack.c.0.s8 %v1245
        %v1247 = vlaneseq
        %v1248 = vshrl.u32 %v1247, 7
        %v1249 = vsub.s32 %v1246, %v1248
        %v1250 = vrot.slane %v1242, %v1249
        %v1252 = vunpack.c.l.s4 1983009808
        %v1253 = vunpack.c.0.s8 %v1252
        %v1254 = vlaneseq
        %v1255 = vshrl.u32 %v1254, 7
        %v1256 = vsub.s32 %v1253, %v1255
        %v1257 = vrot.slane %v1243, %v1256
        %v1258 = vcombine.low %v963, %v965
        %v1259 = vcombine.high %v963, %v965
        %v1261 = vunpack.c.l.s4 1983009808
        %v1262 = vunpack.c.0.s8 %v1261
        %v1263 = vlaneseq
        %v1264 = vshrl.u32 %v1263, 7
        %v1265 = vsub.s32 %v1262, %v1264
        %v1266 = vrot.slane %v1258, %v1265
        %v1268 = vunpack.c.l.s4 1983009808
        %v1269 = vunpack.c.0.s8 %v1268
        %v1270 = vlaneseq
        %v1271 = vshrl.u32 %v1270, 7
        %v1272 = vsub.s32 %v1269, %v1271
        %v1273 = vrot.slane %v1259, %v1272
        %v1274 = vcombine.low %v966, %v968
        %v1275 = vcombine.high %v966, %v968
        %v1277 = vunpack.c.l.s4 1983009808
        %v1278 = vunpack.c.0.s8 %v1277
        %v1279 = vlaneseq
        %v1280 = vshrl.u32 %v1279, 7
        %v1281 = vsub.s32 %v1278, %v1280
        %v1282 = vrot.slane %v1274, %v1281
        %v1284 = vunpack.c.l.s4 1983009808
        %v1285 = vunpack.c.0.s8 %v1284
        %v1286 = vlaneseq
        %v1287 = vshrl.u32 %v1286, 7
        %v1288 = vsub.s32 %v1285, %v1287
        %v1289 = vrot.slane %v1275, %v1288
        %v1290 = vcombine.low %v967, %v969
        %v1291 = vcombine.high %v967, %v969
        %v1293 = vunpack.c.l.s4 1983009808
        %v1294 = vunpack.c.0.s8 %v1293
        %v1295 = vlaneseq
        %v1296 = vshrl.u32 %v1295, 7
        %v1297 = vsub.s32 %v1294, %v1296
        %v1298 = vrot.slane %v1290, %v1297
        %v1300 = vunpack.c.l.s4 1983009808
        %v1301 = vunpack.c.0.s8 %v1300
        %v1302 = vlaneseq
        %v1303 = vshrl.u32 %v1302, 7
        %v1304 = vsub.s32 %v1301, %v1303
        %v1305 = vrot.slane %v1291, %v1304
        %v1306 = vcombine.low %v1250, %v1266
        %v1307 = vcombine.high %v1250, %v1266
        %v1309 = vunpack.c.l.s4 1934713408
        %v1310 = vunpack.c.0.s8 %v1309
        %v1311 = vlaneseq
        %v1312 = vshrl.u32 %v1311, 7
        %v1313 = vsub.s32 %v1310, %v1312
        %v1314 = vrot.slane %v1306, %v1313
        %v1316 = vunpack.c.l.s4 1934713408
        %v1317 = vunpack.c.0.s8 %v1316
        %v1318 = vlaneseq
        %v1319 = vshrl.u32 %v1318, 7
        %v1320 = vsub.s32 %v1317, %v1319
        %v1321 = vrot.slane %v1307, %v1320
        %v1322 = vcombine.low %v1257, %v1273
        %v1323 = vcombine.high %v1257, %v1273
        %v1325 = vunpack.c.l.s4 1934713408
        %v1326 = vunpack.c.0.s8 %v1325
        %v1327 = vlaneseq
        %v1328 = vshrl.u32 %v1327, 7
        %v1329 = vsub.s32 %v1326, %v1328
        %v1330 = vrot.slane %v1322, %v1329
        %v1332 = vunpack.c.l.s4 1934713408
        %v1333 = vunpack.c.0.s8 %v1332
        %v1334 = vlaneseq
        %v1335 = vshrl.u32 %v1334, 7
        %v1336 = vsub.s32 %v1333, %v1335
        %v1337 = vrot.slane %v1323, %v1336
        %v1338 = vcombine.low %v1282, %v1298
        %v1339 = vcombine.high %v1282, %v1298
        %v1341 = vunpack.c.l.s4 1934713408
        %v1342 = vunpack.c.0.s8 %v1341
        %v1343 = vlaneseq
        %v1344 = vshrl.u32 %v1343, 7
        %v1345 = vsub.s32 %v1342, %v1344
        %v1346 = vrot.slane %v1338, %v1345
        %v1348 = vunpack.c.l.s4 1934713408
        %v1349 = vunpack.c.0.s8 %v1348
        %v1350 = vlaneseq
        %v1351 = vshrl.u32 %v1350, 7
        %v1352 = vsub.s32 %v1349, %v1351
        %v1353 = vrot.slane %v1339, %v1352
        %v1354 = vcombine.low %v1289, %v1305
        %v1355 = vcombine.high %v1289, %v1305
        %v1357 = vunpack.c.l.s4 1934713408
        %v1358 = vunpack.c.0.s8 %v1357
        %v1359 = vlaneseq
        %v1360 = vshrl.u32 %v1359, 7
        %v1361 = vsub.s32 %v1358, %v1360
        %v1362 = vrot.slane %v1354, %v1361
        %v1364 = vunpack.c.l.s4 1934713408
        %v1365 = vunpack.c.0.s8 %v1364
        %v1366 = vlaneseq
        %v1367 = vshrl.u32 %v1366, 7
        %v1368 = vsub.s32 %v1365, %v1367
        %v1369 = vrot.slane %v1355, %v1368
        %v1370 = vcombine.low %v1314, %v1346
        %v1371 = vcombine.high %v1314, %v1346
        %v1372 = vcombine.low %v1321, %v1353
        %v1373 = vcombine.high %v1321, %v1353
        %v1374 = vcombine.low %v1330, %v1362
        %v1375 = vcombine.high %v1330, %v1362
        %v1376 = vcombine.low %v1337, %v1369
        %v1377 = vcombine.high %v1337, %v1369
        %v1378 = vcombine.low %v1010, %v1017
        %v1380 = vunpack.c.l.s4 1983009808
        %v1381 = vunpack.c.0.s8 %v1380
        %v1382 = vlaneseq
        %v1383 = vshrl.u32 %v1382, 7
        %v1384 = vsub.s32 %v1381, %v1383
        %v1385 = vrot.slane %v1378, %v1384
        %v1386 = vcombine.low %v1034, %v1035
        %v1388 = vunpack.c.l.s4 1983009808
        %v1389 = vunpack.c.0.s8 %v1388
        %v1390 = vlaneseq
        %v1391 = vshrl.u32 %v1390, 7
        %v1392 = vsub.s32 %v1389, %v1391
        %v1393 = vrot.slane %v1386, %v1392
        %v1394 = vcombine.low %v1026, %v1033
        %v1396 = vunpack.c.l.s4 1983009808
        %v1397 = vunpack.c.0.s8 %v1396
        %v1398 = vlaneseq
        %v1399 = vshrl.u32 %v1398, 7
        %v1400 = vsub.s32 %v1397, %v1399
        %v1401 = vrot.slane %v1394, %v1400
        %v1402 = vcombine.low %v1036, %v1037
        %v1404 = vunpack.c.l.s4 1983009808
        %v1405 = vunpack.c.0.s8 %v1404
        %v1406 = vlaneseq
        %v1407 = vshrl.u32 %v1406, 7
        %v1408 = vsub.s32 %v1405, %v1407
        %v1409 = vrot.slane %v1402, %v1408
        %v1410 = vcombine.low %v1385, %v1393
        %v1411 = vcombine.high %v1385, %v1393
        %v1413 = vunpack.c.l.s4 1934713408
        %v1414 = vunpack.c.0.s8 %v1413
        %v1415 = vlaneseq
        %v1416 = vshrl.u32 %v1415, 7
        %v1417 = vsub.s32 %v1414, %v1416
        %v1418 = vrot.slane %v1410, %v1417
        %v1420 = vunpack.c.l.s4 1934713408
        %v1421 = vunpack.c.0.s8 %v1420
        %v1422 = vlaneseq
        %v1423 = vshrl.u32 %v1422, 7
        %v1424 = vsub.s32 %v1421, %v1423
        %v1425 = vrot.slane %v1411, %v1424
        %v1426 = vcombine.low %v1401, %v1409
        %v1427 = vcombine.high %v1401, %v1409
        %v1429 = vunpack.c.l.s4 1934713408
        %v1430 = vunpack.c.0.s8 %v1429
        %v1431 = vlaneseq
        %v1432 = vshrl.u32 %v1431, 7
        %v1433 = vsub.s32 %v1430, %v1432
        %v1434 = vrot.slane %v1426, %v1433
        %v1436 = vunpack.c.l.s4 1934713408
        %v1437 = vunpack.c.0.s8 %v1436
        %v1438 = vlaneseq
        %v1439 = vshrl.u32 %v1438, 7
        %v1440 = vsub.s32 %v1437, %v1439
        %v1441 = vrot.slane %v1427, %v1440
        %v1442 = vcombine.low %v1418, %v1434
        %v1443 = vcombine.high %v1418, %v1434
        %v1444 = vcombine.low %v1425, %v1441
        %v1445 = vcombine.high %v1425, %v1441
        %v1446 = vcombine.low %v1166, %v1168
        %v1447 = vcombine.high %v1166, %v1168
        %v1449 = vunpack.c.l.s4 1983009808
        %v1450 = vunpack.c.0.s8 %v1449
        %v1451 = vlaneseq
        %v1452 = vshrl.u32 %v1451, 7
        %v1453 = vsub.s32 %v1450, %v1452
        %v1454 = vrot.slane %v1446, %v1453
        %v1456 = vunpack.c.l.s4 1983009808
        %v1457 = vunpack.c.0.s8 %v1456
        %v1458 = vlaneseq
        %v1459 = vshrl.u32 %v1458, 7
        %v1460 = vsub.s32 %v1457, %v1459
        %v1461 = vrot.slane %v1447, %v1460
        %v1462 = vcombine.low %v1167, %v1169
        %v1463 = vcombine.high %v1167, %v1169
        %v1465 = vunpack.c.l.s4 1983009808
        %v1466 = vunpack.c.0.s8 %v1465
        %v1467 = vlaneseq
        %v1468 = vshrl.u32 %v1467, 7
        %v1469 = vsub.s32 %v1466, %v1468
        %v1470 = vrot.slane %v1462, %v1469
        %v1472 = vunpack.c.l.s4 1983009808
        %v1473 = vunpack.c.0.s8 %v1472
        %v1474 = vlaneseq
        %v1475 = vshrl.u32 %v1474, 7
        %v1476 = vsub.s32 %v1473, %v1475
        %v1477 = vrot.slane %v1463, %v1476
        %v1478 = vcombine.low %v1170, %v1172
        %v1479 = vcombine.high %v1170, %v1172
        %v1481 = vunpack.c.l.s4 1983009808
        %v1482 = vunpack.c.0.s8 %v1481
        %v1483 = vlaneseq
        %v1484 = vshrl.u32 %v1483, 7
        %v1485 = vsub.s32 %v1482, %v1484
        %v1486 = vrot.slane %v1478, %v1485
        %v1488 = vunpack.c.l.s4 1983009808
        %v1489 = vunpack.c.0.s8 %v1488
        %v1490 = vlaneseq
        %v1491 = vshrl.u32 %v1490, 7
        %v1492 = vsub.s32 %v1489, %v1491
        %v1493 = vrot.slane %v1479, %v1492
        %v1494 = vcombine.low %v1171, %v1173
        %v1495 = vcombine.high %v1171, %v1173
        %v1497 = vunpack.c.l.s4 1983009808
        %v1498 = vunpack.c.0.s8 %v1497
        %v1499 = vlaneseq
        %v1500 = vshrl.u32 %v1499, 7
        %v1501 = vsub.s32 %v1498, %v1500
        %v1502 = vrot.slane %v1494, %v1501
        %v1504 = vunpack.c.l.s4 1983009808
        %v1505 = vunpack.c.0.s8 %v1504
        %v1506 = vlaneseq
        %v1507 = vshrl.u32 %v1506, 7
        %v1508 = vsub.s32 %v1505, %v1507
        %v1509 = vrot.slane %v1495, %v1508
        %v1510 = vcombine.low %v1454, %v1470
        %v1511 = vcombine.high %v1454, %v1470
        %v1513 = vunpack.c.l.s4 1934713408
        %v1514 = vunpack.c.0.s8 %v1513
        %v1515 = vlaneseq
        %v1516 = vshrl.u32 %v1515, 7
        %v1517 = vsub.s32 %v1514, %v1516
        %v1518 = vrot.slane %v1510, %v1517
        %v1520 = vunpack.c.l.s4 1934713408
        %v1521 = vunpack.c.0.s8 %v1520
        %v1522 = vlaneseq
        %v1523 = vshrl.u32 %v1522, 7
        %v1524 = vsub.s32 %v1521, %v1523
        %v1525 = vrot.slane %v1511, %v1524
        %v1526 = vcombine.low %v1461, %v1477
        %v1527 = vcombine.high %v1461, %v1477
        %v1529 = vunpack.c.l.s4 1934713408
        %v1530 = vunpack.c.0.s8 %v1529
        %v1531 = vlaneseq
        %v1532 = vshrl.u32 %v1531, 7
        %v1533 = vsub.s32 %v1530, %v1532
        %v1534 = vrot.slane %v1526, %v1533
        %v1536 = vunpack.c.l.s4 1934713408
        %v1537 = vunpack.c.0.s8 %v1536
        %v1538 = vlaneseq
        %v1539 = vshrl.u32 %v1538, 7
        %v1540 = vsub.s32 %v1537, %v1539
        %v1541 = vrot.slane %v1527, %v1540
        %v1542 = vcombine.low %v1486, %v1502
        %v1543 = vcombine.high %v1486, %v1502
        %v1545 = vunpack.c.l.s4 1934713408
        %v1546 = vunpack.c.0.s8 %v1545
        %v1547 = vlaneseq
        %v1548 = vshrl.u32 %v1547, 7
        %v1549 = vsub.s32 %v1546, %v1548
        %v1550 = vrot.slane %v1542, %v1549
        %v1552 = vunpack.c.l.s4 1934713408
        %v1553 = vunpack.c.0.s8 %v1552
        %v1554 = vlaneseq
        %v1555 = vshrl.u32 %v1554, 7
        %v1556 = vsub.s32 %v1553, %v1555
        %v1557 = vrot.slane %v1543, %v1556
        %v1558 = vcombine.low %v1493, %v1509
        %v1559 = vcombine.high %v1493, %v1509
        %v1561 = vunpack.c.l.s4 1934713408
        %v1562 = vunpack.c.0.s8 %v1561
        %v1563 = vlaneseq
        %v1564 = vshrl.u32 %v1563, 7
        %v1565 = vsub.s32 %v1562, %v1564
        %v1566 = vrot.slane %v1558, %v1565
        %v1568 = vunpack.c.l.s4 1934713408
        %v1569 = vunpack.c.0.s8 %v1568
        %v1570 = vlaneseq
        %v1571 = vshrl.u32 %v1570, 7
        %v1572 = vsub.s32 %v1569, %v1571
        %v1573 = vrot.slane %v1559, %v1572
        %v1574 = vcombine.low %v1518, %v1550
        %v1575 = vcombine.high %v1518, %v1550
        %v1576 = vcombine.low %v1525, %v1557
        %v1577 = vcombine.high %v1525, %v1557
        %v1578 = vcombine.low %v1534, %v1566
        %v1579 = vcombine.high %v1534, %v1566
        %v1580 = vcombine.low %v1541, %v1573
        %v1581 = vcombine.high %v1541, %v1573
        %v1582 = vcombine.low %v1214, %v1221
        %v1584 = vunpack.c.l.s4 1983009808
        %v1585 = vunpack.c.0.s8 %v1584
        %v1586 = vlaneseq
        %v1587 = vshrl.u32 %v1586, 7
        %v1588 = vsub.s32 %v1585, %v1587
        %v1589 = vrot.slane %v1582, %v1588
        %v1590 = vcombine.low %v1238, %v1239
        %v1592 = vunpack.c.l.s4 1983009808
        %v1593 = vunpack.c.0.s8 %v1592
        %v1594 = vlaneseq
        %v1595 = vshrl.u32 %v1594, 7
        %v1596 = vsub.s32 %v1593, %v1595
        %v1597 = vrot.slane %v1590, %v1596
        %v1598 = vcombine.low %v1230, %v1237
        %v1600 = vunpack.c.l.s4 1983009808
        %v1601 = vunpack.c.0.s8 %v1600
        %v1602 = vlaneseq
        %v1603 = vshrl.u32 %v1602, 7
        %v1604 = vsub.s32 %v1601, %v1603
        %v1605 = vrot.slane %v1598, %v1604
        %v1606 = vcombine.low %v1240, %v1241
        %v1608 = vunpack.c.l.s4 1983009808
        %v1609 = vunpack.c.0.s8 %v1608
        %v1610 = vlaneseq
        %v1611 = vshrl.u32 %v1610, 7
        %v1612 = vsub.s32 %v1609, %v1611
        %v1613 = vrot.slane %v1606, %v1612
        %v1614 = vcombine.low %v1589, %v1597
        %v1615 = vcombine.high %v1589, %v1597
        %v1617 = vunpack.c.l.s4 1934713408
        %v1618 = vunpack.c.0.s8 %v1617
        %v1619 = vlaneseq
        %v1620 = vshrl.u32 %v1619, 7
        %v1621 = vsub.s32 %v1618, %v1620
        %v1622 = vrot.slane %v1614, %v1621
        %v1624 = vunpack.c.l.s4 1934713408
        %v1625 = vunpack.c.0.s8 %v1624
        %v1626 = vlaneseq
        %v1627 = vshrl.u32 %v1626, 7
        %v1628 = vsub.s32 %v1625, %v1627
        %v1629 = vrot.slane %v1615, %v1628
        %v1630 = vcombine.low %v1605, %v1613
        %v1631 = vcombine.high %v1605, %v1613
        %v1633 = vunpack.c.l.s4 1934713408
        %v1634 = vunpack.c.0.s8 %v1633
        %v1635 = vlaneseq
        %v1636 = vshrl.u32 %v1635, 7
        %v1637 = vsub.s32 %v1634, %v1636
        %v1638 = vrot.slane %v1630, %v1637
        %v1640 = vunpack.c.l.s4 1934713408
        %v1641 = vunpack.c.0.s8 %v1640
        %v1642 = vlaneseq
        %v1643 = vshrl.u32 %v1642, 7
        %v1644 = vsub.s32 %v1641, %v1643
        %v1645 = vrot.slane %v1631, %v1644
        %v1646 = vcombine.low %v1622, %v1638
        %v1647 = vcombine.high %v1622, %v1638
        %v1648 = vcombine.low %v1629, %v1645
        %v1649 = vcombine.high %v1629, %v1645
        %v1650 = vpack.c.bf16 %v1370, %v1370
        %v1651 = vpack.c.bf16 %v1371, %v1371
        %v1652 = vpack.c.bf16 %v1372, %v1372
        %v1653 = vpack.c.bf16 %v1373, %v1373
        %v1654 = vpack.c.bf16 %v1574, %v1574
        %v1655 = vpack.c.bf16 %v1575, %v1575
        %v1656 = vpack.c.bf16 %v1576, %v1576
        %v1657 = vpack.c.bf16 %v1577, %v1577
        %v1658 = vpack.c.bf16 %v1374, %v1374
        %v1659 = vpack.c.bf16 %v1375, %v1375
        %v1660 = vpack.c.bf16 %v1376, %v1376
        %v1661 = vpack.c.bf16 %v1377, %v1377
        %v1662 = vpack.c.bf16 %v1578, %v1578
        %v1663 = vpack.c.bf16 %v1579, %v1579
        %v1664 = vpack.c.bf16 %v1580, %v1580
        %v1665 = vpack.c.bf16 %v1581, %v1581
        %v1666 = vpack.c.bf16 %v1442, %v1442
        %v1667 = vpack.c.bf16 %v1443, %v1443
        %v1668 = vpack.c.bf16 %v1444, %v1444
        %v1669 = vpack.c.bf16 %v1445, %v1445
        %v1670 = vpack.c.bf16 %v1646, %v1646
        %v1671 = vpack.c.bf16 %v1647, %v1647
        %v1672 = vpack.c.bf16 %v1648, %v1648
        %v1673 = vpack.c.bf16 %v1649, %v1649
        %v1674 = vld [vmem:[%s638] sm:$0x1]
        %v1675 = vld [vmem:[%s638 + $0x1] sm:$0x1]
        %v1678 = vlaneseq
        %v1679 = vshrl.u32 %v1678, 7
        %v1680 = vsub.s32 0, %v1679
        %v1681 = vrot.slane %v1674, %v1680
        %v1682 = vlaneseq
        %v1683 = vshrl.u32 %v1682, 7
        %v1684 = vsub.s32 0, %v1683
        %v1685 = vrot.slane %v1675, %v1684
        %vm1688 = vcmask 64512
        %v1690 = vsel %vm1688, %v1650, 0
        %v1693 = vsel %vm1688, %v1658, 0
        %1695 = vmatprep.subr.bf16.mxu0 0
        %1696 = vmatpush1.bf16.xpose.msra.mxu0 %v1693
        %1697 = vmatprep.subr.bf16.mxu0 0
        %1698 = vmatpush1.bf16.xpose.msra.mxu0 0
        %1699 = vmatprep.subr.bf16.mxu0 0
        %1700 = vmatpush1.bf16.xpose.msra.mxu0 0
        %1701 = vmatprep.subr.bf16.mxu0 0
        %1702 = vmatpush1.bf16.xpose.msra.mxu0 0
        %1703 = vmatprep.subr.bf16.mxu0 0
        %1704 = vmatpush1.bf16.xpose.msra.mxu0 0
        %1705 = vmatprep.subr.bf16.mxu0 0
        %1706 = vmatpush1.bf16.xpose.msra.mxu0 0
        %1707 = vmatprep.subr.bf16.mxu0 0
        %1708 = vmatpush1.bf16.xpose.msra.mxu0 0
        %1709 = vmatprep.subr.bf16.mxu0 0
        %1710 = vmatpush1.bf16.xpose.msra.mxu0 0
        %1711 = vmatprep.subr.bf16.mxu0 0
        %1712 = vmatpush1.bf16.xpose.msra.mxu0 0
        %1713 = vmatprep.subr.bf16.mxu0 0
        %1714 = vmatpush1.bf16.xpose.msra.mxu0 0
        %1715 = vmatprep.subr.bf16.mxu0 0
        %1716 = vmatpush1.bf16.xpose.msra.mxu0 0
        %1717 = vmatprep.subr.bf16.mxu0 0
        %1718 = vmatpush1.bf16.xpose.msra.mxu0 0
        %1719 = vmatprep.subr.bf16.mxu0 0
        %1720 = vmatpush1.bf16.xpose.msra.mxu0 0
        %1721 = vmatprep.subr.bf16.mxu0 0
        %1722 = vmatpush1.bf16.xpose.msra.mxu0 0
        %1723 = vmatprep.subr.bf16.mxu0 0
        %1724 = vmatpush1.bf16.xpose.msra.mxu0 0
        %1725 = vmatprep.subr.bf16.mxu0 0
        %1726 = vmatpush1.bf16.xpose.msra.mxu0 0
        %1727 = vmatprep.mubr.bf16.mxu0 0
        %1728 = vmatmul.mubr.bf16.gmra.mrb[0].mxu0 %v1690
        %v1729 = vpop.f32.mrb[0].mxu0
        %v1730 = vadd.f32 %v1681, %v1729
        %v1731 = vpop.f32.mrb[0].mxu0
        %v1732 = vpop.f32.mrb[0].mxu0
        %v1733 = vpop.f32.mrb[0].mxu0
        %1734 = vdwg.mxu0
        %v1736 = vsel %vm1688, %v1651, 0
        %v1739 = vsel %vm1688, %v1659, 0
        %1741 = vmatprep.subr.bf16.mxu0 0
        %1742 = vmatpush1.bf16.xpose.msra.mxu0 %v1739
        %1743 = vmatprep.subr.bf16.mxu0 0
        %1744 = vmatpush1.bf16.xpose.msra.mxu0 0
        %1745 = vmatprep.subr.bf16.mxu0 0
        %1746 = vmatpush1.bf16.xpose.msra.mxu0 0
        %1747 = vmatprep.subr.bf16.mxu0 0
        %1748 = vmatpush1.bf16.xpose.msra.mxu0 0
        %1749 = vmatprep.subr.bf16.mxu0 0
        %1750 = vmatpush1.bf16.xpose.msra.mxu0 0
        %1751 = vmatprep.subr.bf16.mxu0 0
        %1752 = vmatpush1.bf16.xpose.msra.mxu0 0
        %1753 = vmatprep.subr.bf16.mxu0 0
        %1754 = vmatpush1.bf16.xpose.msra.mxu0 0
        %1755 = vmatprep.subr.bf16.mxu0 0
        %1756 = vmatpush1.bf16.xpose.msra.mxu0 0
        %1757 = vmatprep.subr.bf16.mxu0 0
        %1758 = vmatpush1.bf16.xpose.msra.mxu0 0
        %1759 = vmatprep.subr.bf16.mxu0 0
        %1760 = vmatpush1.bf16.xpose.msra.mxu0 0
        %1761 = vmatprep.subr.bf16.mxu0 0
        %1762 = vmatpush1.bf16.xpose.msra.mxu0 0
        %1763 = vmatprep.subr.bf16.mxu0 0
        %1764 = vmatpush1.bf16.xpose.msra.mxu0 0
        %1765 = vmatprep.subr.bf16.mxu0 0
        %1766 = vmatpush1.bf16.xpose.msra.mxu0 0
        %1767 = vmatprep.subr.bf16.mxu0 0
        %1768 = vmatpush1.bf16.xpose.msra.mxu0 0
        %1769 = vmatprep.subr.bf16.mxu0 0
        %1770 = vmatpush1.bf16.xpose.msra.mxu0 0
        %1771 = vmatprep.subr.bf16.mxu0 0
        %1772 = vmatpush1.bf16.xpose.msra.mxu0 0
        %1773 = vmatprep.mubr.bf16.mxu0 0
        %1774 = vmatmul.mubr.bf16.gmra.mrb[0].mxu0 %v1736
        %v1775 = vpop.f32.mrb[0].mxu0
        %v1776 = vadd.f32 %v1681, %v1775
        %v1777 = vpop.f32.mrb[0].mxu0
        %v1778 = vpop.f32.mrb[0].mxu0
        %v1779 = vpop.f32.mrb[0].mxu0
        %1780 = vdwg.mxu0
        %v1782 = vsel %vm1688, %v1652, 0
        %v1785 = vsel %vm1688, %v1660, 0
        %1787 = vmatprep.subr.bf16.mxu0 0
        %1788 = vmatpush1.bf16.xpose.msra.mxu0 %v1785
        %1789 = vmatprep.subr.bf16.mxu0 0
        %1790 = vmatpush1.bf16.xpose.msra.mxu0 0
        %1791 = vmatprep.subr.bf16.mxu0 0
        %1792 = vmatpush1.bf16.xpose.msra.mxu0 0
        %1793 = vmatprep.subr.bf16.mxu0 0
        %1794 = vmatpush1.bf16.xpose.msra.mxu0 0
        %1795 = vmatprep.subr.bf16.mxu0 0
        %1796 = vmatpush1.bf16.xpose.msra.mxu0 0
        %1797 = vmatprep.subr.bf16.mxu0 0
        %1798 = vmatpush1.bf16.xpose.msra.mxu0 0
        %1799 = vmatprep.subr.bf16.mxu0 0
        %1800 = vmatpush1.bf16.xpose.msra.mxu0 0
        %1801 = vmatprep.subr.bf16.mxu0 0
        %1802 = vmatpush1.bf16.xpose.msra.mxu0 0
        %1803 = vmatprep.subr.bf16.mxu0 0
        %1804 = vmatpush1.bf16.xpose.msra.mxu0 0
        %1805 = vmatprep.subr.bf16.mxu0 0
        %1806 = vmatpush1.bf16.xpose.msra.mxu0 0
        %1807 = vmatprep.subr.bf16.mxu0 0
        %1808 = vmatpush1.bf16.xpose.msra.mxu0 0
        %1809 = vmatprep.subr.bf16.mxu0 0
        %1810 = vmatpush1.bf16.xpose.msra.mxu0 0
        %1811 = vmatprep.subr.bf16.mxu0 0
        %1812 = vmatpush1.bf16.xpose.msra.mxu0 0
        %1813 = vmatprep.subr.bf16.mxu0 0
        %1814 = vmatpush1.bf16.xpose.msra.mxu0 0
        %1815 = vmatprep.subr.bf16.mxu0 0
        %1816 = vmatpush1.bf16.xpose.msra.mxu0 0
        %1817 = vmatprep.subr.bf16.mxu0 0
        %1818 = vmatpush1.bf16.xpose.msra.mxu0 0
        %1819 = vmatprep.mubr.bf16.mxu0 0
        %1820 = vmatmul.mubr.bf16.gmra.mrb[0].mxu0 %v1782
        %v1821 = vpop.f32.mrb[0].mxu0
        %v1822 = vadd.f32 %v1681, %v1821
        %v1823 = vpop.f32.mrb[0].mxu0
        %v1824 = vpop.f32.mrb[0].mxu0
        %v1825 = vpop.f32.mrb[0].mxu0
        %1826 = vdwg.mxu0
        %v1828 = vsel %vm1688, %v1653, 0
        %v1831 = vsel %vm1688, %v1661, 0
        %1833 = vmatprep.subr.bf16.mxu0 0
        %1834 = vmatpush1.bf16.xpose.msra.mxu0 %v1831
        %1835 = vmatprep.subr.bf16.mxu0 0
        %1836 = vmatpush1.bf16.xpose.msra.mxu0 0
        %1837 = vmatprep.subr.bf16.mxu0 0
        %1838 = vmatpush1.bf16.xpose.msra.mxu0 0
        %1839 = vmatprep.subr.bf16.mxu0 0
        %1840 = vmatpush1.bf16.xpose.msra.mxu0 0
        %1841 = vmatprep.subr.bf16.mxu0 0
        %1842 = vmatpush1.bf16.xpose.msra.mxu0 0
        %1843 = vmatprep.subr.bf16.mxu0 0
        %1844 = vmatpush1.bf16.xpose.msra.mxu0 0
        %1845 = vmatprep.subr.bf16.mxu0 0
        %1846 = vmatpush1.bf16.xpose.msra.mxu0 0
        %1847 = vmatprep.subr.bf16.mxu0 0
        %1848 = vmatpush1.bf16.xpose.msra.mxu0 0
        %1849 = vmatprep.subr.bf16.mxu0 0
        %1850 = vmatpush1.bf16.xpose.msra.mxu0 0
        %1851 = vmatprep.subr.bf16.mxu0 0
        %1852 = vmatpush1.bf16.xpose.msra.mxu0 0
        %1853 = vmatprep.subr.bf16.mxu0 0
        %1854 = vmatpush1.bf16.xpose.msra.mxu0 0
        %1855 = vmatprep.subr.bf16.mxu0 0
        %1856 = vmatpush1.bf16.xpose.msra.mxu0 0
        %1857 = vmatprep.subr.bf16.mxu0 0
        %1858 = vmatpush1.bf16.xpose.msra.mxu0 0
        %1859 = vmatprep.subr.bf16.mxu0 0
        %1860 = vmatpush1.bf16.xpose.msra.mxu0 0
        %1861 = vmatprep.subr.bf16.mxu0 0
        %1862 = vmatpush1.bf16.xpose.msra.mxu0 0
        %1863 = vmatprep.subr.bf16.mxu0 0
        %1864 = vmatpush1.bf16.xpose.msra.mxu0 0
        %1865 = vmatprep.mubr.bf16.mxu0 0
        %1866 = vmatmul.mubr.bf16.gmra.mrb[0].mxu0 %v1828
        %v1867 = vpop.f32.mrb[0].mxu0
        %v1868 = vadd.f32 %v1681, %v1867
        %v1869 = vpop.f32.mrb[0].mxu0
        %v1870 = vpop.f32.mrb[0].mxu0
        %v1871 = vpop.f32.mrb[0].mxu0
        %1872 = vdwg.mxu0
        %v1874 = vsel %vm1688, %v1654, 0
        %v1877 = vsel %vm1688, %v1662, 0
        %1879 = vmatprep.subr.bf16.mxu0 0
        %1880 = vmatpush1.bf16.xpose.msra.mxu0 %v1877
        %1881 = vmatprep.subr.bf16.mxu0 0
        %1882 = vmatpush1.bf16.xpose.msra.mxu0 0
        %1883 = vmatprep.subr.bf16.mxu0 0
        %1884 = vmatpush1.bf16.xpose.msra.mxu0 0
        %1885 = vmatprep.subr.bf16.mxu0 0
        %1886 = vmatpush1.bf16.xpose.msra.mxu0 0
        %1887 = vmatprep.subr.bf16.mxu0 0
        %1888 = vmatpush1.bf16.xpose.msra.mxu0 0
        %1889 = vmatprep.subr.bf16.mxu0 0
        %1890 = vmatpush1.bf16.xpose.msra.mxu0 0
        %1891 = vmatprep.subr.bf16.mxu0 0
        %1892 = vmatpush1.bf16.xpose.msra.mxu0 0
        %1893 = vmatprep.subr.bf16.mxu0 0
        %1894 = vmatpush1.bf16.xpose.msra.mxu0 0
        %1895 = vmatprep.subr.bf16.mxu0 0
        %1896 = vmatpush1.bf16.xpose.msra.mxu0 0
        %1897 = vmatprep.subr.bf16.mxu0 0
        %1898 = vmatpush1.bf16.xpose.msra.mxu0 0
        %1899 = vmatprep.subr.bf16.mxu0 0
        %1900 = vmatpush1.bf16.xpose.msra.mxu0 0
        %1901 = vmatprep.subr.bf16.mxu0 0
        %1902 = vmatpush1.bf16.xpose.msra.mxu0 0
        %1903 = vmatprep.subr.bf16.mxu0 0
        %1904 = vmatpush1.bf16.xpose.msra.mxu0 0
        %1905 = vmatprep.subr.bf16.mxu0 0
        %1906 = vmatpush1.bf16.xpose.msra.mxu0 0
        %1907 = vmatprep.subr.bf16.mxu0 0
        %1908 = vmatpush1.bf16.xpose.msra.mxu0 0
        %1909 = vmatprep.subr.bf16.mxu0 0
        %1910 = vmatpush1.bf16.xpose.msra.mxu0 0
        %1911 = vmatprep.mubr.bf16.mxu0 0
        %1912 = vmatmul.mubr.bf16.gmra.mrb[0].mxu0 %v1874
        %v1913 = vpop.f32.mrb[0].mxu0
        %v1914 = vadd.f32 %v1685, %v1913
        %v1915 = vpop.f32.mrb[0].mxu0
        %v1916 = vpop.f32.mrb[0].mxu0
        %v1917 = vpop.f32.mrb[0].mxu0
        %1918 = vdwg.mxu0
        %v1920 = vsel %vm1688, %v1655, 0
        %v1923 = vsel %vm1688, %v1663, 0
        %1925 = vmatprep.subr.bf16.mxu0 0
        %1926 = vmatpush1.bf16.xpose.msra.mxu0 %v1923
        %1927 = vmatprep.subr.bf16.mxu0 0
        %1928 = vmatpush1.bf16.xpose.msra.mxu0 0
        %1929 = vmatprep.subr.bf16.mxu0 0
        %1930 = vmatpush1.bf16.xpose.msra.mxu0 0
        %1931 = vmatprep.subr.bf16.mxu0 0
        %1932 = vmatpush1.bf16.xpose.msra.mxu0 0
        %1933 = vmatprep.subr.bf16.mxu0 0
        %1934 = vmatpush1.bf16.xpose.msra.mxu0 0
        %1935 = vmatprep.subr.bf16.mxu0 0
        %1936 = vmatpush1.bf16.xpose.msra.mxu0 0
        %1937 = vmatprep.subr.bf16.mxu0 0
        %1938 = vmatpush1.bf16.xpose.msra.mxu0 0
        %1939 = vmatprep.subr.bf16.mxu0 0
        %1940 = vmatpush1.bf16.xpose.msra.mxu0 0
        %1941 = vmatprep.subr.bf16.mxu0 0
        %1942 = vmatpush1.bf16.xpose.msra.mxu0 0
        %1943 = vmatprep.subr.bf16.mxu0 0
        %1944 = vmatpush1.bf16.xpose.msra.mxu0 0
        %1945 = vmatprep.subr.bf16.mxu0 0
        %1946 = vmatpush1.bf16.xpose.msra.mxu0 0
        %1947 = vmatprep.subr.bf16.mxu0 0
        %1948 = vmatpush1.bf16.xpose.msra.mxu0 0
        %1949 = vmatprep.subr.bf16.mxu0 0
        %1950 = vmatpush1.bf16.xpose.msra.mxu0 0
        %1951 = vmatprep.subr.bf16.mxu0 0
        %1952 = vmatpush1.bf16.xpose.msra.mxu0 0
        %1953 = vmatprep.subr.bf16.mxu0 0
        %1954 = vmatpush1.bf16.xpose.msra.mxu0 0
        %1955 = vmatprep.subr.bf16.mxu0 0
        %1956 = vmatpush1.bf16.xpose.msra.mxu0 0
        %1957 = vmatprep.mubr.bf16.mxu0 0
        %1958 = vmatmul.mubr.bf16.gmra.mrb[0].mxu0 %v1920
        %v1959 = vpop.f32.mrb[0].mxu0
        %v1960 = vadd.f32 %v1685, %v1959
        %v1961 = vpop.f32.mrb[0].mxu0
        %v1962 = vpop.f32.mrb[0].mxu0
        %v1963 = vpop.f32.mrb[0].mxu0
        %1964 = vdwg.mxu0
        %v1966 = vsel %vm1688, %v1656, 0
        %v1969 = vsel %vm1688, %v1664, 0
        %1971 = vmatprep.subr.bf16.mxu0 0
        %1972 = vmatpush1.bf16.xpose.msra.mxu0 %v1969
        %1973 = vmatprep.subr.bf16.mxu0 0
        %1974 = vmatpush1.bf16.xpose.msra.mxu0 0
        %1975 = vmatprep.subr.bf16.mxu0 0
        %1976 = vmatpush1.bf16.xpose.msra.mxu0 0
        %1977 = vmatprep.subr.bf16.mxu0 0
        %1978 = vmatpush1.bf16.xpose.msra.mxu0 0
        %1979 = vmatprep.subr.bf16.mxu0 0
        %1980 = vmatpush1.bf16.xpose.msra.mxu0 0
        %1981 = vmatprep.subr.bf16.mxu0 0
        %1982 = vmatpush1.bf16.xpose.msra.mxu0 0
        %1983 = vmatprep.subr.bf16.mxu0 0
        %1984 = vmatpush1.bf16.xpose.msra.mxu0 0
        %1985 = vmatprep.subr.bf16.mxu0 0
        %1986 = vmatpush1.bf16.xpose.msra.mxu0 0
        %1987 = vmatprep.subr.bf16.mxu0 0
        %1988 = vmatpush1.bf16.xpose.msra.mxu0 0
        %1989 = vmatprep.subr.bf16.mxu0 0
        %1990 = vmatpush1.bf16.xpose.msra.mxu0 0
        %1991 = vmatprep.subr.bf16.mxu0 0
        %1992 = vmatpush1.bf16.xpose.msra.mxu0 0
        %1993 = vmatprep.subr.bf16.mxu0 0
        %1994 = vmatpush1.bf16.xpose.msra.mxu0 0
        %1995 = vmatprep.subr.bf16.mxu0 0
        %1996 = vmatpush1.bf16.xpose.msra.mxu0 0
        %1997 = vmatprep.subr.bf16.mxu0 0
        %1998 = vmatpush1.bf16.xpose.msra.mxu0 0
        %1999 = vmatprep.subr.bf16.mxu0 0
        %2000 = vmatpush1.bf16.xpose.msra.mxu0 0
        %2001 = vmatprep.subr.bf16.mxu0 0
        %2002 = vmatpush1.bf16.xpose.msra.mxu0 0
        %2003 = vmatprep.mubr.bf16.mxu0 0
        %2004 = vmatmul.mubr.bf16.gmra.mrb[0].mxu0 %v1966
        %v2005 = vpop.f32.mrb[0].mxu0
        %v2006 = vadd.f32 %v1685, %v2005
        %v2007 = vpop.f32.mrb[0].mxu0
        %v2008 = vpop.f32.mrb[0].mxu0
        %v2009 = vpop.f32.mrb[0].mxu0
        %2010 = vdwg.mxu0
        %v2012 = vsel %vm1688, %v1657, 0
        %v2015 = vsel %vm1688, %v1665, 0
        %2017 = vmatprep.subr.bf16.mxu0 0
        %2018 = vmatpush1.bf16.xpose.msra.mxu0 %v2015
        %2019 = vmatprep.subr.bf16.mxu0 0
        %2020 = vmatpush1.bf16.xpose.msra.mxu0 0
        %2021 = vmatprep.subr.bf16.mxu0 0
        %2022 = vmatpush1.bf16.xpose.msra.mxu0 0
        %2023 = vmatprep.subr.bf16.mxu0 0
        %2024 = vmatpush1.bf16.xpose.msra.mxu0 0
        %2025 = vmatprep.subr.bf16.mxu0 0
        %2026 = vmatpush1.bf16.xpose.msra.mxu0 0
        %2027 = vmatprep.subr.bf16.mxu0 0
        %2028 = vmatpush1.bf16.xpose.msra.mxu0 0
        %2029 = vmatprep.subr.bf16.mxu0 0
        %2030 = vmatpush1.bf16.xpose.msra.mxu0 0
        %2031 = vmatprep.subr.bf16.mxu0 0
        %2032 = vmatpush1.bf16.xpose.msra.mxu0 0
        %2033 = vmatprep.subr.bf16.mxu0 0
        %2034 = vmatpush1.bf16.xpose.msra.mxu0 0
        %2035 = vmatprep.subr.bf16.mxu0 0
        %2036 = vmatpush1.bf16.xpose.msra.mxu0 0
        %2037 = vmatprep.subr.bf16.mxu0 0
        %2038 = vmatpush1.bf16.xpose.msra.mxu0 0
        %2039 = vmatprep.subr.bf16.mxu0 0
        %2040 = vmatpush1.bf16.xpose.msra.mxu0 0
        %2041 = vmatprep.subr.bf16.mxu0 0
        %2042 = vmatpush1.bf16.xpose.msra.mxu0 0
        %2043 = vmatprep.subr.bf16.mxu0 0
        %2044 = vmatpush1.bf16.xpose.msra.mxu0 0
        %2045 = vmatprep.subr.bf16.mxu0 0
        %2046 = vmatpush1.bf16.xpose.msra.mxu0 0
        %2047 = vmatprep.subr.bf16.mxu0 0
        %2048 = vmatpush1.bf16.xpose.msra.mxu0 0
        %2049 = vmatprep.mubr.bf16.mxu0 0
        %2050 = vmatmul.mubr.bf16.gmra.mrb[0].mxu0 %v2012
        %v2051 = vpop.f32.mrb[0].mxu0
        %v2052 = vadd.f32 %v1685, %v2051
        %v2053 = vpop.f32.mrb[0].mxu0
        %v2054 = vpop.f32.mrb[0].mxu0
        %v2055 = vpop.f32.mrb[0].mxu0
        %2056 = vdwg.mxu0
        %v2057 = vsel %vm1688, %v1730, -inf
        %2058 = vmax.xlane.f32.xlu0 %v2057
        %v2059 = vpop.xlane.xlu0 %2058
        %v2060 = vsel %vm1688, %v1776, -inf
        %2061 = vmax.xlane.f32.xlu0 %v2060
        %v2062 = vpop.xlane.xlu0 %2061
        %v2063 = vsel %vm1688, %v1822, -inf
        %2064 = vmax.xlane.f32.xlu0 %v2063
        %v2065 = vpop.xlane.xlu0 %2064
        %v2066 = vsel %vm1688, %v1868, -inf
        %2067 = vmax.xlane.f32.xlu0 %v2066
        %v2068 = vpop.xlane.xlu0 %2067
        %v2069 = vsel %vm1688, %v1914, -inf
        %2070 = vmax.xlane.f32.xlu0 %v2069
        %v2071 = vpop.xlane.xlu0 %2070
        %v2072 = vsel %vm1688, %v1960, -inf
        %2073 = vmax.xlane.f32.xlu0 %v2072
        %v2074 = vpop.xlane.xlu0 %2073
        %v2075 = vsel %vm1688, %v2006, -inf
        %2076 = vmax.xlane.f32.xlu0 %v2075
        %v2077 = vpop.xlane.xlu0 %2076
        %v2078 = vsel %vm1688, %v2052, -inf
        %2079 = vmax.xlane.f32.xlu0 %v2078
        %v2080 = vpop.xlane.xlu0 %2079
        %v2081 = vmax.f32 %v2059, -1e+30
        %v2082 = vmax.f32 %v2062, -1e+30
        %v2083 = vmax.f32 %v2065, -1e+30
        %v2084 = vmax.f32 %v2068, -1e+30
        %v2085 = vmax.f32 %v2071, -1e+30
        %v2086 = vmax.f32 %v2074, -1e+30
        %v2087 = vmax.f32 %v2077, -1e+30
        %v2088 = vmax.f32 %v2080, -1e+30
        %v2089 = vsub.f32 -1e+30, %v2081
        %v2090 = vsub.f32 -1e+30, %v2082
        %v2091 = vsub.f32 -1e+30, %v2083
        %v2092 = vsub.f32 -1e+30, %v2084
        %v2093 = vsub.f32 -1e+30, %v2085
        %v2094 = vsub.f32 -1e+30, %v2086
        %v2095 = vsub.f32 -1e+30, %v2087
        %v2096 = vsub.f32 -1e+30, %v2088
        %v2097 = vmul.f32 %v2089, 1.442695
        %v2098 = vpow.pop %v2097
        %v2099 = vmul.f32 %v2090, 1.442695
        %v2100 = vpow.pop %v2099
        %v2101 = vmul.f32 %v2091, 1.442695
        %v2102 = vpow.pop %v2101
        %v2103 = vmul.f32 %v2092, 1.442695
        %v2104 = vpow.pop %v2103
        %v2105 = vmul.f32 %v2093, 1.442695
        %v2106 = vpow.pop %v2105
        %v2107 = vmul.f32 %v2094, 1.442695
        %v2108 = vpow.pop %v2107
        %v2109 = vmul.f32 %v2095, 1.442695
        %v2110 = vpow.pop %v2109
        %v2111 = vmul.f32 %v2096, 1.442695
        %v2112 = vpow.pop %v2111
        %v2113 = vsub.f32 %v1730, %v2081
        %v2114 = vsub.f32 %v1776, %v2082
        %v2115 = vsub.f32 %v1822, %v2083
        %v2116 = vsub.f32 %v1868, %v2084
        %v2117 = vsub.f32 %v1914, %v2085
        %v2118 = vsub.f32 %v1960, %v2086
        %v2119 = vsub.f32 %v2006, %v2087
        %v2120 = vsub.f32 %v2052, %v2088
        %v2121 = vmul.f32 %v2113, 1.442695
        %v2122 = vpow.pop %v2121
        %v2123 = vmul.f32 %v2114, 1.442695
        %v2124 = vpow.pop %v2123
        %v2125 = vmul.f32 %v2115, 1.442695
        %v2126 = vpow.pop %v2125
        %v2127 = vmul.f32 %v2116, 1.442695
        %v2128 = vpow.pop %v2127
        %v2129 = vmul.f32 %v2117, 1.442695
        %v2130 = vpow.pop %v2129
        %v2131 = vmul.f32 %v2118, 1.442695
        %v2132 = vpow.pop %v2131
        %v2133 = vmul.f32 %v2119, 1.442695
        %v2134 = vpow.pop %v2133
        %v2135 = vmul.f32 %v2120, 1.442695
        %v2136 = vpow.pop %v2135
        %v2137 = vmul.f32 %v2098, 0.0
        %v2138 = vmul.f32 %v2100, 0.0
        %v2139 = vmul.f32 %v2102, 0.0
        %v2140 = vmul.f32 %v2104, 0.0
        %v2141 = vmul.f32 %v2106, 0.0
        %v2142 = vmul.f32 %v2108, 0.0
        %v2143 = vmul.f32 %v2110, 0.0
        %v2144 = vmul.f32 %v2112, 0.0
        %v2145 = vsel %vm1688, %v2122, 0.0
        %2146 = vadd.xlane.f32.xlu0 %v2145
        %v2147 = vpop.xlane.xlu0 %2146
        %v2148 = vsel %vm1688, %v2124, 0.0
        %2149 = vadd.xlane.f32.xlu0 %v2148
        %v2150 = vpop.xlane.xlu0 %2149
        %v2151 = vsel %vm1688, %v2126, 0.0
        %2152 = vadd.xlane.f32.xlu0 %v2151
        %v2153 = vpop.xlane.xlu0 %2152
        %v2154 = vsel %vm1688, %v2128, 0.0
        %2155 = vadd.xlane.f32.xlu0 %v2154
        %v2156 = vpop.xlane.xlu0 %2155
        %v2157 = vsel %vm1688, %v2130, 0.0
        %2158 = vadd.xlane.f32.xlu0 %v2157
        %v2159 = vpop.xlane.xlu0 %2158
        %v2160 = vsel %vm1688, %v2132, 0.0
        %2161 = vadd.xlane.f32.xlu0 %v2160
        %v2162 = vpop.xlane.xlu0 %2161
        %v2163 = vsel %vm1688, %v2134, 0.0
        %2164 = vadd.xlane.f32.xlu0 %v2163
        %v2165 = vpop.xlane.xlu0 %2164
        %v2166 = vsel %vm1688, %v2136, 0.0
        %2167 = vadd.xlane.f32.xlu0 %v2166
        %v2168 = vpop.xlane.xlu0 %2167
        %v2169 = vadd.f32 %v2137, %v2147
        %v2170 = vadd.f32 %v2138, %v2150
        %v2171 = vadd.f32 %v2139, %v2153
        %v2172 = vadd.f32 %v2140, %v2156
        %v2173 = vadd.f32 %v2141, %v2159
        %v2174 = vadd.f32 %v2142, %v2162
        %v2175 = vadd.f32 %v2143, %v2165
        %v2176 = vadd.f32 %v2144, %v2168
        %v2177 = vpack.c.bf16 %v2122, %v2122
        %v2178 = vpack.c.bf16 %v2124, %v2124
        %v2179 = vpack.c.bf16 %v2126, %v2126
        %v2180 = vpack.c.bf16 %v2128, %v2128
        %v2181 = vpack.c.bf16 %v2130, %v2130
        %v2182 = vpack.c.bf16 %v2132, %v2132
        %v2183 = vpack.c.bf16 %v2134, %v2134
        %v2184 = vpack.c.bf16 %v2136, %v2136
        %v2186 = vsel %vm1688, %v2177, 0
        %vm2188 = vcmask 1043456
        %v2190 = vsel %vm2188, %v1666, 0
        %2192 = vmatprep.subr.bf16.mxu0 0
        %2193 = vmatpush1.bf16.msra.mxu0 %v2190
        %2194 = vmatprep.subr.bf16.mxu0 0
        %2195 = vmatpush1.bf16.msra.mxu0 0
        %2196 = vmatprep.subr.bf16.mxu0 0
        %2197 = vmatpush1.bf16.msra.mxu0 0
        %2198 = vmatprep.subr.bf16.mxu0 0
        %2199 = vmatpush1.bf16.msra.mxu0 0
        %2200 = vmatprep.subr.bf16.mxu0 0
        %2201 = vmatpush1.bf16.msra.mxu0 0
        %2202 = vmatprep.subr.bf16.mxu0 0
        %2203 = vmatpush1.bf16.msra.mxu0 0
        %2204 = vmatprep.subr.bf16.mxu0 0
        %2205 = vmatpush1.bf16.msra.mxu0 0
        %2206 = vmatprep.subr.bf16.mxu0 0
        %2207 = vmatpush1.bf16.msra.mxu0 0
        %2208 = vmatprep.subr.bf16.mxu0 0
        %2209 = vmatpush1.bf16.msra.mxu0 0
        %2210 = vmatprep.subr.bf16.mxu0 0
        %2211 = vmatpush1.bf16.msra.mxu0 0
        %2212 = vmatprep.subr.bf16.mxu0 0
        %2213 = vmatpush1.bf16.msra.mxu0 0
        %2214 = vmatprep.subr.bf16.mxu0 0
        %2215 = vmatpush1.bf16.msra.mxu0 0
        %2216 = vmatprep.subr.bf16.mxu0 0
        %2217 = vmatpush1.bf16.msra.mxu0 0
        %2218 = vmatprep.subr.bf16.mxu0 0
        %2219 = vmatpush1.bf16.msra.mxu0 0
        %2220 = vmatprep.subr.bf16.mxu0 0
        %2221 = vmatpush1.bf16.msra.mxu0 0
        %2222 = vmatprep.subr.bf16.mxu0 0
        %2223 = vmatpush1.bf16.msra.mxu0 0
        %2224 = vmatprep.mubr.bf16.mxu0 0
        %2225 = vmatmul.mubr.bf16.gmra.mrb[0].mxu0 %v2186
        %v2226 = vpop.f32.mrb[0].mxu0
        %v2227 = vadd.f32 0.0, %v2226
        %v2228 = vpop.f32.mrb[0].mxu0
        %v2229 = vpop.f32.mrb[0].mxu0
        %v2230 = vpop.f32.mrb[0].mxu0
        %2231 = vdwg.mxu0
        %v2233 = vsel %vm1688, %v2178, 0
        %v2236 = vsel %vm2188, %v1667, 0
        %2238 = vmatprep.subr.bf16.mxu0 0
        %2239 = vmatpush1.bf16.msra.mxu0 %v2236
        %2240 = vmatprep.subr.bf16.mxu0 0
        %2241 = vmatpush1.bf16.msra.mxu0 0
        %2242 = vmatprep.subr.bf16.mxu0 0
        %2243 = vmatpush1.bf16.msra.mxu0 0
        %2244 = vmatprep.subr.bf16.mxu0 0
        %2245 = vmatpush1.bf16.msra.mxu0 0
        %2246 = vmatprep.subr.bf16.mxu0 0
        %2247 = vmatpush1.bf16.msra.mxu0 0
        %2248 = vmatprep.subr.bf16.mxu0 0
        %2249 = vmatpush1.bf16.msra.mxu0 0
        %2250 = vmatprep.subr.bf16.mxu0 0
        %2251 = vmatpush1.bf16.msra.mxu0 0
        %2252 = vmatprep.subr.bf16.mxu0 0
        %2253 = vmatpush1.bf16.msra.mxu0 0
        %2254 = vmatprep.subr.bf16.mxu0 0
        %2255 = vmatpush1.bf16.msra.mxu0 0
        %2256 = vmatprep.subr.bf16.mxu0 0
        %2257 = vmatpush1.bf16.msra.mxu0 0
        %2258 = vmatprep.subr.bf16.mxu0 0
        %2259 = vmatpush1.bf16.msra.mxu0 0
        %2260 = vmatprep.subr.bf16.mxu0 0
        %2261 = vmatpush1.bf16.msra.mxu0 0
        %2262 = vmatprep.subr.bf16.mxu0 0
        %2263 = vmatpush1.bf16.msra.mxu0 0
        %2264 = vmatprep.subr.bf16.mxu0 0
        %2265 = vmatpush1.bf16.msra.mxu0 0
        %2266 = vmatprep.subr.bf16.mxu0 0
        %2267 = vmatpush1.bf16.msra.mxu0 0
        %2268 = vmatprep.subr.bf16.mxu0 0
        %2269 = vmatpush1.bf16.msra.mxu0 0
        %2270 = vmatprep.mubr.bf16.mxu0 0
        %2271 = vmatmul.mubr.bf16.gmra.mrb[0].mxu0 %v2233
        %v2272 = vpop.f32.mrb[0].mxu0
        %v2273 = vadd.f32 0.0, %v2272
        %v2274 = vpop.f32.mrb[0].mxu0
        %v2275 = vpop.f32.mrb[0].mxu0
        %v2276 = vpop.f32.mrb[0].mxu0
        %2277 = vdwg.mxu0
        %v2279 = vsel %vm1688, %v2179, 0
        %v2282 = vsel %vm2188, %v1668, 0
        %2284 = vmatprep.subr.bf16.mxu0 0
        %2285 = vmatpush1.bf16.msra.mxu0 %v2282
        %2286 = vmatprep.subr.bf16.mxu0 0
        %2287 = vmatpush1.bf16.msra.mxu0 0
        %2288 = vmatprep.subr.bf16.mxu0 0
        %2289 = vmatpush1.bf16.msra.mxu0 0
        %2290 = vmatprep.subr.bf16.mxu0 0
        %2291 = vmatpush1.bf16.msra.mxu0 0
        %2292 = vmatprep.subr.bf16.mxu0 0
        %2293 = vmatpush1.bf16.msra.mxu0 0
        %2294 = vmatprep.subr.bf16.mxu0 0
        %2295 = vmatpush1.bf16.msra.mxu0 0
        %2296 = vmatprep.subr.bf16.mxu0 0
        %2297 = vmatpush1.bf16.msra.mxu0 0
        %2298 = vmatprep.subr.bf16.mxu0 0
        %2299 = vmatpush1.bf16.msra.mxu0 0
        %2300 = vmatprep.subr.bf16.mxu0 0
        %2301 = vmatpush1.bf16.msra.mxu0 0
        %2302 = vmatprep.subr.bf16.mxu0 0
        %2303 = vmatpush1.bf16.msra.mxu0 0
        %2304 = vmatprep.subr.bf16.mxu0 0
        %2305 = vmatpush1.bf16.msra.mxu0 0
        %2306 = vmatprep.subr.bf16.mxu0 0
        %2307 = vmatpush1.bf16.msra.mxu0 0
        %2308 = vmatprep.subr.bf16.mxu0 0
        %2309 = vmatpush1.bf16.msra.mxu0 0
        %2310 = vmatprep.subr.bf16.mxu0 0
        %2311 = vmatpush1.bf16.msra.mxu0 0
        %2312 = vmatprep.subr.bf16.mxu0 0
        %2313 = vmatpush1.bf16.msra.mxu0 0
        %2314 = vmatprep.subr.bf16.mxu0 0
        %2315 = vmatpush1.bf16.msra.mxu0 0
        %2316 = vmatprep.mubr.bf16.mxu0 0
        %2317 = vmatmul.mubr.bf16.gmra.mrb[0].mxu0 %v2279
        %v2318 = vpop.f32.mrb[0].mxu0
        %v2319 = vadd.f32 0.0, %v2318
        %v2320 = vpop.f32.mrb[0].mxu0
        %v2321 = vpop.f32.mrb[0].mxu0
        %v2322 = vpop.f32.mrb[0].mxu0
        %2323 = vdwg.mxu0
        %v2325 = vsel %vm1688, %v2180, 0
        %v2328 = vsel %vm2188, %v1669, 0
        %2330 = vmatprep.subr.bf16.mxu0 0
        %2331 = vmatpush1.bf16.msra.mxu0 %v2328
        %2332 = vmatprep.subr.bf16.mxu0 0
        %2333 = vmatpush1.bf16.msra.mxu0 0
        %2334 = vmatprep.subr.bf16.mxu0 0
        %2335 = vmatpush1.bf16.msra.mxu0 0
        %2336 = vmatprep.subr.bf16.mxu0 0
        %2337 = vmatpush1.bf16.msra.mxu0 0
        %2338 = vmatprep.subr.bf16.mxu0 0
        %2339 = vmatpush1.bf16.msra.mxu0 0
        %2340 = vmatprep.subr.bf16.mxu0 0
        %2341 = vmatpush1.bf16.msra.mxu0 0
        %2342 = vmatprep.subr.bf16.mxu0 0
        %2343 = vmatpush1.bf16.msra.mxu0 0
        %2344 = vmatprep.subr.bf16.mxu0 0
        %2345 = vmatpush1.bf16.msra.mxu0 0
        %2346 = vmatprep.subr.bf16.mxu0 0
        %2347 = vmatpush1.bf16.msra.mxu0 0
        %2348 = vmatprep.subr.bf16.mxu0 0
        %2349 = vmatpush1.bf16.msra.mxu0 0
        %2350 = vmatprep.subr.bf16.mxu0 0
        %2351 = vmatpush1.bf16.msra.mxu0 0
        %2352 = vmatprep.subr.bf16.mxu0 0
        %2353 = vmatpush1.bf16.msra.mxu0 0
        %2354 = vmatprep.subr.bf16.mxu0 0
        %2355 = vmatpush1.bf16.msra.mxu0 0
        %2356 = vmatprep.subr.bf16.mxu0 0
        %2357 = vmatpush1.bf16.msra.mxu0 0
        %2358 = vmatprep.subr.bf16.mxu0 0
        %2359 = vmatpush1.bf16.msra.mxu0 0
        %2360 = vmatprep.subr.bf16.mxu0 0
        %2361 = vmatpush1.bf16.msra.mxu0 0
        %2362 = vmatprep.mubr.bf16.mxu0 0
        %2363 = vmatmul.mubr.bf16.gmra.mrb[0].mxu0 %v2325
        %v2364 = vpop.f32.mrb[0].mxu0
        %v2365 = vadd.f32 0.0, %v2364
        %v2366 = vpop.f32.mrb[0].mxu0
        %v2367 = vpop.f32.mrb[0].mxu0
        %v2368 = vpop.f32.mrb[0].mxu0
        %2369 = vdwg.mxu0
        %v2371 = vsel %vm1688, %v2181, 0
        %v2374 = vsel %vm2188, %v1670, 0
        %2376 = vmatprep.subr.bf16.mxu0 0
        %2377 = vmatpush1.bf16.msra.mxu0 %v2374
        %2378 = vmatprep.subr.bf16.mxu0 0
        %2379 = vmatpush1.bf16.msra.mxu0 0
        %2380 = vmatprep.subr.bf16.mxu0 0
        %2381 = vmatpush1.bf16.msra.mxu0 0
        %2382 = vmatprep.subr.bf16.mxu0 0
        %2383 = vmatpush1.bf16.msra.mxu0 0
        %2384 = vmatprep.subr.bf16.mxu0 0
        %2385 = vmatpush1.bf16.msra.mxu0 0
        %2386 = vmatprep.subr.bf16.mxu0 0
        %2387 = vmatpush1.bf16.msra.mxu0 0
        %2388 = vmatprep.subr.bf16.mxu0 0
        %2389 = vmatpush1.bf16.msra.mxu0 0
        %2390 = vmatprep.subr.bf16.mxu0 0
        %2391 = vmatpush1.bf16.msra.mxu0 0
        %2392 = vmatprep.subr.bf16.mxu0 0
        %2393 = vmatpush1.bf16.msra.mxu0 0
        %2394 = vmatprep.subr.bf16.mxu0 0
        %2395 = vmatpush1.bf16.msra.mxu0 0
        %2396 = vmatprep.subr.bf16.mxu0 0
        %2397 = vmatpush1.bf16.msra.mxu0 0
        %2398 = vmatprep.subr.bf16.mxu0 0
        %2399 = vmatpush1.bf16.msra.mxu0 0
        %2400 = vmatprep.subr.bf16.mxu0 0
        %2401 = vmatpush1.bf16.msra.mxu0 0
        %2402 = vmatprep.subr.bf16.mxu0 0
        %2403 = vmatpush1.bf16.msra.mxu0 0
        %2404 = vmatprep.subr.bf16.mxu0 0
        %2405 = vmatpush1.bf16.msra.mxu0 0
        %2406 = vmatprep.subr.bf16.mxu0 0
        %2407 = vmatpush1.bf16.msra.mxu0 0
        %2408 = vmatprep.mubr.bf16.mxu0 0
        %2409 = vmatmul.mubr.bf16.gmra.mrb[0].mxu0 %v2371
        %v2410 = vpop.f32.mrb[0].mxu0
        %v2411 = vadd.f32 0.0, %v2410
        %v2412 = vpop.f32.mrb[0].mxu0
        %v2413 = vpop.f32.mrb[0].mxu0
        %v2414 = vpop.f32.mrb[0].mxu0
        %2415 = vdwg.mxu0
        %v2417 = vsel %vm1688, %v2182, 0
        %v2420 = vsel %vm2188, %v1671, 0
        %2422 = vmatprep.subr.bf16.mxu0 0
        %2423 = vmatpush1.bf16.msra.mxu0 %v2420
        %2424 = vmatprep.subr.bf16.mxu0 0
        %2425 = vmatpush1.bf16.msra.mxu0 0
        %2426 = vmatprep.subr.bf16.mxu0 0
        %2427 = vmatpush1.bf16.msra.mxu0 0
        %2428 = vmatprep.subr.bf16.mxu0 0
        %2429 = vmatpush1.bf16.msra.mxu0 0
        %2430 = vmatprep.subr.bf16.mxu0 0
        %2431 = vmatpush1.bf16.msra.mxu0 0
        %2432 = vmatprep.subr.bf16.mxu0 0
        %2433 = vmatpush1.bf16.msra.mxu0 0
        %2434 = vmatprep.subr.bf16.mxu0 0
        %2435 = vmatpush1.bf16.msra.mxu0 0
        %2436 = vmatprep.subr.bf16.mxu0 0
        %2437 = vmatpush1.bf16.msra.mxu0 0
        %2438 = vmatprep.subr.bf16.mxu0 0
        %2439 = vmatpush1.bf16.msra.mxu0 0
        %2440 = vmatprep.subr.bf16.mxu0 0
        %2441 = vmatpush1.bf16.msra.mxu0 0
        %2442 = vmatprep.subr.bf16.mxu0 0
        %2443 = vmatpush1.bf16.msra.mxu0 0
        %2444 = vmatprep.subr.bf16.mxu0 0
        %2445 = vmatpush1.bf16.msra.mxu0 0
        %2446 = vmatprep.subr.bf16.mxu0 0
        %2447 = vmatpush1.bf16.msra.mxu0 0
        %2448 = vmatprep.subr.bf16.mxu0 0
        %2449 = vmatpush1.bf16.msra.mxu0 0
        %2450 = vmatprep.subr.bf16.mxu0 0
        %2451 = vmatpush1.bf16.msra.mxu0 0
        %2452 = vmatprep.subr.bf16.mxu0 0
        %2453 = vmatpush1.bf16.msra.mxu0 0
        %2454 = vmatprep.mubr.bf16.mxu0 0
        %2455 = vmatmul.mubr.bf16.gmra.mrb[0].mxu0 %v2417
        %v2456 = vpop.f32.mrb[0].mxu0
        %v2457 = vadd.f32 0.0, %v2456
        %v2458 = vpop.f32.mrb[0].mxu0
        %v2459 = vpop.f32.mrb[0].mxu0
        %v2460 = vpop.f32.mrb[0].mxu0
        %2461 = vdwg.mxu0
        %v2463 = vsel %vm1688, %v2183, 0
        %v2466 = vsel %vm2188, %v1672, 0
        %2468 = vmatprep.subr.bf16.mxu0 0
        %2469 = vmatpush1.bf16.msra.mxu0 %v2466
        %2470 = vmatprep.subr.bf16.mxu0 0
        %2471 = vmatpush1.bf16.msra.mxu0 0
        %2472 = vmatprep.subr.bf16.mxu0 0
        %2473 = vmatpush1.bf16.msra.mxu0 0
        %2474 = vmatprep.subr.bf16.mxu0 0
        %2475 = vmatpush1.bf16.msra.mxu0 0
        %2476 = vmatprep.subr.bf16.mxu0 0
        %2477 = vmatpush1.bf16.msra.mxu0 0
        %2478 = vmatprep.subr.bf16.mxu0 0
        %2479 = vmatpush1.bf16.msra.mxu0 0
        %2480 = vmatprep.subr.bf16.mxu0 0
        %2481 = vmatpush1.bf16.msra.mxu0 0
        %2482 = vmatprep.subr.bf16.mxu0 0
        %2483 = vmatpush1.bf16.msra.mxu0 0
        %2484 = vmatprep.subr.bf16.mxu0 0
        %2485 = vmatpush1.bf16.msra.mxu0 0
        %2486 = vmatprep.subr.bf16.mxu0 0
        %2487 = vmatpush1.bf16.msra.mxu0 0
        %2488 = vmatprep.subr.bf16.mxu0 0
        %2489 = vmatpush1.bf16.msra.mxu0 0
        %2490 = vmatprep.subr.bf16.mxu0 0
        %2491 = vmatpush1.bf16.msra.mxu0 0
        %2492 = vmatprep.subr.bf16.mxu0 0
        %2493 = vmatpush1.bf16.msra.mxu0 0
        %2494 = vmatprep.subr.bf16.mxu0 0
        %2495 = vmatpush1.bf16.msra.mxu0 0
        %2496 = vmatprep.subr.bf16.mxu0 0
        %2497 = vmatpush1.bf16.msra.mxu0 0
        %2498 = vmatprep.subr.bf16.mxu0 0
        %2499 = vmatpush1.bf16.msra.mxu0 0
        %2500 = vmatprep.mubr.bf16.mxu0 0
        %2501 = vmatmul.mubr.bf16.gmra.mrb[0].mxu0 %v2463
        %v2502 = vpop.f32.mrb[0].mxu0
        %v2503 = vadd.f32 0.0, %v2502
        %v2504 = vpop.f32.mrb[0].mxu0
        %v2505 = vpop.f32.mrb[0].mxu0
        %v2506 = vpop.f32.mrb[0].mxu0
        %2507 = vdwg.mxu0
        %v2509 = vsel %vm1688, %v2184, 0
        %v2512 = vsel %vm2188, %v1673, 0
        %2514 = vmatprep.subr.bf16.mxu0 0
        %2515 = vmatpush1.bf16.msra.mxu0 %v2512
        %2516 = vmatprep.subr.bf16.mxu0 0
        %2517 = vmatpush1.bf16.msra.mxu0 0
        %2518 = vmatprep.subr.bf16.mxu0 0
        %2519 = vmatpush1.bf16.msra.mxu0 0
        %2520 = vmatprep.subr.bf16.mxu0 0
        %2521 = vmatpush1.bf16.msra.mxu0 0
        %2522 = vmatprep.subr.bf16.mxu0 0
        %2523 = vmatpush1.bf16.msra.mxu0 0
        %2524 = vmatprep.subr.bf16.mxu0 0
        %2525 = vmatpush1.bf16.msra.mxu0 0
        %2526 = vmatprep.subr.bf16.mxu0 0
        %2527 = vmatpush1.bf16.msra.mxu0 0
        %2528 = vmatprep.subr.bf16.mxu0 0
        %2529 = vmatpush1.bf16.msra.mxu0 0
        %2530 = vmatprep.subr.bf16.mxu0 0
        %2531 = vmatpush1.bf16.msra.mxu0 0
        %2532 = vmatprep.subr.bf16.mxu0 0
        %2533 = vmatpush1.bf16.msra.mxu0 0
        %2534 = vmatprep.subr.bf16.mxu0 0
        %2535 = vmatpush1.bf16.msra.mxu0 0
        %2536 = vmatprep.subr.bf16.mxu0 0
        %2537 = vmatpush1.bf16.msra.mxu0 0
        %2538 = vmatprep.subr.bf16.mxu0 0
        %2539 = vmatpush1.bf16.msra.mxu0 0
        %2540 = vmatprep.subr.bf16.mxu0 0
        %2541 = vmatpush1.bf16.msra.mxu0 0
        %2542 = vmatprep.subr.bf16.mxu0 0
        %2543 = vmatpush1.bf16.msra.mxu0 0
        %2544 = vmatprep.subr.bf16.mxu0 0
        %2545 = vmatpush1.bf16.msra.mxu0 0
        %2546 = vmatprep.mubr.bf16.mxu0 0
        %2547 = vmatmul.mubr.bf16.gmra.mrb[0].mxu0 %v2509
        %v2548 = vpop.f32.mrb[0].mxu0
        %v2549 = vadd.f32 0.0, %v2548
        %v2550 = vpop.f32.mrb[0].mxu0
        %v2551 = vpop.f32.mrb[0].mxu0
        %v2552 = vpop.f32.mrb[0].mxu0
        %2553 = vdwg.mxu0
        %v2554 = vadd.f32 %v2137, %v2227
        %v2555 = vadd.f32 %v2138, %v2273
        %v2556 = vadd.f32 %v2139, %v2319
        %v2557 = vadd.f32 %v2140, %v2365
        %v2558 = vadd.f32 %v2141, %v2411
        %v2559 = vadd.f32 %v2142, %v2457
        %v2560 = vadd.f32 %v2143, %v2503
        %v2561 = vadd.f32 %v2144, %v2549
        %v2562 = vrcp.pop %v2169
        %v2563 = vrcp.pop %v2170
        %v2564 = vrcp.pop %v2171
        %v2565 = vrcp.pop %v2172
        %v2566 = vrcp.pop %v2173
        %v2567 = vrcp.pop %v2174
        %v2568 = vrcp.pop %v2175
        %v2569 = vrcp.pop %v2176
        %v2570 = vmul.f32 %v2554, %v2562
        %v2571 = vmul.f32 %v2555, %v2563
        %v2572 = vmul.f32 %v2556, %v2564
        %v2573 = vmul.f32 %v2557, %v2565
        %v2574 = vmul.f32 %v2558, %v2566
        %v2575 = vmul.f32 %v2559, %v2567
        %v2576 = vmul.f32 %v2560, %v2568
        %v2577 = vmul.f32 %v2561, %v2569
        %v2578 = vcombine.low %v2570, %v2572
        %v2579 = vcombine.high %v2570, %v2572
        %v2581 = vunpack.c.l.s4 1983009808
        %v2582 = vunpack.c.0.s8 %v2581
        %v2583 = vlaneseq
        %v2584 = vshrl.u32 %v2583, 7
        %v2585 = vsub.s32 %v2582, %v2584
        %v2586 = vrot.slane %v2578, %v2585
        %v2588 = vunpack.c.l.s4 1983009808
        %v2589 = vunpack.c.0.s8 %v2588
        %v2590 = vlaneseq
        %v2591 = vshrl.u32 %v2590, 7
        %v2592 = vsub.s32 %v2589, %v2591
        %v2593 = vrot.slane %v2579, %v2592
        %v2594 = vcombine.low %v2571, %v2573
        %v2595 = vcombine.high %v2571, %v2573
        %v2597 = vunpack.c.l.s4 1983009808
        %v2598 = vunpack.c.0.s8 %v2597
        %v2599 = vlaneseq
        %v2600 = vshrl.u32 %v2599, 7
        %v2601 = vsub.s32 %v2598, %v2600
        %v2602 = vrot.slane %v2594, %v2601
        %v2604 = vunpack.c.l.s4 1983009808
        %v2605 = vunpack.c.0.s8 %v2604
        %v2606 = vlaneseq
        %v2607 = vshrl.u32 %v2606, 7
        %v2608 = vsub.s32 %v2605, %v2607
        %v2609 = vrot.slane %v2595, %v2608
        %v2610 = vcombine.low %v2586, %v2602
        %v2611 = vcombine.high %v2586, %v2602
        %v2613 = vunpack.c.l.s4 1934713408
        %v2614 = vunpack.c.0.s8 %v2613
        %v2615 = vlaneseq
        %v2616 = vshrl.u32 %v2615, 7
        %v2617 = vsub.s32 %v2614, %v2616
        %v2618 = vrot.slane %v2610, %v2617
        %v2620 = vunpack.c.l.s4 1934713408
        %v2621 = vunpack.c.0.s8 %v2620
        %v2622 = vlaneseq
        %v2623 = vshrl.u32 %v2622, 7
        %v2624 = vsub.s32 %v2621, %v2623
        %v2625 = vrot.slane %v2611, %v2624
        %v2626 = vcombine.low %v2593, %v2609
        %v2627 = vcombine.high %v2593, %v2609
        %v2629 = vunpack.c.l.s4 1934713408
        %v2630 = vunpack.c.0.s8 %v2629
        %v2631 = vlaneseq
        %v2632 = vshrl.u32 %v2631, 7
        %v2633 = vsub.s32 %v2630, %v2632
        %v2634 = vrot.slane %v2626, %v2633
        %v2636 = vunpack.c.l.s4 1934713408
        %v2637 = vunpack.c.0.s8 %v2636
        %v2638 = vlaneseq
        %v2639 = vshrl.u32 %v2638, 7
        %v2640 = vsub.s32 %v2637, %v2639
        %v2641 = vrot.slane %v2627, %v2640
        %v2642 = vcombine.high %v2618, 0.0
        %v2643 = vcombine.high %v2625, 0.0
        %v2644 = vcombine.high %v2634, 0.0
        %v2645 = vcombine.high %v2641, 0.0
        %v2646 = vcombine.low %v2574, %v2576
        %v2647 = vcombine.high %v2574, %v2576
        %v2649 = vunpack.c.l.s4 1983009808
        %v2650 = vunpack.c.0.s8 %v2649
        %v2651 = vlaneseq
        %v2652 = vshrl.u32 %v2651, 7
        %v2653 = vsub.s32 %v2650, %v2652
        %v2654 = vrot.slane %v2646, %v2653
        %v2656 = vunpack.c.l.s4 1983009808
        %v2657 = vunpack.c.0.s8 %v2656
        %v2658 = vlaneseq
        %v2659 = vshrl.u32 %v2658, 7
        %v2660 = vsub.s32 %v2657, %v2659
        %v2661 = vrot.slane %v2647, %v2660
        %v2662 = vcombine.low %v2575, %v2577
        %v2663 = vcombine.high %v2575, %v2577
        %v2665 = vunpack.c.l.s4 1983009808
        %v2666 = vunpack.c.0.s8 %v2665
        %v2667 = vlaneseq
        %v2668 = vshrl.u32 %v2667, 7
        %v2669 = vsub.s32 %v2666, %v2668
        %v2670 = vrot.slane %v2662, %v2669
        %v2672 = vunpack.c.l.s4 1983009808
        %v2673 = vunpack.c.0.s8 %v2672
        %v2674 = vlaneseq
        %v2675 = vshrl.u32 %v2674, 7
        %v2676 = vsub.s32 %v2673, %v2675
        %v2677 = vrot.slane %v2663, %v2676
        %v2678 = vcombine.low %v2654, %v2670
        %v2679 = vcombine.high %v2654, %v2670
        %v2681 = vunpack.c.l.s4 1934713408
        %v2682 = vunpack.c.0.s8 %v2681
        %v2683 = vlaneseq
        %v2684 = vshrl.u32 %v2683, 7
        %v2685 = vsub.s32 %v2682, %v2684
        %v2686 = vrot.slane %v2678, %v2685
        %v2688 = vunpack.c.l.s4 1934713408
        %v2689 = vunpack.c.0.s8 %v2688
        %v2690 = vlaneseq
        %v2691 = vshrl.u32 %v2690, 7
        %v2692 = vsub.s32 %v2689, %v2691
        %v2693 = vrot.slane %v2679, %v2692
        %v2694 = vcombine.low %v2661, %v2677
        %v2695 = vcombine.high %v2661, %v2677
        %v2697 = vunpack.c.l.s4 1934713408
        %v2698 = vunpack.c.0.s8 %v2697
        %v2699 = vlaneseq
        %v2700 = vshrl.u32 %v2699, 7
        %v2701 = vsub.s32 %v2698, %v2700
        %v2702 = vrot.slane %v2694, %v2701
        %v2704 = vunpack.c.l.s4 1934713408
        %v2705 = vunpack.c.0.s8 %v2704
        %v2706 = vlaneseq
        %v2707 = vshrl.u32 %v2706, 7
        %v2708 = vsub.s32 %v2705, %v2707
        %v2709 = vrot.slane %v2695, %v2708
        %v2710 = vcombine.high %v2686, 0.0
        %v2711 = vcombine.high %v2693, 0.0
        %v2712 = vcombine.high %v2702, 0.0
        %v2713 = vcombine.high %v2709, 0.0
        %v2714 = vcombine.low %v2618, %v2625
        %v2716 = vunpack.c.l.s4 1983009808
        %v2717 = vunpack.c.0.s8 %v2716
        %v2718 = vlaneseq
        %v2719 = vshrl.u32 %v2718, 7
        %v2720 = vsub.s32 %v2717, %v2719
        %v2721 = vrot.slane %v2714, %v2720
        %v2722 = vcombine.low %v2642, %v2643
        %v2724 = vunpack.c.l.s4 1983009808
        %v2725 = vunpack.c.0.s8 %v2724
        %v2726 = vlaneseq
        %v2727 = vshrl.u32 %v2726, 7
        %v2728 = vsub.s32 %v2725, %v2727
        %v2729 = vrot.slane %v2722, %v2728
        %v2730 = vcombine.low %v2634, %v2641
        %v2732 = vunpack.c.l.s4 1983009808
        %v2733 = vunpack.c.0.s8 %v2732
        %v2734 = vlaneseq
        %v2735 = vshrl.u32 %v2734, 7
        %v2736 = vsub.s32 %v2733, %v2735
        %v2737 = vrot.slane %v2730, %v2736
        %v2738 = vcombine.low %v2644, %v2645
        %v2740 = vunpack.c.l.s4 1983009808
        %v2741 = vunpack.c.0.s8 %v2740
        %v2742 = vlaneseq
        %v2743 = vshrl.u32 %v2742, 7
        %v2744 = vsub.s32 %v2741, %v2743
        %v2745 = vrot.slane %v2738, %v2744
        %v2746 = vcombine.low %v2721, %v2729
        %v2747 = vcombine.high %v2721, %v2729
        %v2749 = vunpack.c.l.s4 1934713408
        %v2750 = vunpack.c.0.s8 %v2749
        %v2751 = vlaneseq
        %v2752 = vshrl.u32 %v2751, 7
        %v2753 = vsub.s32 %v2750, %v2752
        %v2754 = vrot.slane %v2746, %v2753
        %v2756 = vunpack.c.l.s4 1934713408
        %v2757 = vunpack.c.0.s8 %v2756
        %v2758 = vlaneseq
        %v2759 = vshrl.u32 %v2758, 7
        %v2760 = vsub.s32 %v2757, %v2759
        %v2761 = vrot.slane %v2747, %v2760
        %v2762 = vcombine.low %v2737, %v2745
        %v2763 = vcombine.high %v2737, %v2745
        %v2765 = vunpack.c.l.s4 1934713408
        %v2766 = vunpack.c.0.s8 %v2765
        %v2767 = vlaneseq
        %v2768 = vshrl.u32 %v2767, 7
        %v2769 = vsub.s32 %v2766, %v2768
        %v2770 = vrot.slane %v2762, %v2769
        %v2772 = vunpack.c.l.s4 1934713408
        %v2773 = vunpack.c.0.s8 %v2772
        %v2774 = vlaneseq
        %v2775 = vshrl.u32 %v2774, 7
        %v2776 = vsub.s32 %v2773, %v2775
        %v2777 = vrot.slane %v2763, %v2776
        %v2778 = vcombine.low %v2754, %v2770
        %v2779 = vcombine.high %v2754, %v2770
        %v2780 = vcombine.low %v2761, %v2777
        %v2781 = vcombine.high %v2761, %v2777
        %v2782 = vcombine.low %v2686, %v2693
        %v2784 = vunpack.c.l.s4 1983009808
        %v2785 = vunpack.c.0.s8 %v2784
        %v2786 = vlaneseq
        %v2787 = vshrl.u32 %v2786, 7
        %v2788 = vsub.s32 %v2785, %v2787
        %v2789 = vrot.slane %v2782, %v2788
        %v2790 = vcombine.low %v2710, %v2711
        %v2792 = vunpack.c.l.s4 1983009808
        %v2793 = vunpack.c.0.s8 %v2792
        %v2794 = vlaneseq
        %v2795 = vshrl.u32 %v2794, 7
        %v2796 = vsub.s32 %v2793, %v2795
        %v2797 = vrot.slane %v2790, %v2796
        %v2798 = vcombine.low %v2702, %v2709
        %v2800 = vunpack.c.l.s4 1983009808
        %v2801 = vunpack.c.0.s8 %v2800
        %v2802 = vlaneseq
        %v2803 = vshrl.u32 %v2802, 7
        %v2804 = vsub.s32 %v2801, %v2803
        %v2805 = vrot.slane %v2798, %v2804
        %v2806 = vcombine.low %v2712, %v2713
        %v2808 = vunpack.c.l.s4 1983009808
        %v2809 = vunpack.c.0.s8 %v2808
        %v2810 = vlaneseq
        %v2811 = vshrl.u32 %v2810, 7
        %v2812 = vsub.s32 %v2809, %v2811
        %v2813 = vrot.slane %v2806, %v2812
        %v2814 = vcombine.low %v2789, %v2797
        %v2815 = vcombine.high %v2789, %v2797
        %v2817 = vunpack.c.l.s4 1934713408
        %v2818 = vunpack.c.0.s8 %v2817
        %v2819 = vlaneseq
        %v2820 = vshrl.u32 %v2819, 7
        %v2821 = vsub.s32 %v2818, %v2820
        %v2822 = vrot.slane %v2814, %v2821
        %v2824 = vunpack.c.l.s4 1934713408
        %v2825 = vunpack.c.0.s8 %v2824
        %v2826 = vlaneseq
        %v2827 = vshrl.u32 %v2826, 7
        %v2828 = vsub.s32 %v2825, %v2827
        %v2829 = vrot.slane %v2815, %v2828
        %v2830 = vcombine.low %v2805, %v2813
        %v2831 = vcombine.high %v2805, %v2813
        %v2833 = vunpack.c.l.s4 1934713408
        %v2834 = vunpack.c.0.s8 %v2833
        %v2835 = vlaneseq
        %v2836 = vshrl.u32 %v2835, 7
        %v2837 = vsub.s32 %v2834, %v2836
        %v2838 = vrot.slane %v2830, %v2837
        %v2840 = vunpack.c.l.s4 1934713408
        %v2841 = vunpack.c.0.s8 %v2840
        %v2842 = vlaneseq
        %v2843 = vshrl.u32 %v2842, 7
        %v2844 = vsub.s32 %v2841, %v2843
        %v2845 = vrot.slane %v2831, %v2844
        %v2846 = vcombine.low %v2822, %v2838
        %v2847 = vcombine.high %v2822, %v2838
        %v2848 = vcombine.low %v2829, %v2845
        %v2849 = vcombine.high %v2829, %v2845
        %2852 = vrot.lane.b32.xlu0 %v2779, 8
        %v2853 = vpop.permute.xlu0 %2852
        %2854 = vrot.lane.b32.xlu0 %v2847, 8
        %v2855 = vpop.permute.xlu0 %2854
        %2860 = vrot.lane.b32.xlu0 %v2780, 16
        %v2861 = vpop.permute.xlu0 %2860
        %2862 = vrot.lane.b32.xlu0 %v2848, 16
        %v2863 = vpop.permute.xlu0 %2862
        %2868 = vrot.lane.b32.xlu0 %v2781, 24
        %v2869 = vpop.permute.xlu0 %2868
        %2870 = vrot.lane.b32.xlu0 %v2849, 24
        %v2871 = vpop.permute.xlu0 %2870
        %v2874 = vsel %vm1688, %v2778, %v2853
        %v2875 = vsel %vm1688, %v2846, %v2855
        %vm2876 = vcmask 130048
        %v2877 = vsel %vm2876, %v2874, %v2861
        %v2878 = vsel %vm2876, %v2875, %v2863
        %vm2879 = vcmask 195584
        %v2880 = vsel %vm2879, %v2877, %v2869
        %v2881 = vsel %vm2879, %v2878, %v2871
        %v2882 = vpack.c.bf16 %v2881, %v2880
        %v2883 = vld [vmem:[%s652] sm:$0xf]
        %v2884 = vld [vmem:[%s652 + $0x4] sm:$0xf]
        %v2885 = vld [vmem:[%s652 + $0x8] sm:$0xf]
        %v2886 = vld [vmem:[%s652 + $0xc] sm:$0xf]
        %v2887 = vld [vmem:[%s655] sm:$0x1]
        %v2889 = vlaneseq
        %v2890 = vshrl.u32 %v2889, 7
        %v2891 = vsub.s32 0, %v2890
        %v2892 = vrot.slane %v2887, %v2891
        %v2898 = vunpack.c.l.b16 %v2883
        %v2899 = vunpack.c.l.b16 %v2884
        %v2900 = vunpack.c.l.b16 %v2885
        %v2901 = vunpack.c.l.b16 %v2886
        %v2902 = vpack.c.b16 %v2899, %v2898
        %v2903 = vpack.c.b16 %v2901, %v2900
        %v2907 = vsel %vm721, %v2882, 0
        %2909 = vmatprep.subr.bf16.mxu0 0
        %2910 = vmatpush1.bf16.msra.mxu0 %v2902
        %2911 = vmatprep.subr.bf16.mxu0 0
        %2912 = vmatpush1.bf16.msra.mxu0 %v2903
        %2913 = vmatprep.subr.bf16.mxu0 0
        %2914 = vmatpush1.bf16.msra.mxu0 0
        %2915 = vmatprep.subr.bf16.mxu0 0
        %2916 = vmatpush1.bf16.msra.mxu0 0
        %2917 = vmatprep.subr.bf16.mxu0 0
        %2918 = vmatpush1.bf16.msra.mxu0 0
        %2919 = vmatprep.subr.bf16.mxu0 0
        %2920 = vmatpush1.bf16.msra.mxu0 0
        %2921 = vmatprep.subr.bf16.mxu0 0
        %2922 = vmatpush1.bf16.msra.mxu0 0
        %2923 = vmatprep.subr.bf16.mxu0 0
        %2924 = vmatpush1.bf16.msra.mxu0 0
        %2925 = vmatprep.subr.bf16.mxu0 0
        %2926 = vmatpush1.bf16.msra.mxu0 0
        %2927 = vmatprep.subr.bf16.mxu0 0
        %2928 = vmatpush1.bf16.msra.mxu0 0
        %2929 = vmatprep.subr.bf16.mxu0 0
        %2930 = vmatpush1.bf16.msra.mxu0 0
        %2931 = vmatprep.subr.bf16.mxu0 0
        %2932 = vmatpush1.bf16.msra.mxu0 0
        %2933 = vmatprep.subr.bf16.mxu0 0
        %2934 = vmatpush1.bf16.msra.mxu0 0
        %2935 = vmatprep.subr.bf16.mxu0 0
        %2936 = vmatpush1.bf16.msra.mxu0 0
        %2937 = vmatprep.subr.bf16.mxu0 0
        %2938 = vmatpush1.bf16.msra.mxu0 0
        %2939 = vmatprep.subr.bf16.mxu0 0
        %2940 = vmatpush1.bf16.msra.mxu0 0
        %2941 = vmatprep.mubr.bf16.mxu0 0
        %2942 = vmatmul.mubr.bf16.gmra.mrb[0].mxu0 %v2907
        %v2943 = vpop.f32.mrb[0].mxu0
        %v2944 = vadd.f32 %v2892, %v2943
        %v2945 = vpop.f32.mrb[0].mxu0
        %v2946 = vpop.f32.mrb[0].mxu0
        %v2947 = vadd.f32 %v2892, %v2946
        %v2948 = vpop.f32.mrb[0].mxu0
        %2949 = vdwg.mxu0
        %v2950 = vadd.f32 %v695, %v2944
        %v2951 = vadd.f32 %v696, %v2947
        %v2952 = vld [vmem:[%s658] sm:$0x1]
        %v2953 = vld [vmem:[%s661] sm:$0x1]
        %v2954 = vsel %vm721, %v2950, 0.0
        %2955 = vadd.xlane.f32.xlu0 %v2954
        %v2956 = vpop.xlane.xlu0 %2955
        %v2957 = vsel %vm721, %v2951, 0.0
        %2958 = vadd.xlane.f32.xlu0 %v2957
        %v2959 = vpop.xlane.xlu0 %2958
        %v2960 = vrcp.pop 32.0
        %v2961 = vmul.f32 %v2956, %v2960
        %v2962 = vmul.f32 %v2959, %v2960
        %v2963 = vsub.f32 %v2950, %v2961
        %v2964 = vsub.f32 %v2951, %v2962
        %v2965 = vmul.f32 %v2963, %v2963
        %v2966 = vmul.f32 %v2964, %v2964
        %v2967 = vsel %vm721, %v2965, 0.0
        %2968 = vadd.xlane.f32.xlu0 %v2967
        %v2969 = vpop.xlane.xlu0 %2968
        %v2970 = vsel %vm721, %v2966, 0.0
        %2971 = vadd.xlane.f32.xlu0 %v2970
        %v2972 = vpop.xlane.xlu0 %2971
        %v2973 = vmul.f32 %v2969, %v2960
        %v2974 = vmul.f32 %v2972, %v2960
        %v2975 = vadd.f32 %v2973, 1e-12
        %v2976 = vadd.f32 %v2974, 1e-12
        %v2977 = vrsqrt.pop %v2975
        %v2978 = vrsqrt.pop %v2976
        %v2979 = vmul.f32 %v2963, %v2977
        %v2980 = vmul.f32 %v2964, %v2978
        %v2982 = vlaneseq
        %v2983 = vshrl.u32 %v2982, 7
        %v2984 = vsub.s32 0, %v2983
        %v2985 = vrot.slane %v2952, %v2984
        %v2987 = vmul.f32 %v2979, %v2985
        %v2988 = vmul.f32 %v2980, %v2985
        %v2990 = vlaneseq
        %v2991 = vshrl.u32 %v2990, 7
        %v2992 = vsub.s32 0, %v2991
        %v2993 = vrot.slane %v2953, %v2992
        %v2995 = vadd.f32 %v2987, %v2993
        %v2996 = vadd.f32 %v2988, %v2993
        %v2997 = vpack.c.bf16 %v2996, %v2995
        %v2998 = vld [vmem:[%s666] sm:$0xf]
        %v2999 = vld [vmem:[%s666 + $0x4] sm:$0xf]
        %v3000 = vld [vmem:[%s666 + $0x8] sm:$0xf]
        %v3001 = vld [vmem:[%s666 + $0xc] sm:$0xf]
        %v3002 = vld [vmem:[%s669] sm:$0x1]
        %v3004 = vlaneseq
        %v3005 = vshrl.u32 %v3004, 7
        %v3006 = vsub.s32 0, %v3005
        %v3007 = vrot.slane %v3002, %v3006
        %v3013 = vunpack.c.l.b16 %v2998
        %v3014 = vunpack.c.l.b16 %v2999
        %v3015 = vunpack.c.l.b16 %v3000
        %v3016 = vunpack.c.l.b16 %v3001
        %v3017 = vpack.c.b16 %v3014, %v3013
        %v3018 = vpack.c.b16 %v3016, %v3015
        %v3022 = vsel %vm721, %v2997, 0
        %3024 = vmatprep.subr.bf16.mxu0 0
        %3025 = vmatpush1.bf16.msra.mxu0 %v3017
        %3026 = vmatprep.subr.bf16.mxu0 0
        %3027 = vmatpush1.bf16.msra.mxu0 %v3018
        %3028 = vmatprep.subr.bf16.mxu0 0
        %3029 = vmatpush1.bf16.msra.mxu0 0
        %3030 = vmatprep.subr.bf16.mxu0 0
        %3031 = vmatpush1.bf16.msra.mxu0 0
        %3032 = vmatprep.subr.bf16.mxu0 0
        %3033 = vmatpush1.bf16.msra.mxu0 0
        %3034 = vmatprep.subr.bf16.mxu0 0
        %3035 = vmatpush1.bf16.msra.mxu0 0
        %3036 = vmatprep.subr.bf16.mxu0 0
        %3037 = vmatpush1.bf16.msra.mxu0 0
        %3038 = vmatprep.subr.bf16.mxu0 0
        %3039 = vmatpush1.bf16.msra.mxu0 0
        %3040 = vmatprep.subr.bf16.mxu0 0
        %3041 = vmatpush1.bf16.msra.mxu0 0
        %3042 = vmatprep.subr.bf16.mxu0 0
        %3043 = vmatpush1.bf16.msra.mxu0 0
        %3044 = vmatprep.subr.bf16.mxu0 0
        %3045 = vmatpush1.bf16.msra.mxu0 0
        %3046 = vmatprep.subr.bf16.mxu0 0
        %3047 = vmatpush1.bf16.msra.mxu0 0
        %3048 = vmatprep.subr.bf16.mxu0 0
        %3049 = vmatpush1.bf16.msra.mxu0 0
        %3050 = vmatprep.subr.bf16.mxu0 0
        %3051 = vmatpush1.bf16.msra.mxu0 0
        %3052 = vmatprep.subr.bf16.mxu0 0
        %3053 = vmatpush1.bf16.msra.mxu0 0
        %3054 = vmatprep.subr.bf16.mxu0 0
        %3055 = vmatpush1.bf16.msra.mxu0 0
        %3056 = vmatprep.mubr.bf16.mxu0 0
        %3057 = vmatmul.mubr.bf16.gmra.mrb[0].mxu0 %v3022
        %v3058 = vpop.f32.mrb[0].mxu0
        %v3059 = vadd.f32 %v3007, %v3058
        %v3060 = vpop.f32.mrb[0].mxu0
        %v3061 = vpop.f32.mrb[0].mxu0
        %v3062 = vadd.f32 %v3007, %v3061
        %v3063 = vpop.f32.mrb[0].mxu0
        %3064 = vdwg.mxu0
        %v3065 = vmul.f32 %v3059, 0.5
        %v3066 = vmul.f32 %v3062, 0.5
        %v3067 = vmul.f32 %v3059, 0.044715
        %v3068 = vmul.f32 %v3062, 0.044715
        %v3069 = vmul.f32 %v3067, %v3059
        %v3070 = vmul.f32 %v3068, %v3062
        %v3071 = vmul.f32 %v3069, %v3059
        %v3072 = vmul.f32 %v3070, %v3062
        %v3073 = vadd.f32 %v3059, %v3071
        %v3074 = vadd.f32 %v3062, %v3072
        %v3075 = vmul.f32 %v3073, 0.7978846
        %v3076 = vmul.f32 %v3074, 0.7978846
        %v3077 = vtanh.pop %v3075
        %v3078 = vtanh.pop %v3076
        %v3079 = vadd.f32 %v3077, 1.0
        %v3080 = vadd.f32 %v3078, 1.0
        %v3081 = vmul.f32 %v3065, %v3079
        %v3082 = vmul.f32 %v3066, %v3080
        %v3083 = vpack.c.bf16 %v3082, %v3081
        %v3084 = vld [vmem:[%s674] sm:$0xf]
        %v3085 = vld [vmem:[%s674 + $0x4] sm:$0xf]
        %v3086 = vld [vmem:[%s674 + $0x8] sm:$0xf]
        %v3087 = vld [vmem:[%s674 + $0xc] sm:$0xf]
        %v3088 = vld [vmem:[%s674 + $0x10] sm:$0xf]
        %v3089 = vld [vmem:[%s674 + $0x14] sm:$0xf]
        %v3090 = vld [vmem:[%s674 + $0x18] sm:$0xf]
        %v3091 = vld [vmem:[%s674 + $0x1c] sm:$0xf]
        %v3092 = vld [vmem:[%s674 + $0x20] sm:$0xf]
        %v3093 = vld [vmem:[%s674 + $0x24] sm:$0xf]
        %v3094 = vld [vmem:[%s674 + $0x28] sm:$0xf]
        %v3095 = vld [vmem:[%s674 + $0x2c] sm:$0xf]
        %v3096 = vld [vmem:[%s674 + $0x30] sm:$0xf]
        %v3097 = vld [vmem:[%s674 + $0x34] sm:$0xf]
        %v3098 = vld [vmem:[%s674 + $0x38] sm:$0xf]
        %v3099 = vld [vmem:[%s674 + $0x3c] sm:$0xf]
        %v3100 = vld [vmem:[%s677] sm:$0x1]
        %v3102 = vlaneseq
        %v3103 = vshrl.u32 %v3102, 7
        %v3104 = vsub.s32 0, %v3103
        %v3105 = vrot.slane %v3100, %v3104
        %v3123 = vunpack.c.l.b16 %v3084
        %v3124 = vunpack.c.l.b16 %v3085
        %v3125 = vunpack.c.l.b16 %v3086
        %v3126 = vunpack.c.l.b16 %v3087
        %v3127 = vunpack.c.l.b16 %v3088
        %v3128 = vunpack.c.l.b16 %v3089
        %v3129 = vunpack.c.l.b16 %v3090
        %v3130 = vunpack.c.l.b16 %v3091
        %v3131 = vunpack.c.l.b16 %v3092
        %v3132 = vunpack.c.l.b16 %v3093
        %v3133 = vunpack.c.l.b16 %v3094
        %v3134 = vunpack.c.l.b16 %v3095
        %v3135 = vunpack.c.l.b16 %v3096
        %v3136 = vunpack.c.l.b16 %v3097
        %v3137 = vunpack.c.l.b16 %v3098
        %v3138 = vunpack.c.l.b16 %v3099
        %v3139 = vpack.c.b16 %v3124, %v3123
        %v3140 = vpack.c.b16 %v3126, %v3125
        %v3141 = vpack.c.b16 %v3128, %v3127
        %v3142 = vpack.c.b16 %v3130, %v3129
        %v3143 = vpack.c.b16 %v3132, %v3131
        %v3144 = vpack.c.b16 %v3134, %v3133
        %v3145 = vpack.c.b16 %v3136, %v3135
        %v3146 = vpack.c.b16 %v3138, %v3137
        %3155 = vmatprep.subr.bf16.mxu0 0
        %3156 = vmatpush1.bf16.msra.mxu0 %v3139
        %3157 = vmatprep.subr.bf16.mxu0 0
        %3158 = vmatpush1.bf16.msra.mxu0 %v3140
        %3159 = vmatprep.subr.bf16.mxu0 0
        %3160 = vmatpush1.bf16.msra.mxu0 %v3141
        %3161 = vmatprep.subr.bf16.mxu0 0
        %3162 = vmatpush1.bf16.msra.mxu0 %v3142
        %3163 = vmatprep.subr.bf16.mxu0 0
        %3164 = vmatpush1.bf16.msra.mxu0 %v3143
        %3165 = vmatprep.subr.bf16.mxu0 0
        %3166 = vmatpush1.bf16.msra.mxu0 %v3144
        %3167 = vmatprep.subr.bf16.mxu0 0
        %3168 = vmatpush1.bf16.msra.mxu0 %v3145
        %3169 = vmatprep.subr.bf16.mxu0 0
        %3170 = vmatpush1.bf16.msra.mxu0 %v3146
        %3171 = vmatprep.subr.bf16.mxu0 0
        %3172 = vmatpush1.bf16.msra.mxu0 0
        %3173 = vmatprep.subr.bf16.mxu0 0
        %3174 = vmatpush1.bf16.msra.mxu0 0
        %3175 = vmatprep.subr.bf16.mxu0 0
        %3176 = vmatpush1.bf16.msra.mxu0 0
        %3177 = vmatprep.subr.bf16.mxu0 0
        %3178 = vmatpush1.bf16.msra.mxu0 0
        %3179 = vmatprep.subr.bf16.mxu0 0
        %3180 = vmatpush1.bf16.msra.mxu0 0
        %3181 = vmatprep.subr.bf16.mxu0 0
        %3182 = vmatpush1.bf16.msra.mxu0 0
        %3183 = vmatprep.subr.bf16.mxu0 0
        %3184 = vmatpush1.bf16.msra.mxu0 0
        %3185 = vmatprep.subr.bf16.mxu0 0
        %3186 = vmatpush1.bf16.msra.mxu0 0
        %3187 = vmatprep.mubr.bf16.mxu0 0
        %3188 = vmatmul.mubr.bf16.gmra.mrb[0].mxu0 %v3083
        %v3189 = vpop.f32.mrb[0].mxu0
        %v3190 = vadd.f32 %v3105, %v3189
        %v3191 = vpop.f32.mrb[0].mxu0
        %v3192 = vpop.f32.mrb[0].mxu0
        %v3193 = vadd.f32 %v3105, %v3192
        %v3194 = vpop.f32.mrb[0].mxu0
        %3195 = vdwg.mxu0
        %v3196 = vadd.f32 %v2995, %v3190
        %v3197 = vadd.f32 %v2996, %v3193
        %v3198 = vld [vmem:[%s680] sm:$0x1]
        %v3199 = vld [vmem:[%s683] sm:$0x1]
        %v3200 = vsel %vm721, %v3196, 0.0
        %3201 = vadd.xlane.f32.xlu0 %v3200
        %v3202 = vpop.xlane.xlu0 %3201
        %v3203 = vsel %vm721, %v3197, 0.0
        %3204 = vadd.xlane.f32.xlu0 %v3203
        %v3205 = vpop.xlane.xlu0 %3204
        %v3206 = vmul.f32 %v3202, %v2960
        %v3207 = vmul.f32 %v3205, %v2960
        %v3208 = vsub.f32 %v3196, %v3206
        %v3209 = vsub.f32 %v3197, %v3207
        %v3210 = vmul.f32 %v3208, %v3208
        %v3211 = vmul.f32 %v3209, %v3209
        %v3212 = vsel %vm721, %v3210, 0.0
        %3213 = vadd.xlane.f32.xlu0 %v3212
        %v3214 = vpop.xlane.xlu0 %3213
        %v3215 = vsel %vm721, %v3211, 0.0
        %3216 = vadd.xlane.f32.xlu0 %v3215
        %v3217 = vpop.xlane.xlu0 %3216
        %v3218 = vmul.f32 %v3214, %v2960
        %v3219 = vmul.f32 %v3217, %v2960
        %v3220 = vadd.f32 %v3218, 1e-12
        %v3221 = vadd.f32 %v3219, 1e-12
        %v3222 = vrsqrt.pop %v3220
        %v3223 = vrsqrt.pop %v3221
        %v3224 = vmul.f32 %v3208, %v3222
        %v3225 = vmul.f32 %v3209, %v3223
        %v3227 = vlaneseq
        %v3228 = vshrl.u32 %v3227, 7
        %v3229 = vsub.s32 0, %v3228
        %v3230 = vrot.slane %v3198, %v3229
        %v3232 = vmul.f32 %v3224, %v3230
        %v3233 = vmul.f32 %v3225, %v3230
        %v3235 = vlaneseq
        %v3236 = vshrl.u32 %v3235, 7
        %v3237 = vsub.s32 0, %v3236
        %v3238 = vrot.slane %v3199, %v3237
        %v3240 = vadd.f32 %v3232, %v3238
        %v3241 = vadd.f32 %v3233, %v3238
        %3242 = vst.msk [vmem:[#allocation2] sm:$0xff] %vm721, %v3240
        %3243 = vst.msk [vmem:[#allocation2 + $0x8] sm:$0xff] %vm721, %v3241
        %p3244 = scmp.eq.s32.totalorder %s31, 2
        // Predicated region
        $region81: #{tpu_custom_call.1} parent=75 // pred_check
          %p3245 = pneg %p3244
        $region82: #{tpu_custom_call.1} parent=75 // pred_check_branch
          %3247 = sbr.rel (%p3245) target = $region84
        $region83: #{tpu_custom_call.1} parent=75 // pred_region
          %3248 = vst.msk [vmem:[#allocation3] sm:$0xff] %vm721, %v3240
          %3249 = vst.msk [vmem:[#allocation3 + $0x8] sm:$0xff] %vm721, %v3241
        $region84: #{tpu_custom_call.1} parent=75 // pred_fallthru
          _
        // Predicated region
        $region85: #{tpu_custom_call.1} parent=75 // pred_check
          %p3250 = pneg %p420
        $region86: #{tpu_custom_call.1} parent=75 // pred_check_branch
          %3252 = sbr.rel (%p3250) target = $region88
        $region87: #{tpu_custom_call.1} parent=75 // pred_region
          %s3253 = smul.u32 2, %s30
          %s3255 = ssub.s32 256, 256
          %3256 = vsyncadd [#allocation4], %s3255
          %s3257 = smul.addr %s3253, 128
          %s3258 = scalar_lea.hbm %s14, %s3257
          %s3259 = sshll.u32 [#allocation3], 4
          %s3260 = int_to_ptr.vmem [resolvable:$true] %s3259
          %3265 = dma.vmem_to_hbm [thread:$0]  %s3260, 256, %s3258, [#allocation4], 128, 128, 8
        $region88: #{tpu_custom_call.1} parent=75 // pred_fallthru
          _
        // Predicated region
        $region89: #{tpu_custom_call.1} parent=75 // pred_check
          %p3266 = pneg %p420
        $region90: #{tpu_custom_call.1} parent=75 // pred_check_branch
          %3268 = sbr.rel (%p3266) target = $region92
        $region91: #{tpu_custom_call.1} parent=75 // pred_region
          %3269 = dma.done [#allocation4], 256
        $region92: #{tpu_custom_call.1} parent=75 // pred_fallthru
          _
      $region76: #{tpu_custom_call.1} parent=5 // pred_fallthru
        _
      %p3270 = scmp.le.s32.totalorder 2, %s21
      // Predicated region
      $region93: #{tpu_custom_call.1} parent=5 // pred_check
        %p3271 = pneg %p3270
      $region94: #{tpu_custom_call.1} parent=5 // pred_check_branch
        %3273 = sbr.rel (%p3271) target = $region96
      $region95: #{tpu_custom_call.1} parent=5 // pred_region
        %s3274 = ssub.s32 %s21, 2
      $region96: #{tpu_custom_call.1} parent=5 // pred_fallthru
        _
    $region6: #{tpu_custom_call.1} parent=1 // loop_footer
      %s25 = sadd.s32 1, %s21
    $region7: #{tpu_custom_call.1} parent=1 // loop_footer_branch
      %20 = sbr.rel target = $region3
    $region8: #{tpu_custom_call.1} parent=1 // loop_exit
      _
    %3275 = vsyncpa [#allocation4], 1
    %s3276 = scalar_lea.sflag [#allocation4], 1
    %3277 = vsyncpa %s3276, 1

</llo_original>
